<compile_context>
chip_gen: v5e
topology: v5e:2x2
jax: 0.10.0
libtpu: 0.0.40
codegen_flags: <defaults>
</compile_context>

<pallas_src>
import math

import jax
import jax.numpy as jnp
from jax import lax
from jax.experimental import pallas as pl
from jax.experimental.pallas import tpu as pltpu


def _unit_gcn_kernel(x_ref, w_ref, a_ref, bias_ref, o_ref):
    # x_ref:    (1, Cin, Vp*TT)       input tile, already lane-flat (v-major, t-minor)
    # w_ref:    (K*Cout + Cout, Cin)  pointwise weights; main rows c-major (row = c*K+k)
    #                                 with bn0 + Linear_bias folded; residual rows appended
    # a_ref:    (Cout, Vp, K*Vp)      normalized adjacency, bn scale folded, (k,v) merged
    # bias_ref: (Cout, Vp, 1)         all biases/shifts folded through the aggregation
    # o_ref:    (1, Cout, Vp, TT)
    Cout, Vp, KVp = a_ref.shape
    K = KVp // Vp
    KC = K * Cout
    TT = o_ref.shape[3]

    x = x_ref[0]                                              # (Cin, Vp*TT), no relayout

    # --- pointwise conv, main rows: output directly in the matmul dtype (MXU still
    #     accumulates f32 internally); c-major rows make the per-channel (K*Vp, TT)
    #     split a contiguous reshape. ---
    hm = jnp.dot(w_ref[:KC, :], x, preferred_element_type=a_ref.dtype)
    hm = hm.reshape(Cout, KVp, TT)                            # (Cout, K*Vp, TT)

    # --- pointwise conv, residual rows (1x1 down conv / identity, BN folded), f32 ---
    res = jnp.dot(w_ref[KC:, :], x, preferred_element_type=jnp.float32)
    res = res.reshape(Cout, Vp, TT)                           # (Cout, Vp, TT)

    # --- graph aggregation: one batched (Vp, K*Vp) @ (K*Vp, TT) per channel,
    #     K*Vp-deep contraction, accumulator seeded with the residual ---
    acc = res + lax.dot_general(
        a_ref[...], hm,
        dimension_numbers=(((2,), (1,)), ((0,), (0,))),       # batch c, contract (k,v)
        preferred_element_type=jnp.float32)

    acc = acc + bias_ref[...]                                 # (Cout, Vp, 1) broadcast
    o_ref[0] = jnp.maximum(acc, 0.0).astype(o_ref.dtype)


def _auto_vmem_limit(Cin, Cout, K, Vp, t_tile, m_bytes, out_bytes):
    """Rough per-step VMEM footprint.  Returns an explicit scoped-VMEM limit only
    when the conservative compiler defaults would be too small; capped at 100 MiB
    (fits v5e/v6e 128 MiB physical VMEM; on v7x reduce t_tile instead)."""
    lanes = Vp * t_tile
    D = K * Cout + Cout
    est = 2 * Cin * lanes * m_bytes                                # x block, double-buffered
    est += 2 * Cout * lanes * out_bytes                            # out block, double-buffered
    est += 2 * (D * Cin + Cout * Vp * K * Vp + Cout * Vp) * m_bytes  # resident weights/bias
    est += 2 * K * Cout * lanes * m_bytes                          # hm + its relayouted view
    est += 3 * Cout * lanes * 4                                    # res / acc f32 temporaries
    if est <= 12 * 1024 * 1024:
        return None
    return min(int(est * 1.25), 100 * 1024 * 1024)


def unit_gcn_forward(x0, DecoupleA, W, b,
                     g0, be0, m0, v0,            # bn0 params (gamma, beta, mean, var)
                     g1, be1, m1, v1,            # bn params
                     Wd=None, bd=None, gd=None, bed=None, md=None, vd=None,
                     *, groups, eps=1e-5,
                     matmul_dtype=jnp.float32, out_dtype=jnp.float32,
                     t_tile=None, vmem_limit_bytes=None):
    N, Cin, T, V = x0.shape
    K = DecoupleA.shape[0]
    KC = W.shape[1]
    Cout = KC // K
    f32 = jnp.float32

    # ---------------- tiling: T on lanes, V padded to the sublane tile ----------------
    if t_tile is None:
        # 128 is VMEM-safe on every generation (v7x: 64 MiB physical VMEM).
        # On v6e / v5e pass t_tile=256 to fill the 256-wide MXU N-side.
        t_tile = 128
    assert t_tile % 128 == 0, "t_tile must be a multiple of 128 (lane-dense stores)"
    Tp = ((T + t_tile - 1) // t_tile) * t_tile
    n_tt = Tp // t_tile
    Vp = ((V + 7) // 8) * 8
    # NOTE (v7x megacore): best balance when N * n_tt is even and >= 2.

    # ---------------- weight-only math, all hoisted out of the kernel ----------------
    # normalized decoupled adjacency (PyTorch norm(): divide each column by col-sum + 1e-3)
    learnA = jnp.tile(DecoupleA.astype(f32), (1, Cout // groups, 1, 1))      # (K, Cout, V, V)
    col = learnA.sum(axis=2, keepdims=True)
    An = learnA / (col + 0.001)                                              # An[k, c, v, w]

    # bn0 + Linear_bias folded into the pointwise weight / a per-row shift
    s0 = (g0 / jnp.sqrt(v0 + eps)).astype(f32)                               # (KC,) k-major
    shift0 = s0 * jnp.reshape(b, (-1,)).astype(f32) + be0 - m0 * s0          # (KC,)
    Wmain = W.astype(f32).T * s0[:, None]                                    # (KC, Cin) k-major
    # reorder main rows to c-major (row = c*K + k) -> gather-free in-kernel split
    Wmain = Wmain.reshape(K, Cout, Cin).transpose(1, 0, 2).reshape(KC, Cin)

    # bn folded into the adjacency (scale); all shifts pushed through the aggregation
    s1 = (g1 / jnp.sqrt(v1 + eps)).astype(f32)                               # (Cout,)
    t1 = (be1 - m1 * s1).astype(f32)
    shift0_kc = shift0.reshape(K, Cout)
    bias_main = s1[:, None] * jnp.einsum('kc,kcw->cw', shift0_kc, An.sum(axis=2)) + t1[:, None]

    # aggregation tensor: AnKV[c, w, k*Vp + v] = s1[c] * An[k, c, v, w], zero in padding
    AnT = jnp.swapaxes(An, 2, 3) * s1[None, :, None, None]                   # (K, Cout, w, v)
    A4 = jnp.pad(AnT, ((0, 0), (0, 0), (0, Vp - V), (0, Vp - V)))
    AnKV = A4.transpose(1, 2, 0, 3).reshape(Cout, Vp, K * Vp)

    # residual: down = BN(Conv1x1(x0)) folded into extra rows of the same matmul;
    # identity residual only valid (and only used by the module) when Cin == Cout.
    if Wd is None:
        if Cin != Cout:
            raise ValueError("identity residual requires in_channels == out_channels")
        Wres = jnp.eye(Cout, dtype=f32)
        bres = jnp.zeros((Cout,), f32)
    else:
        sd = (gd / jnp.sqrt(vd + eps)).astype(f32)
        Wres = Wd.astype(f32) * sd[:, None]                                  # (Cout, Cin)
        bres = (sd * bd + bed - md * sd).astype(f32)

    Wcat = jnp.concatenate([Wmain, Wres], axis=0).astype(matmul_dtype)       # (KC+Cout, Cin)
    bias = jnp.pad(bias_main, ((0, 0), (0, Vp - V))) + bres[:, None]         # (Cout, Vp)
    bias = bias[:, :, None].astype(f32)                                      # (Cout, Vp, 1)
    AnKV = AnKV.astype(matmul_dtype)

    # ---------------- layout: pad, put T on lanes, flatten (V,T) in the wrapper ----------------
    # (one fused XLA transpose; kernel never relayouts x)
    xp = jnp.pad(x0.astype(matmul_dtype), ((0, 0), (0, 0), (0, Tp - T), (0, Vp - V)))
    xp = jnp.swapaxes(xp, 2, 3)                                              # (N, Cin, Vp, Tp)
    xflat = (xp.reshape(N, Cin, Vp, n_tt, t_tile)
               .transpose(0, 3, 1, 2, 4)
               .reshape(N * n_tt, Cin, Vp * t_tile))

    D = KC + Cout
    if vmem_limit_bytes is None:
        vmem_limit_bytes = _auto_vmem_limit(
            Cin, Cout, K, Vp, t_tile,
            jnp.dtype(matmul_dtype).itemsize, jnp.dtype(out_dtype).itemsize)
    cp_kwargs = dict(dimension_semantics=("parallel",))
    if vmem_limit_bytes is not None:
        cp_kwargs["vmem_limit_bytes"] = int(vmem_limit_bytes)

    out4 = pl.pallas_call(
        _unit_gcn_kernel,
        out_shape=jax.ShapeDtypeStruct((N * n_tt, Cout, Vp, t_tile), out_dtype),
        grid=(N * n_tt,),
        in_specs=[
            pl.BlockSpec((1, Cin, Vp * t_tile), lambda i: (i, 0, 0)),        # x tile (lane-flat)
            pl.BlockSpec((D, Cin), lambda i: (0, 0)),                        # fused weights
            pl.BlockSpec((Cout, Vp, K * Vp), lambda i: (0, 0, 0)),           # scaled adjacency
            pl.BlockSpec((Cout, Vp, 1), lambda i: (0, 0, 0)),                # folded bias
        ],
        out_specs=pl.BlockSpec((1, Cout, Vp, t_tile), lambda i: (i, 0, 0, 0)),
        compiler_params=pltpu.CompilerParams(**cp_kwargs),
    )(xflat, Wcat, AnKV, bias)

    # (N*n_tt, Cout, Vp, t_tile) -> (N, Cout, T, V); in a fused pipeline the
    # lane-dense (.., Vp, T) layout would be kept between layers instead.
    out = (out4.reshape(N, n_tt, Cout, Vp, t_tile)
               .transpose(0, 2, 1, 4, 3)
               .reshape(N, Cout, Tp, Vp))
    return out[:, :, :T, :V]


def ref_forward(x0, DecoupleA, W, b, g0, be0, m0, v0, g1, be1, m1, v1,
                Wd=None, bd=None, gd=None, bed=None, md=None, vd=None,
                *, groups, eps=1e-5):
    """Pure-JAX reference mirroring the PyTorch forward (inference-mode BN)."""
    K = DecoupleA.shape[0]
    KC = W.shape[1]
    Cout = KC // K
    learnA = jnp.tile(DecoupleA, (1, Cout // groups, 1, 1))
    col = learnA.sum(axis=2, keepdims=True)
    An = learnA / (col + 0.001)

    def bn(x, g, be, m, v):
        sh = (1, -1, 1, 1)
        return g.reshape(sh) * (x - m.reshape(sh)) / jnp.sqrt(v.reshape(sh) + eps) + be.reshape(sh)

    hp = 'highest'
    x = jnp.einsum('nctw,cd->ndtw', x0, W, precision=hp) + b.reshape(1, KC, 1, 1)
    x = bn(x, g0, be0, m0, v0)
    N, _, T, V = x.shape
    x = x.reshape(N, K, Cout, T, V)
    x = jnp.einsum('nkctv,kcvw->nctw', x, An, precision=hp)
    x = bn(x, g1, be1, m1, v1)
    if Wd is None:
        down = x0
    else:
        down = jnp.einsum('nctw,dc->ndtw', x0, Wd, precision=hp) + bd.reshape(1, -1, 1, 1)
        down = bn(down, gd, bed, md, vd)
    return jnp.maximum(x + down, 0.0)


if __name__ == "__main__":
    key = jax.random.PRNGKey(0)

    def bn_params(k, C):
        k1, k2, k3, k4 = jax.random.split(k, 4)
        g = jax.random.uniform(k1, (C,), jnp.float32, 0.5, 1.5)
        be = jax.random.normal(k2, (C,), jnp.float32) * 0.1
        m = jax.random.normal(k3, (C,), jnp.float32) * 0.1
        v = jax.random.uniform(k4, (C,), jnp.float32, 0.5, 1.5)
        return g, be, m, v

    # ---- config 1: Cin != Cout (down-conv residual); V=25 exercises V->32 padding,
    #      T=256 with t_tile=128 exercises the lane-dense time tiling + 1-D grid ----
    N, Cin, Cout, T, V, groups, K = 2, 4, 8, 256, 25, 4, 3
    KC = K * Cout
    keys = jax.random.split(key, 10)

    A_adj = jax.random.uniform(keys[0], (K, V, V), dtype=jnp.float32)
    DecoupleA = jnp.tile(A_adj[:, None, :, :], (1, groups, 1, 1))
    W = jax.random.normal(keys[1], (Cin, KC), dtype=jnp.float32) * math.sqrt(0.5 / KC)
    b = jnp.full((KC,), 1e-6, dtype=jnp.float32)
    Wd = jax.random.normal(keys[2], (Cout, Cin), dtype=jnp.float32) * math.sqrt(2.0 / Cout)
    bd = jnp.zeros((Cout,), jnp.float32)
    g0, be0, m0, v0 = bn_params(keys[3], KC)
    g1, be1, m1, v1 = bn_params(keys[4], Cout)
    gd, bed, md, vd = bn_params(keys[5], Cout)
    x0 = jax.random.normal(keys[6], (N, Cin, T, V), dtype=jnp.float32)

    ref = jax.block_until_ready(ref_forward(x0, DecoupleA, W, b, g0, be0, m0, v0,
                                            g1, be1, m1, v1, Wd, bd, gd, bed, md, vd,
                                            groups=groups))
    ref_max = float(jnp.max(jnp.abs(ref)))

    # f32 matmul path: tight check
    out = jax.block_until_ready(unit_gcn_forward(
        x0, DecoupleA, W, b, g0, be0, m0, v0, g1, be1, m1, v1,
        Wd, bd, gd, bed, md, vd, groups=groups,
        matmul_dtype=jnp.float32, t_tile=128))
    assert out.shape == ref.shape == (N, Cout, T, V)
    err = float(jnp.max(jnp.abs(out - ref)))
    assert err < 2e-3, f"f32 mismatch vs reference: max abs err = {err}"

    # bf16 matmul + bf16 output path: loose check
    out_bf = jax.block_until_ready(unit_gcn_forward(
        x0, DecoupleA, W, b, g0, be0, m0, v0, g1, be1, m1, v1,
        Wd, bd, gd, bed, md, vd, groups=groups,
        matmul_dtype=jnp.bfloat16, out_dtype=jnp.bfloat16, t_tile=128))
    out_bf = out_bf.astype(jnp.float32)
    assert bool(jnp.all(jnp.isfinite(out_bf)))
    err_bf = float(jnp.max(jnp.abs(out_bf - ref)))
    tol_bf = 3e-2 * (1.0 + ref_max)
    assert err_bf < tol_bf, f"bf16 mismatch vs reference: max abs err = {err_bf} (tol {tol_bf})"

    # ---- config 2: Cin == Cout -> identity residual, default t_tile heuristic ----
    Cin2 = Cout2 = 8
    KC2 = K * Cout2
    W2 = jax.random.normal(keys[7], (Cin2, KC2), dtype=jnp.float32) * math.sqrt(0.5 / KC2)
    b2 = jnp.full((KC2,), 1e-6, dtype=jnp.float32)
    g0b, be0b, m0b, v0b = bn_params(keys[8], KC2)
    x1 = jax.random.normal(keys[9], (N, Cin2, T, V), dtype=jnp.float32)

    ref2 = jax.block_until_ready(ref_forward(x1, DecoupleA, W2, b2, g0b, be0b, m0b, v0b,
                                             g1, be1, m1, v1, groups=groups))
    out2 = jax.block_until_ready(unit_gcn_forward(
        x1, DecoupleA, W2, b2, g0b, be0b, m0b, v0b, g1, be1, m1, v1,
        groups=groups))
    err2 = float(jnp.max(jnp.abs(out2 - ref2)))
    assert err2 < 2e-3, f"identity-residual f32 mismatch: max abs err = {err2}"

    print("KERNEL_OK")
</pallas_src>

<mosaic_0001>
module attributes {stable_mosaic.version = 11 : i64} {
  func.func @_unit_gcn_kernel(%arg0: i32, %arg1: memref<1x4x4096xf32, #tpu.memory_space<vmem>>, %arg2: memref<32x4xf32, #tpu.memory_space<vmem>>, %arg3: memref<8x32x96xf32, #tpu.memory_space<vmem>>, %arg4: memref<8x32x1xf32, #tpu.memory_space<vmem>>, %arg5: memref<1x8x32x128xf32, #tpu.memory_space<vmem>>) attributes {dimension_semantics = [#tpu.dimension_semantics<parallel>], iteration_bounds = array<i64: 4>, scalar_prefetch = 0 : i64, scratch_operands = 0 : i64, tpu.core_type = #tpu.core_type<tc>, window_params = [{transform_indices = @transform_0, window_bounds = array<i64: 1, 4, 4096>}, {pipeline_mode = #tpu.pipeline_mode<synchronous>, transform_indices = @transform_1, window_bounds = array<i64: 32, 4>}, {pipeline_mode = #tpu.pipeline_mode<synchronous>, transform_indices = @transform_2, window_bounds = array<i64: 8, 32, 96>}, {pipeline_mode = #tpu.pipeline_mode<synchronous>, transform_indices = @transform_3, window_bounds = array<i64: 8, 32, 1>}, {transform_indices = @transform_4, window_bounds = array<i64: 1, 8, 32, 128>}]} {
    %c0 = arith.constant 0 : index
    %c0_0 = arith.constant 0 : index
    %c0_1 = arith.constant 0 : index
    %0 = vector.load %arg1[%c0, %c0_0, %c0_1] : memref<1x4x4096xf32, #tpu.memory_space<vmem>>, vector<1x4x4096xf32>
    %1 = vector.shape_cast %0 : vector<1x4x4096xf32> to vector<4x4096xf32>
    %c0_2 = arith.constant 0 : index
    %c0_3 = arith.constant 0 : index
    %2 = vector.load %arg2[%c0_2, %c0_3] : memref<32x4xf32, #tpu.memory_space<vmem>>, vector<24x4xf32>
    %cst = arith.constant dense<0.000000e+00> : vector<24x4096xf32>
    %3 = tpu.matmul %2, %1, %cst {dimension_numbers = #tpu.dot_dimension_numbers<[1], [0], [0], [1], [0, 0, 1, 1], [], []>} : vector<24x4xf32>, vector<4x4096xf32>, vector<24x4096xf32> -> vector<24x4096xf32>
    %4 = vector.shape_cast %3 : vector<24x4096xf32> to vector<8x96x128xf32>
    %c24 = arith.constant 24 : index
    %c0_4 = arith.constant 0 : index
    %5 = vector.load %arg2[%c24, %c0_4] : memref<32x4xf32, #tpu.memory_space<vmem>>, vector<8x4xf32>
    %cst_5 = arith.constant dense<0.000000e+00> : vector<8x4096xf32>
    %6 = tpu.matmul %5, %1, %cst_5 {dimension_numbers = #tpu.dot_dimension_numbers<[1], [0], [0], [1], [0, 0, 1, 1], [], []>} : vector<8x4xf32>, vector<4x4096xf32>, vector<8x4096xf32> -> vector<8x4096xf32>
    %7 = vector.shape_cast %6 : vector<8x4096xf32> to vector<8x32x128xf32>
    %c0_6 = arith.constant 0 : index
    %c0_7 = arith.constant 0 : index
    %c0_8 = arith.constant 0 : index
    %8 = vector.load %arg3[%c0_6, %c0_7, %c0_8] : memref<8x32x96xf32, #tpu.memory_space<vmem>>, vector<8x32x96xf32>
    %cst_9 = arith.constant dense<0.000000e+00> : vector<8x32x128xf32>
    %9 = tpu.matmul %8, %4, %cst_9 {dimension_numbers = #tpu.dot_dimension_numbers<[2], [1], [1], [2], [0, 0, 0, 1, 1, 2], [0], [0]>} : vector<8x32x96xf32>, vector<8x96x128xf32>, vector<8x32x128xf32> -> vector<8x32x128xf32>
    %10 = arith.addf %7, %9 : vector<8x32x128xf32>
    %c0_10 = arith.constant 0 : index
    %c0_11 = arith.constant 0 : index
    %c0_12 = arith.constant 0 : index
    %11 = vector.load %arg4[%c0_10, %c0_11, %c0_12] : memref<8x32x1xf32, #tpu.memory_space<vmem>>, vector<8x32x1xf32>
    %12 = vector.broadcast %11 : vector<8x32x1xf32> to vector<8x32x128xf32>
    %13 = arith.addf %10, %12 : vector<8x32x128xf32>
    %cst_13 = arith.constant 0.000000e+00 : f32
    %14 = vector.broadcast %cst_13 : f32 to vector<8x32x128xf32>
    %15 = arith.maximumf %13, %14 : vector<8x32x128xf32>
    %c0_14 = arith.constant 0 : index
    %c0_15 = arith.constant 0 : index
    %c0_16 = arith.constant 0 : index
    %c0_17 = arith.constant 0 : index
    %16 = vector.load %arg5[%c0_14, %c0_15, %c0_16, %c0_17] : memref<1x8x32x128xf32, #tpu.memory_space<vmem>>, vector<1x8x32x128xf32>
    %17 = vector.shape_cast %16 : vector<1x8x32x128xf32> to vector<8x32x128xf32>
    %18 = vector.shape_cast %15 : vector<8x32x128xf32> to vector<1x8x32x128xf32>
    tpu.vector_store %arg5[%c0_14, %c0_15, %c0_16, %c0_17], %18 {strides = array<i32>} : memref<1x8x32x128xf32, #tpu.memory_space<vmem>>, vector<1x8x32x128xf32>,
    return
  }
  func.func @transform_0(%arg0: i32) -> (i32, i32, i32) {
    %c0_i32 = arith.constant 0 : i32
    %c0_i32_0 = arith.constant 0 : i32
    %c0_i32_1 = arith.constant 0 : i32
    return %arg0, %c0_i32, %c0_i32_0 : i32, i32, i32
  }
  func.func @transform_1(%arg0: i32) -> (i32, i32) {
    %c0_i32 = arith.constant 0 : i32
    %c0_i32_0 = arith.constant 0 : i32
    %c0_i32_1 = arith.constant 0 : i32
    return %c0_i32, %c0_i32_0 : i32, i32
  }
  func.func @transform_2(%arg0: i32) -> (i32, i32, i32) {
    %c0_i32 = arith.constant 0 : i32
    %c0_i32_0 = arith.constant 0 : i32
    %c0_i32_1 = arith.constant 0 : i32
    %c0_i32_2 = arith.constant 0 : i32
    return %c0_i32, %c0_i32_0, %c0_i32_1 : i32, i32, i32
  }
  func.func @transform_3(%arg0: i32) -> (i32, i32, i32) {
    %c0_i32 = arith.constant 0 : i32
    %c0_i32_0 = arith.constant 0 : i32
    %c0_i32_1 = arith.constant 0 : i32
    %c0_i32_2 = arith.constant 0 : i32
    return %c0_i32, %c0_i32_0, %c0_i32_1 : i32, i32, i32
  }
  func.func @transform_4(%arg0: i32) -> (i32, i32, i32, i32) {
    %c0_i32 = arith.constant 0 : i32
    %c0_i32_0 = arith.constant 0 : i32
    %c0_i32_1 = arith.constant 0 : i32
    %c0_i32_2 = arith.constant 0 : i32
    return %arg0, %c0_i32, %c0_i32_0, %c0_i32_1 : i32, i32, i32, i32
  }
}

</mosaic_0001>

<llo_original>
// kernel: tpu_custom_call.1
$region0: #{tpu_custom_call.1}
  #allocation0 [shape = 'u32[]', space=smem, size = 0x4, offset = 0x4, fixed_abs, tag = 'smem constant byte address 0x4 - core index']
  #allocation1 [shape = 'u32[72,128]{1,0:T(1,128)}', space=vmem, size = 0x9000, scoped, tag = 'internal scratch']
  %s0 = inlined_call_operand.hbm [shape: f32[4,4,4096], index: 0, kind: input, shape index: {}]
  %s1 = inlined_call_operand.vmem [shape: f32[32,4], index: 1, kind: input, shape index: {}]
  %s2 = inlined_call_operand.vmem [shape: f32[8,32,96], index: 2, kind: input, shape index: {}]
  %s3 = inlined_call_operand.vmem [shape: f32[8,32,1], index: 3, kind: input, shape index: {}]
  %s4 = inlined_call_operand.hbm [shape: f32[4,8,32,128], index: 4, kind: output, shape index: {}]
  %s5 = sld [smem:[#allocation0]]
  $region53: #{tpu_custom_call.1} parent=0
    _
  %s7 = ssub.s32 1, %s5
  %s8 = scalar_select 0, %s7, %s5
  $region1: #{tpu_custom_call.1} parent=0
    #allocation2 [shape = 'u8[131072]{0}', space=vmem, size = 0x20000, scoped, tag = 'input window, operand 0']
    #allocation3 [shape = 's32[2]{0}', space=sflag, size = 0x8, scoped, tag = 'scoped memory for tpu_custom_call.1']
    #allocation4 [shape = 's32[2]{0}', space=sflag, size = 0x8, scoped, tag = 'scoped memory for tpu_custom_call.1']
    #allocation5 [shape = 'u8[262144]{0}', space=vmem, size = 0x40000, scoped, tag = 'output window, operand 0']
    %9 = vsyncpa [#allocation3], 0
    %s10 = scalar_lea.sflag [#allocation3], 1
    %11 = vsyncpa %s10, 0
    %12 = vsyncpa [#allocation4], 0
    %s13 = scalar_lea.sflag [#allocation4], 1
    %14 = vsyncpa %s13, 0
    loop: start=0, step=1, limit=6
    $region2: #{tpu_custom_call.1} parent=1 // loop_pre_header
      _
    $region3: #{tpu_custom_call.1} parent=1 // loop_header
      %s16 = sphi 0, %s20
      %p17 = scmp.ge.s32.totalorder %s16, 6
      %s26 = sphi 0, %s28
      %s29 = sphi 0, %s26
      %s30 = sphi 0, %s29
      %s46 = sphi 0, %s30
      %s50 = sphi 0, %s50
      %s52 = sphi 0, %s50
      %s53 = sphi 0, %s52
      %s67 = sphi 0, %s53
      %s71 = sphi 0, %s71
      %s73 = sphi 0, %s71
      %s74 = sphi 0, %s73
      %s88 = sphi 0, %s74
      %s92 = sphi 0, %s92
      %s94 = sphi 0, %s92
      %s95 = sphi 0, %s94
      %s109 = sphi 0, %s95
      %s115 = sphi 0, %s117
      %s118 = sphi 0, %s115
      %s119 = sphi 0, %s118
      %s135 = sphi 0, %s119
    $region4: #{tpu_custom_call.1} parent=1 // loop_header_branch
      %19 = sbr.rel (%p17) target = $region8
    $region5: #{tpu_custom_call.1} parent=1 // loop_body
      %s21 = ssub.s32 %s16, 1
      %s22 = ssub.s32 %s16, 2
      %s23 = sadd.s32 %s16, 1
      %s24 = ssub.s32 %s16, %s23
      %p25 = scmp.eq.s32.totalorder %s24, 0
      %s27 = sadd.s32 %s26, 1
      %s28 = scalar_select %p25, %s26, %s27
      %p31 = pneg %p25
      %p32 = scmp.eq.s32.totalorder %s16, 3
      %p33 = por %p31, %p32
      %p34 = scmp.ne.s32.totalorder %s26, %s29
      %p35 = scmp.eq.s32.totalorder %s16, 0
      %p36 = por %p34, %p35
      %p37 = scmp.ne.s32.totalorder %s26, %s29
      %p38 = scmp.eq.s32.totalorder %s21, 3
      %p39 = por %p37, %p38
      %p40 = scmp.ne.s32.totalorder %s29, %s30
      %p41 = scmp.eq.s32.totalorder %s21, 0
      %p42 = por %p40, %p41
      %p43 = scmp.ne.s32.totalorder %s29, %s30
      %p44 = scmp.eq.s32.totalorder %s22, 3
      %p45 = por %p43, %p44
      %p47 = scmp.ne.s32.totalorder %s30, %s46
      %p48 = scmp.eq.s32.totalorder %s22, 0
      %p49 = por %p47, %p48
      %s51 = sadd.s32 %s50, 1
      %p54 = scmp.eq.s32.totalorder %s16, 3
      %p55 = scmp.ne.s32.totalorder %s50, %s52
      %p56 = scmp.eq.s32.totalorder %s16, 0
      %p57 = por %p55, %p56
      %p58 = scmp.ne.s32.totalorder %s50, %s52
      %p59 = scmp.eq.s32.totalorder %s21, 3
      %p60 = por %p58, %p59
      %p61 = scmp.ne.s32.totalorder %s52, %s53
      %p62 = scmp.eq.s32.totalorder %s21, 0
      %p63 = por %p61, %p62
      %p64 = scmp.ne.s32.totalorder %s52, %s53
      %p65 = scmp.eq.s32.totalorder %s22, 3
      %p66 = por %p64, %p65
      %p68 = scmp.ne.s32.totalorder %s53, %s67
      %p69 = scmp.eq.s32.totalorder %s22, 0
      %p70 = por %p68, %p69
      %s72 = sadd.s32 %s71, 1
      %p75 = scmp.eq.s32.totalorder %s16, 3
      %p76 = scmp.ne.s32.totalorder %s71, %s73
      %p77 = scmp.eq.s32.totalorder %s16, 0
      %p78 = por %p76, %p77
      %p79 = scmp.ne.s32.totalorder %s71, %s73
      %p80 = scmp.eq.s32.totalorder %s21, 3
      %p81 = por %p79, %p80
      %p82 = scmp.ne.s32.totalorder %s73, %s74
      %p83 = scmp.eq.s32.totalorder %s21, 0
      %p84 = por %p82, %p83
      %p85 = scmp.ne.s32.totalorder %s73, %s74
      %p86 = scmp.eq.s32.totalorder %s22, 3
      %p87 = por %p85, %p86
      %p89 = scmp.ne.s32.totalorder %s74, %s88
      %p90 = scmp.eq.s32.totalorder %s22, 0
      %p91 = por %p89, %p90
      %s93 = sadd.s32 %s92, 1
      %p96 = scmp.eq.s32.totalorder %s16, 3
      %p97 = scmp.ne.s32.totalorder %s92, %s94
      %p98 = scmp.eq.s32.totalorder %s16, 0
      %p99 = por %p97, %p98
      %p100 = scmp.ne.s32.totalorder %s92, %s94
      %p101 = scmp.eq.s32.totalorder %s21, 3
      %p102 = por %p100, %p101
      %p103 = scmp.ne.s32.totalorder %s94, %s95
      %p104 = scmp.eq.s32.totalorder %s21, 0
      %p105 = por %p103, %p104
      %p106 = scmp.ne.s32.totalorder %s94, %s95
      %p107 = scmp.eq.s32.totalorder %s22, 3
      %p108 = por %p106, %p107
      %p110 = scmp.ne.s32.totalorder %s95, %s109
      %p111 = scmp.eq.s32.totalorder %s22, 0
      %p112 = por %p110, %p111
      %s113 = ssub.s32 %s16, %s23
      %p114 = scmp.eq.s32.totalorder %s113, 0
      %s116 = sadd.s32 %s115, 1
      %s117 = scalar_select %p114, %s115, %s116
      %p120 = pneg %p114
      %p121 = scmp.eq.s32.totalorder %s16, 3
      %p122 = por %p120, %p121
      %p123 = scmp.ne.s32.totalorder %s115, %s118
      %p124 = scmp.eq.s32.totalorder %s16, 0
      %p125 = por %p123, %p124
      %p126 = scmp.ne.s32.totalorder %s115, %s118
      %p127 = scmp.eq.s32.totalorder %s21, 3
      %p128 = por %p126, %p127
      %p129 = scmp.ne.s32.totalorder %s118, %s119
      %p130 = scmp.eq.s32.totalorder %s21, 0
      %p131 = por %p129, %p130
      %p132 = scmp.ne.s32.totalorder %s118, %s119
      %p133 = scmp.eq.s32.totalorder %s22, 3
      %p134 = por %p132, %p133
      %p136 = scmp.ne.s32.totalorder %s119, %s135
      %p137 = scmp.eq.s32.totalorder %s22, 0
      %p138 = por %p136, %p137
      %p139 = scmp.le.s32.totalorder 1, %s16
      %p140 = scmp.lt.s32.totalorder %s16, 5
      %p141 = pnand %p139, %p140
      %p142 = pneg %p141
      // Predicated region
      $region9: #{tpu_custom_call.1} parent=5 // pred_check
        _
      $region10: #{tpu_custom_call.1} parent=5 // pred_check_branch
        %144 = sbr.rel (%p141) target = $region12
      $region11: #{tpu_custom_call.1} parent=5 // pred_region
        %s145 = ssub.s32 %s16, 1
        // Predicated region
        $region13: #{tpu_custom_call.1} parent=11 // pred_check
          %p146 = pneg %p63
        $region14: #{tpu_custom_call.1} parent=11 // pred_check_branch
          %148 = sbr.rel (%p146) target = $region16
        $region15: #{tpu_custom_call.1} parent=11 // pred_region
          _
        $region16: #{tpu_custom_call.1} parent=11 // pred_fallthru
          _
        // Predicated region
        $region17: #{tpu_custom_call.1} parent=11 // pred_check
          %p149 = pneg %p84
        $region18: #{tpu_custom_call.1} parent=11 // pred_check_branch
          %151 = sbr.rel (%p149) target = $region20
        $region19: #{tpu_custom_call.1} parent=11 // pred_region
          _
        $region20: #{tpu_custom_call.1} parent=11 // pred_fallthru
          _
        // Predicated region
        $region21: #{tpu_custom_call.1} parent=11 // pred_check
          %p152 = pneg %p105
        $region22: #{tpu_custom_call.1} parent=11 // pred_check_branch
          %154 = sbr.rel (%p152) target = $region24
        $region23: #{tpu_custom_call.1} parent=11 // pred_region
          _
        $region24: #{tpu_custom_call.1} parent=11 // pred_fallthru
          _
      $region12: #{tpu_custom_call.1} parent=5 // pred_fallthru
        _
      %p155 = scmp.lt.s32.totalorder %s16, 4
      // Predicated region
      $region25: #{tpu_custom_call.1} parent=5 // pred_check
        %p156 = pneg %p155
      $region26: #{tpu_custom_call.1} parent=5 // pred_check_branch
        %158 = sbr.rel (%p156) target = $region28
      $region27: #{tpu_custom_call.1} parent=5 // pred_region
        // Predicated region
        $region29: #{tpu_custom_call.1} parent=27 // pred_check
          %p159 = pneg %p36
        $region30: #{tpu_custom_call.1} parent=27 // pred_check_branch
          %161 = sbr.rel (%p159) target = $region32
        $region31: #{tpu_custom_call.1} parent=27 // pred_region
          %s162 = sand.u32 %s26, 1
          %s163 = scalar_lea.sflag [#allocation3], %s162
          %s164 = sand.u32 %s26, 1
          %s165 = smul.addr %s164, 128
          %s166 = scalar_lea.vmem [#allocation2], %s165
          %168 = vsyncadd %s163, 0
          %s169 = smul.addr %s16, 32
          %s170 = smul.addr %s169, 4
          %s171 = scalar_lea.hbm %s0, %s170
          %s173 = sshll.u32 %s171, 4
          %s174 = int_to_ptr.hbm [resolvable:$true] %s173
          %s175 = sshll.u32 %s166, 4
          %s176 = int_to_ptr.vmem [resolvable:$true] %s175
          %178 = dma.hbm_to_vmem [thread:$0]  %s174, 2048, %s176, %s163
        $region32: #{tpu_custom_call.1} parent=27 // pred_fallthru
          _
      $region28: #{tpu_custom_call.1} parent=5 // pred_fallthru
        _
      %p179 = scmp.le.s32.totalorder 1, %s16
      %p180 = scmp.lt.s32.totalorder %s16, 5
      %p181 = pnand %p179, %p180
      %p182 = pneg %p181
      // Predicated region
      $region33: #{tpu_custom_call.1} parent=5 // pred_check
        _
      $region34: #{tpu_custom_call.1} parent=5 // pred_check_branch
        %184 = sbr.rel (%p181) target = $region36
      $region35: #{tpu_custom_call.1} parent=5 // pred_region
        %s185 = ssub.s32 %s16, 1
        %s186 = sand.u32 %s29, 1
        %s187 = scalar_lea.sflag [#allocation3], %s186
        %s188 = sand.u32 %s29, 1
        %s189 = smul.addr %s188, 128
        %s190 = scalar_lea.vmem [#allocation2], %s189
        // Predicated region
        $region37: #{tpu_custom_call.1} parent=35 // pred_check
          %p191 = pneg %p42
        $region38: #{tpu_custom_call.1} parent=35 // pred_check_branch
          %193 = sbr.rel (%p191) target = $region40
        $region39: #{tpu_custom_call.1} parent=35 // pred_region
          %195 = dma.done %s187, 2048
        $region40: #{tpu_custom_call.1} parent=35 // pred_fallthru
          _
        %s196 = sand.u32 %s29, 1
        %s197 = scalar_lea.sflag [#allocation3], %s196
        %s198 = sand.u32 %s29, 1
        %s199 = smul.addr %s198, 128
        %s200 = scalar_lea.vmem [#allocation2], %s199
        %p201 = pneg %p42
        %p202 = pneg %p39
        %p203 = pneg %p63
        %p204 = pneg %p60
        %p205 = pneg %p84
        %p206 = pneg %p81
        %p207 = pneg %p105
        %p208 = pneg %p102
        %p209 = pneg %p131
        %p210 = pneg %p128
        %s211 = sand.u32 %s118, 1
        %s212 = scalar_lea.sflag [#allocation4], %s211
        %s213 = sand.u32 %s118, 1
        %s214 = smul.addr %s213, 256
        %s215 = scalar_lea.vmem [#allocation5], %s214
        %v216 = vld [vmem:[%s190] sm:$0xff]
        %v217 = vld [vmem:[%s190 + $0x8] sm:$0xff]
        %v218 = vld [vmem:[%s190 + $0x10] sm:$0xff]
        %v219 = vld [vmem:[%s190 + $0x18] sm:$0xff]
        %v220 = vld [vmem:[%s190 + $0x20] sm:$0xff]
        %v221 = vld [vmem:[%s190 + $0x28] sm:$0xff]
        %v222 = vld [vmem:[%s190 + $0x30] sm:$0xff]
        %v223 = vld [vmem:[%s190 + $0x38] sm:$0xff]
        %v224 = vld [vmem:[%s190 + $0x40] sm:$0xff]
        %v225 = vld [vmem:[%s190 + $0x48] sm:$0xff]
        %v226 = vld [vmem:[%s190 + $0x50] sm:$0xff]
        %v227 = vld [vmem:[%s190 + $0x58] sm:$0xff]
        %v228 = vld [vmem:[%s190 + $0x60] sm:$0xff]
        %v229 = vld [vmem:[%s190 + $0x68] sm:$0xff]
        %v230 = vld [vmem:[%s190 + $0x70] sm:$0xff]
        %v231 = vld [vmem:[%s190 + $0x78] sm:$0xff]
        %v232 = vld [vmem:[%s1] sm:$0xff]
        %v233 = vld [vmem:[%s1 + $0x8] sm:$0xff]
        %v234 = vld [vmem:[%s1 + $0x10] sm:$0xff]
        %251 = vst [vmem:[#allocation1] ss:$2 sm:$0xff] %v216
        %s252 = scalar_lea.vmem [#allocation1], 16
        %253 = vst [vmem:[%s252] ss:$2 sm:$0xff] %v217
        %s254 = scalar_lea.vmem [#allocation1], 32
        %255 = vst [vmem:[%s254] ss:$2 sm:$0xff] %v218
        %s256 = scalar_lea.vmem [#allocation1], 48
        %257 = vst [vmem:[%s256] ss:$2 sm:$0xff] %v219
        %v258 = vld.sshfl [vmem:[#allocation1] sm:$0xff pattern:$0x75316420]
        %v259 = vld.sshfl [vmem:[#allocation1 + $0x8] sm:$0xff pattern:$0x75316420]
        %v260 = vld.sshfl [vmem:[#allocation1 + $0x10] sm:$0xff pattern:$0x75316420]
        %v261 = vld.sshfl [vmem:[#allocation1 + $0x18] sm:$0xff pattern:$0x75316420]
        %v262 = vld.sshfl [vmem:[#allocation1 + $0x20] sm:$0xff pattern:$0x75316420]
        %v263 = vld.sshfl [vmem:[#allocation1 + $0x28] sm:$0xff pattern:$0x75316420]
        %v264 = vld.sshfl [vmem:[#allocation1 + $0x30] sm:$0xff pattern:$0x75316420]
        %v265 = vld.sshfl [vmem:[#allocation1 + $0x38] sm:$0xff pattern:$0x75316420]
        %266 = vst [vmem:[#allocation1] ss:$2 sm:$0xff] %v220
        %267 = vst [vmem:[%s252] ss:$2 sm:$0xff] %v221
        %268 = vst [vmem:[%s254] ss:$2 sm:$0xff] %v222
        %269 = vst [vmem:[%s256] ss:$2 sm:$0xff] %v223
        %v270 = vld.sshfl [vmem:[#allocation1] sm:$0xff pattern:$0x75316420]
        %v271 = vld.sshfl [vmem:[#allocation1 + $0x8] sm:$0xff pattern:$0x75316420]
        %v272 = vld.sshfl [vmem:[#allocation1 + $0x10] sm:$0xff pattern:$0x75316420]
        %v273 = vld.sshfl [vmem:[#allocation1 + $0x18] sm:$0xff pattern:$0x75316420]
        %v274 = vld.sshfl [vmem:[#allocation1 + $0x20] sm:$0xff pattern:$0x75316420]
        %v275 = vld.sshfl [vmem:[#allocation1 + $0x28] sm:$0xff pattern:$0x75316420]
        %v276 = vld.sshfl [vmem:[#allocation1 + $0x30] sm:$0xff pattern:$0x75316420]
        %v277 = vld.sshfl [vmem:[#allocation1 + $0x38] sm:$0xff pattern:$0x75316420]
        %278 = vst [vmem:[#allocation1] ss:$2 sm:$0xff] %v224
        %279 = vst [vmem:[%s252] ss:$2 sm:$0xff] %v225
        %280 = vst [vmem:[%s254] ss:$2 sm:$0xff] %v226
        %281 = vst [vmem:[%s256] ss:$2 sm:$0xff] %v227
        %v282 = vld.sshfl [vmem:[#allocation1] sm:$0xff pattern:$0x75316420]
        %v283 = vld.sshfl [vmem:[#allocation1 + $0x8] sm:$0xff pattern:$0x75316420]
        %v284 = vld.sshfl [vmem:[#allocation1 + $0x10] sm:$0xff pattern:$0x75316420]
        %v285 = vld.sshfl [vmem:[#allocation1 + $0x18] sm:$0xff pattern:$0x75316420]
        %v286 = vld.sshfl [vmem:[#allocation1 + $0x20] sm:$0xff pattern:$0x75316420]
        %v287 = vld.sshfl [vmem:[#allocation1 + $0x28] sm:$0xff pattern:$0x75316420]
        %v288 = vld.sshfl [vmem:[#allocation1 + $0x30] sm:$0xff pattern:$0x75316420]
        %v289 = vld.sshfl [vmem:[#allocation1 + $0x38] sm:$0xff pattern:$0x75316420]
        %290 = vst [vmem:[#allocation1] ss:$2 sm:$0xff] %v228
        %291 = vst [vmem:[%s252] ss:$2 sm:$0xff] %v229
        %292 = vst [vmem:[%s254] ss:$2 sm:$0xff] %v230
        %293 = vst [vmem:[%s256] ss:$2 sm:$0xff] %v231
        %v294 = vld.sshfl [vmem:[#allocation1] sm:$0xff pattern:$0x75316420]
        %v295 = vld.sshfl [vmem:[#allocation1 + $0x8] sm:$0xff pattern:$0x75316420]
        %v296 = vld.sshfl [vmem:[#allocation1 + $0x10] sm:$0xff pattern:$0x75316420]
        %v297 = vld.sshfl [vmem:[#allocation1 + $0x18] sm:$0xff pattern:$0x75316420]
        %v298 = vld.sshfl [vmem:[#allocation1 + $0x20] sm:$0xff pattern:$0x75316420]
        %v299 = vld.sshfl [vmem:[#allocation1 + $0x28] sm:$0xff pattern:$0x75316420]
        %v300 = vld.sshfl [vmem:[#allocation1 + $0x30] sm:$0xff pattern:$0x75316420]
        %v301 = vld.sshfl [vmem:[#allocation1 + $0x38] sm:$0xff pattern:$0x75316420]
        %vm302 = vcmask 31744
        %v304 = vsel %vm302, %v232, 0
        %v307 = vsel %vm302, %v233, 0
        %v310 = vsel %vm302, %v234, 0
        %vm312 = vcmask 1043456
        %v313 = vsel %vm312, %v258, 0
        %v315 = vsel %vm312, %v259, 0
        %v317 = vsel %vm312, %v260, 0
        %v319 = vsel %vm312, %v261, 0
        %v321 = vsel %vm312, %v262, 0
        %v323 = vsel %vm312, %v263, 0
        %v325 = vsel %vm312, %v264, 0
        %v327 = vsel %vm312, %v265, 0
        %v329 = vsel %vm312, %v270, 0
        %v331 = vsel %vm312, %v271, 0
        %v333 = vsel %vm312, %v272, 0
        %v335 = vsel %vm312, %v273, 0
        %v337 = vsel %vm312, %v274, 0
        %v339 = vsel %vm312, %v275, 0
        %v341 = vsel %vm312, %v276, 0
        %v343 = vsel %vm312, %v277, 0
        %v345 = vsel %vm312, %v282, 0
        %v347 = vsel %vm312, %v283, 0
        %v349 = vsel %vm312, %v284, 0
        %v351 = vsel %vm312, %v285, 0
        %v353 = vsel %vm312, %v286, 0
        %v355 = vsel %vm312, %v287, 0
        %v357 = vsel %vm312, %v288, 0
        %v359 = vsel %vm312, %v289, 0
        %v361 = vsel %vm312, %v294, 0
        %v363 = vsel %vm312, %v295, 0
        %v365 = vsel %vm312, %v296, 0
        %v367 = vsel %vm312, %v297, 0
        %v369 = vsel %vm312, %v298, 0
        %v371 = vsel %vm312, %v299, 0
        %v373 = vsel %vm312, %v300, 0
        %v375 = vsel %vm312, %v301, 0
        %377 = vmatpush.msra.mxu0 0.0
        %378 = vmatpush.msra.mxu0 0.0
        %379 = vmatpush.msra.mxu0 0.0
        %380 = vmatpush.msra.mxu0 0.0
        %381 = vmatpush.msra.mxu0 0.0
        %382 = vmatpush.msra.mxu0 0.0
        %383 = vmatpush.msra.mxu0 0.0
        %384 = vmatpush.msra.mxu0 0.0
        %385 = vmatpush.msra.mxu0 0.0
        %386 = vmatpush.msra.mxu0 0.0
        %387 = vmatpush.msra.mxu0 0.0
        %388 = vmatpush.msra.mxu0 0.0
        %389 = vmatpush.msra.mxu0 0.0
        %390 = vmatpush.msra.mxu0 0.0
        %391 = vmatpush.msra.mxu0 0.0
        %392 = vmatpush.msra.mxu0 %v313
        %393 = vmatmul.f32.gmra.mxu0 %v304
        %v394 = vpop.f32.mrf.mxu0
        %v395 = vadd.f32 0.0, %v394
        %396 = vmatmul.f32.gmra.mxu0 %v307
        %v397 = vpop.f32.mrf.mxu0
        %v398 = vadd.f32 0.0, %v397
        %399 = vmatmul.f32.gmra.mxu0 %v310
        %v400 = vpop.f32.mrf.mxu0
        %v401 = vadd.f32 0.0, %v400
        %402 = vdwg.mxu0
        %403 = vmatpush.msra.mxu0 0.0
        %404 = vmatpush.msra.mxu0 0.0
        %405 = vmatpush.msra.mxu0 0.0
        %406 = vmatpush.msra.mxu0 0.0
        %407 = vmatpush.msra.mxu0 0.0
        %408 = vmatpush.msra.mxu0 0.0
        %409 = vmatpush.msra.mxu0 0.0
        %410 = vmatpush.msra.mxu0 0.0
        %411 = vmatpush.msra.mxu0 0.0
        %412 = vmatpush.msra.mxu0 0.0
        %413 = vmatpush.msra.mxu0 0.0
        %414 = vmatpush.msra.mxu0 0.0
        %415 = vmatpush.msra.mxu0 0.0
        %416 = vmatpush.msra.mxu0 0.0
        %417 = vmatpush.msra.mxu0 0.0
        %418 = vmatpush.msra.mxu0 %v315
        %419 = vmatmul.f32.gmra.mxu0 %v304
        %v420 = vpop.f32.mrf.mxu0
        %v421 = vadd.f32 0.0, %v420
        %422 = vmatmul.f32.gmra.mxu0 %v307
        %v423 = vpop.f32.mrf.mxu0
        %v424 = vadd.f32 0.0, %v423
        %425 = vmatmul.f32.gmra.mxu0 %v310
        %v426 = vpop.f32.mrf.mxu0
        %v427 = vadd.f32 0.0, %v426
        %428 = vdwg.mxu0
        %429 = vmatpush.msra.mxu0 0.0
        %430 = vmatpush.msra.mxu0 0.0
        %431 = vmatpush.msra.mxu0 0.0
        %432 = vmatpush.msra.mxu0 0.0
        %433 = vmatpush.msra.mxu0 0.0
        %434 = vmatpush.msra.mxu0 0.0
        %435 = vmatpush.msra.mxu0 0.0
        %436 = vmatpush.msra.mxu0 0.0
        %437 = vmatpush.msra.mxu0 0.0
        %438 = vmatpush.msra.mxu0 0.0
        %439 = vmatpush.msra.mxu0 0.0
        %440 = vmatpush.msra.mxu0 0.0
        %441 = vmatpush.msra.mxu0 0.0
        %442 = vmatpush.msra.mxu0 0.0
        %443 = vmatpush.msra.mxu0 0.0
        %444 = vmatpush.msra.mxu0 %v317
        %445 = vmatmul.f32.gmra.mxu0 %v304
        %v446 = vpop.f32.mrf.mxu0
        %v447 = vadd.f32 0.0, %v446
        %448 = vmatmul.f32.gmra.mxu0 %v307
        %v449 = vpop.f32.mrf.mxu0
        %v450 = vadd.f32 0.0, %v449
        %451 = vmatmul.f32.gmra.mxu0 %v310
        %v452 = vpop.f32.mrf.mxu0
        %v453 = vadd.f32 0.0, %v452
        %454 = vdwg.mxu0
        %455 = vmatpush.msra.mxu0 0.0
        %456 = vmatpush.msra.mxu0 0.0
        %457 = vmatpush.msra.mxu0 0.0
        %458 = vmatpush.msra.mxu0 0.0
        %459 = vmatpush.msra.mxu0 0.0
        %460 = vmatpush.msra.mxu0 0.0
        %461 = vmatpush.msra.mxu0 0.0
        %462 = vmatpush.msra.mxu0 0.0
        %463 = vmatpush.msra.mxu0 0.0
        %464 = vmatpush.msra.mxu0 0.0
        %465 = vmatpush.msra.mxu0 0.0
        %466 = vmatpush.msra.mxu0 0.0
        %467 = vmatpush.msra.mxu0 0.0
        %468 = vmatpush.msra.mxu0 0.0
        %469 = vmatpush.msra.mxu0 0.0
        %470 = vmatpush.msra.mxu0 %v319
        %471 = vmatmul.f32.gmra.mxu0 %v304
        %v472 = vpop.f32.mrf.mxu0
        %v473 = vadd.f32 0.0, %v472
        %474 = vmatmul.f32.gmra.mxu0 %v307
        %v475 = vpop.f32.mrf.mxu0
        %v476 = vadd.f32 0.0, %v475
        %477 = vmatmul.f32.gmra.mxu0 %v310
        %v478 = vpop.f32.mrf.mxu0
        %v479 = vadd.f32 0.0, %v478
        %480 = vdwg.mxu0
        %481 = vmatpush.msra.mxu0 0.0
        %482 = vmatpush.msra.mxu0 0.0
        %483 = vmatpush.msra.mxu0 0.0
        %484 = vmatpush.msra.mxu0 0.0
        %485 = vmatpush.msra.mxu0 0.0
        %486 = vmatpush.msra.mxu0 0.0
        %487 = vmatpush.msra.mxu0 0.0
        %488 = vmatpush.msra.mxu0 0.0
        %489 = vmatpush.msra.mxu0 0.0
        %490 = vmatpush.msra.mxu0 0.0
        %491 = vmatpush.msra.mxu0 0.0
        %492 = vmatpush.msra.mxu0 0.0
        %493 = vmatpush.msra.mxu0 0.0
        %494 = vmatpush.msra.mxu0 0.0
        %495 = vmatpush.msra.mxu0 0.0
        %496 = vmatpush.msra.mxu0 %v321
        %497 = vmatmul.f32.gmra.mxu0 %v304
        %v498 = vpop.f32.mrf.mxu0
        %v499 = vadd.f32 0.0, %v498
        %500 = vmatmul.f32.gmra.mxu0 %v307
        %v501 = vpop.f32.mrf.mxu0
        %v502 = vadd.f32 0.0, %v501
        %503 = vmatmul.f32.gmra.mxu0 %v310
        %v504 = vpop.f32.mrf.mxu0
        %v505 = vadd.f32 0.0, %v504
        %506 = vdwg.mxu0
        %507 = vmatpush.msra.mxu0 0.0
        %508 = vmatpush.msra.mxu0 0.0
        %509 = vmatpush.msra.mxu0 0.0
        %510 = vmatpush.msra.mxu0 0.0
        %511 = vmatpush.msra.mxu0 0.0
        %512 = vmatpush.msra.mxu0 0.0
        %513 = vmatpush.msra.mxu0 0.0
        %514 = vmatpush.msra.mxu0 0.0
        %515 = vmatpush.msra.mxu0 0.0
        %516 = vmatpush.msra.mxu0 0.0
        %517 = vmatpush.msra.mxu0 0.0
        %518 = vmatpush.msra.mxu0 0.0
        %519 = vmatpush.msra.mxu0 0.0
        %520 = vmatpush.msra.mxu0 0.0
        %521 = vmatpush.msra.mxu0 0.0
        %522 = vmatpush.msra.mxu0 %v323
        %523 = vmatmul.f32.gmra.mxu0 %v304
        %v524 = vpop.f32.mrf.mxu0
        %v525 = vadd.f32 0.0, %v524
        %526 = vmatmul.f32.gmra.mxu0 %v307
        %v527 = vpop.f32.mrf.mxu0
        %v528 = vadd.f32 0.0, %v527
        %529 = vmatmul.f32.gmra.mxu0 %v310
        %v530 = vpop.f32.mrf.mxu0
        %v531 = vadd.f32 0.0, %v530
        %532 = vdwg.mxu0
        %533 = vmatpush.msra.mxu0 0.0
        %534 = vmatpush.msra.mxu0 0.0
        %535 = vmatpush.msra.mxu0 0.0
        %536 = vmatpush.msra.mxu0 0.0
        %537 = vmatpush.msra.mxu0 0.0
        %538 = vmatpush.msra.mxu0 0.0
        %539 = vmatpush.msra.mxu0 0.0
        %540 = vmatpush.msra.mxu0 0.0
        %541 = vmatpush.msra.mxu0 0.0
        %542 = vmatpush.msra.mxu0 0.0
        %543 = vmatpush.msra.mxu0 0.0
        %544 = vmatpush.msra.mxu0 0.0
        %545 = vmatpush.msra.mxu0 0.0
        %546 = vmatpush.msra.mxu0 0.0
        %547 = vmatpush.msra.mxu0 0.0
        %548 = vmatpush.msra.mxu0 %v325
        %549 = vmatmul.f32.gmra.mxu0 %v304
        %v550 = vpop.f32.mrf.mxu0
        %v551 = vadd.f32 0.0, %v550
        %552 = vmatmul.f32.gmra.mxu0 %v307
        %v553 = vpop.f32.mrf.mxu0
        %v554 = vadd.f32 0.0, %v553
        %555 = vmatmul.f32.gmra.mxu0 %v310
        %v556 = vpop.f32.mrf.mxu0
        %v557 = vadd.f32 0.0, %v556
        %558 = vdwg.mxu0
        %559 = vmatpush.msra.mxu0 0.0
        %560 = vmatpush.msra.mxu0 0.0
        %561 = vmatpush.msra.mxu0 0.0
        %562 = vmatpush.msra.mxu0 0.0
        %563 = vmatpush.msra.mxu0 0.0
        %564 = vmatpush.msra.mxu0 0.0
        %565 = vmatpush.msra.mxu0 0.0
        %566 = vmatpush.msra.mxu0 0.0
        %567 = vmatpush.msra.mxu0 0.0
        %568 = vmatpush.msra.mxu0 0.0
        %569 = vmatpush.msra.mxu0 0.0
        %570 = vmatpush.msra.mxu0 0.0
        %571 = vmatpush.msra.mxu0 0.0
        %572 = vmatpush.msra.mxu0 0.0
        %573 = vmatpush.msra.mxu0 0.0
        %574 = vmatpush.msra.mxu0 %v327
        %575 = vmatmul.f32.gmra.mxu0 %v304
        %v576 = vpop.f32.mrf.mxu0
        %v577 = vadd.f32 0.0, %v576
        %578 = vmatmul.f32.gmra.mxu0 %v307
        %v579 = vpop.f32.mrf.mxu0
        %v580 = vadd.f32 0.0, %v579
        %581 = vmatmul.f32.gmra.mxu0 %v310
        %v582 = vpop.f32.mrf.mxu0
        %v583 = vadd.f32 0.0, %v582
        %584 = vdwg.mxu0
        %585 = vmatpush.msra.mxu0 0.0
        %586 = vmatpush.msra.mxu0 0.0
        %587 = vmatpush.msra.mxu0 0.0
        %588 = vmatpush.msra.mxu0 0.0
        %589 = vmatpush.msra.mxu0 0.0
        %590 = vmatpush.msra.mxu0 0.0
        %591 = vmatpush.msra.mxu0 0.0
        %592 = vmatpush.msra.mxu0 0.0
        %593 = vmatpush.msra.mxu0 0.0
        %594 = vmatpush.msra.mxu0 0.0
        %595 = vmatpush.msra.mxu0 0.0
        %596 = vmatpush.msra.mxu0 0.0
        %597 = vmatpush.msra.mxu0 0.0
        %598 = vmatpush.msra.mxu0 0.0
        %599 = vmatpush.msra.mxu0 0.0
        %600 = vmatpush.msra.mxu0 %v329
        %601 = vmatmul.f32.gmra.mxu0 %v304
        %v602 = vpop.f32.mrf.mxu0
        %v603 = vadd.f32 0.0, %v602
        %604 = vmatmul.f32.gmra.mxu0 %v307
        %v605 = vpop.f32.mrf.mxu0
        %v606 = vadd.f32 0.0, %v605
        %607 = vmatmul.f32.gmra.mxu0 %v310
        %v608 = vpop.f32.mrf.mxu0
        %v609 = vadd.f32 0.0, %v608
        %610 = vdwg.mxu0
        %611 = vmatpush.msra.mxu0 0.0
        %612 = vmatpush.msra.mxu0 0.0
        %613 = vmatpush.msra.mxu0 0.0
        %614 = vmatpush.msra.mxu0 0.0
        %615 = vmatpush.msra.mxu0 0.0
        %616 = vmatpush.msra.mxu0 0.0
        %617 = vmatpush.msra.mxu0 0.0
        %618 = vmatpush.msra.mxu0 0.0
        %619 = vmatpush.msra.mxu0 0.0
        %620 = vmatpush.msra.mxu0 0.0
        %621 = vmatpush.msra.mxu0 0.0
        %622 = vmatpush.msra.mxu0 0.0
        %623 = vmatpush.msra.mxu0 0.0
        %624 = vmatpush.msra.mxu0 0.0
        %625 = vmatpush.msra.mxu0 0.0
        %626 = vmatpush.msra.mxu0 %v331
        %627 = vmatmul.f32.gmra.mxu0 %v304
        %v628 = vpop.f32.mrf.mxu0
        %v629 = vadd.f32 0.0, %v628
        %630 = vmatmul.f32.gmra.mxu0 %v307
        %v631 = vpop.f32.mrf.mxu0
        %v632 = vadd.f32 0.0, %v631
        %633 = vmatmul.f32.gmra.mxu0 %v310
        %v634 = vpop.f32.mrf.mxu0
        %v635 = vadd.f32 0.0, %v634
        %636 = vdwg.mxu0
        %637 = vmatpush.msra.mxu0 0.0
        %638 = vmatpush.msra.mxu0 0.0
        %639 = vmatpush.msra.mxu0 0.0
        %640 = vmatpush.msra.mxu0 0.0
        %641 = vmatpush.msra.mxu0 0.0
        %642 = vmatpush.msra.mxu0 0.0
        %643 = vmatpush.msra.mxu0 0.0
        %644 = vmatpush.msra.mxu0 0.0
        %645 = vmatpush.msra.mxu0 0.0
        %646 = vmatpush.msra.mxu0 0.0
        %647 = vmatpush.msra.mxu0 0.0
        %648 = vmatpush.msra.mxu0 0.0
        %649 = vmatpush.msra.mxu0 0.0
        %650 = vmatpush.msra.mxu0 0.0
        %651 = vmatpush.msra.mxu0 0.0
        %652 = vmatpush.msra.mxu0 %v333
        %653 = vmatmul.f32.gmra.mxu0 %v304
        %v654 = vpop.f32.mrf.mxu0
        %v655 = vadd.f32 0.0, %v654
        %656 = vmatmul.f32.gmra.mxu0 %v307
        %v657 = vpop.f32.mrf.mxu0
        %v658 = vadd.f32 0.0, %v657
        %659 = vmatmul.f32.gmra.mxu0 %v310
        %v660 = vpop.f32.mrf.mxu0
        %v661 = vadd.f32 0.0, %v660
        %662 = vdwg.mxu0
        %663 = vmatpush.msra.mxu0 0.0
        %664 = vmatpush.msra.mxu0 0.0
        %665 = vmatpush.msra.mxu0 0.0
        %666 = vmatpush.msra.mxu0 0.0
        %667 = vmatpush.msra.mxu0 0.0
        %668 = vmatpush.msra.mxu0 0.0
        %669 = vmatpush.msra.mxu0 0.0
        %670 = vmatpush.msra.mxu0 0.0
        %671 = vmatpush.msra.mxu0 0.0
        %672 = vmatpush.msra.mxu0 0.0
        %673 = vmatpush.msra.mxu0 0.0
        %674 = vmatpush.msra.mxu0 0.0
        %675 = vmatpush.msra.mxu0 0.0
        %676 = vmatpush.msra.mxu0 0.0
        %677 = vmatpush.msra.mxu0 0.0
        %678 = vmatpush.msra.mxu0 %v335
        %679 = vmatmul.f32.gmra.mxu0 %v304
        %v680 = vpop.f32.mrf.mxu0
        %v681 = vadd.f32 0.0, %v680
        %682 = vmatmul.f32.gmra.mxu0 %v307
        %v683 = vpop.f32.mrf.mxu0
        %v684 = vadd.f32 0.0, %v683
        %685 = vmatmul.f32.gmra.mxu0 %v310
        %v686 = vpop.f32.mrf.mxu0
        %v687 = vadd.f32 0.0, %v686
        %688 = vdwg.mxu0
        %689 = vmatpush.msra.mxu0 0.0
        %690 = vmatpush.msra.mxu0 0.0
        %691 = vmatpush.msra.mxu0 0.0
        %692 = vmatpush.msra.mxu0 0.0
        %693 = vmatpush.msra.mxu0 0.0
        %694 = vmatpush.msra.mxu0 0.0
        %695 = vmatpush.msra.mxu0 0.0
        %696 = vmatpush.msra.mxu0 0.0
        %697 = vmatpush.msra.mxu0 0.0
        %698 = vmatpush.msra.mxu0 0.0
        %699 = vmatpush.msra.mxu0 0.0
        %700 = vmatpush.msra.mxu0 0.0
        %701 = vmatpush.msra.mxu0 0.0
        %702 = vmatpush.msra.mxu0 0.0
        %703 = vmatpush.msra.mxu0 0.0
        %704 = vmatpush.msra.mxu0 %v337
        %705 = vmatmul.f32.gmra.mxu0 %v304
        %v706 = vpop.f32.mrf.mxu0
        %v707 = vadd.f32 0.0, %v706
        %708 = vmatmul.f32.gmra.mxu0 %v307
        %v709 = vpop.f32.mrf.mxu0
        %v710 = vadd.f32 0.0, %v709
        %711 = vmatmul.f32.gmra.mxu0 %v310
        %v712 = vpop.f32.mrf.mxu0
        %v713 = vadd.f32 0.0, %v712
        %714 = vdwg.mxu0
        %715 = vmatpush.msra.mxu0 0.0
        %716 = vmatpush.msra.mxu0 0.0
        %717 = vmatpush.msra.mxu0 0.0
        %718 = vmatpush.msra.mxu0 0.0
        %719 = vmatpush.msra.mxu0 0.0
        %720 = vmatpush.msra.mxu0 0.0
        %721 = vmatpush.msra.mxu0 0.0
        %722 = vmatpush.msra.mxu0 0.0
        %723 = vmatpush.msra.mxu0 0.0
        %724 = vmatpush.msra.mxu0 0.0
        %725 = vmatpush.msra.mxu0 0.0
        %726 = vmatpush.msra.mxu0 0.0
        %727 = vmatpush.msra.mxu0 0.0
        %728 = vmatpush.msra.mxu0 0.0
        %729 = vmatpush.msra.mxu0 0.0
        %730 = vmatpush.msra.mxu0 %v339
        %731 = vmatmul.f32.gmra.mxu0 %v304
        %v732 = vpop.f32.mrf.mxu0
        %v733 = vadd.f32 0.0, %v732
        %734 = vmatmul.f32.gmra.mxu0 %v307
        %v735 = vpop.f32.mrf.mxu0
        %v736 = vadd.f32 0.0, %v735
        %737 = vmatmul.f32.gmra.mxu0 %v310
        %v738 = vpop.f32.mrf.mxu0
        %v739 = vadd.f32 0.0, %v738
        %740 = vdwg.mxu0
        %741 = vmatpush.msra.mxu0 0.0
        %742 = vmatpush.msra.mxu0 0.0
        %743 = vmatpush.msra.mxu0 0.0
        %744 = vmatpush.msra.mxu0 0.0
        %745 = vmatpush.msra.mxu0 0.0
        %746 = vmatpush.msra.mxu0 0.0
        %747 = vmatpush.msra.mxu0 0.0
        %748 = vmatpush.msra.mxu0 0.0
        %749 = vmatpush.msra.mxu0 0.0
        %750 = vmatpush.msra.mxu0 0.0
        %751 = vmatpush.msra.mxu0 0.0
        %752 = vmatpush.msra.mxu0 0.0
        %753 = vmatpush.msra.mxu0 0.0
        %754 = vmatpush.msra.mxu0 0.0
        %755 = vmatpush.msra.mxu0 0.0
        %756 = vmatpush.msra.mxu0 %v341
        %757 = vmatmul.f32.gmra.mxu0 %v304
        %v758 = vpop.f32.mrf.mxu0
        %v759 = vadd.f32 0.0, %v758
        %760 = vmatmul.f32.gmra.mxu0 %v307
        %v761 = vpop.f32.mrf.mxu0
        %v762 = vadd.f32 0.0, %v761
        %763 = vmatmul.f32.gmra.mxu0 %v310
        %v764 = vpop.f32.mrf.mxu0
        %v765 = vadd.f32 0.0, %v764
        %766 = vdwg.mxu0
        %767 = vmatpush.msra.mxu0 0.0
        %768 = vmatpush.msra.mxu0 0.0
        %769 = vmatpush.msra.mxu0 0.0
        %770 = vmatpush.msra.mxu0 0.0
        %771 = vmatpush.msra.mxu0 0.0
        %772 = vmatpush.msra.mxu0 0.0
        %773 = vmatpush.msra.mxu0 0.0
        %774 = vmatpush.msra.mxu0 0.0
        %775 = vmatpush.msra.mxu0 0.0
        %776 = vmatpush.msra.mxu0 0.0
        %777 = vmatpush.msra.mxu0 0.0
        %778 = vmatpush.msra.mxu0 0.0
        %779 = vmatpush.msra.mxu0 0.0
        %780 = vmatpush.msra.mxu0 0.0
        %781 = vmatpush.msra.mxu0 0.0
        %782 = vmatpush.msra.mxu0 %v343
        %783 = vmatmul.f32.gmra.mxu0 %v304
        %v784 = vpop.f32.mrf.mxu0
        %v785 = vadd.f32 0.0, %v784
        %786 = vmatmul.f32.gmra.mxu0 %v307
        %v787 = vpop.f32.mrf.mxu0
        %v788 = vadd.f32 0.0, %v787
        %789 = vmatmul.f32.gmra.mxu0 %v310
        %v790 = vpop.f32.mrf.mxu0
        %v791 = vadd.f32 0.0, %v790
        %792 = vdwg.mxu0
        %793 = vmatpush.msra.mxu0 0.0
        %794 = vmatpush.msra.mxu0 0.0
        %795 = vmatpush.msra.mxu0 0.0
        %796 = vmatpush.msra.mxu0 0.0
        %797 = vmatpush.msra.mxu0 0.0
        %798 = vmatpush.msra.mxu0 0.0
        %799 = vmatpush.msra.mxu0 0.0
        %800 = vmatpush.msra.mxu0 0.0
        %801 = vmatpush.msra.mxu0 0.0
        %802 = vmatpush.msra.mxu0 0.0
        %803 = vmatpush.msra.mxu0 0.0
        %804 = vmatpush.msra.mxu0 0.0
        %805 = vmatpush.msra.mxu0 0.0
        %806 = vmatpush.msra.mxu0 0.0
        %807 = vmatpush.msra.mxu0 0.0
        %808 = vmatpush.msra.mxu0 %v345
        %809 = vmatmul.f32.gmra.mxu0 %v304
        %v810 = vpop.f32.mrf.mxu0
        %v811 = vadd.f32 0.0, %v810
        %812 = vmatmul.f32.gmra.mxu0 %v307
        %v813 = vpop.f32.mrf.mxu0
        %v814 = vadd.f32 0.0, %v813
        %815 = vmatmul.f32.gmra.mxu0 %v310
        %v816 = vpop.f32.mrf.mxu0
        %v817 = vadd.f32 0.0, %v816
        %818 = vdwg.mxu0
        %819 = vmatpush.msra.mxu0 0.0
        %820 = vmatpush.msra.mxu0 0.0
        %821 = vmatpush.msra.mxu0 0.0
        %822 = vmatpush.msra.mxu0 0.0
        %823 = vmatpush.msra.mxu0 0.0
        %824 = vmatpush.msra.mxu0 0.0
        %825 = vmatpush.msra.mxu0 0.0
        %826 = vmatpush.msra.mxu0 0.0
        %827 = vmatpush.msra.mxu0 0.0
        %828 = vmatpush.msra.mxu0 0.0
        %829 = vmatpush.msra.mxu0 0.0
        %830 = vmatpush.msra.mxu0 0.0
        %831 = vmatpush.msra.mxu0 0.0
        %832 = vmatpush.msra.mxu0 0.0
        %833 = vmatpush.msra.mxu0 0.0
        %834 = vmatpush.msra.mxu0 %v347
        %835 = vmatmul.f32.gmra.mxu0 %v304
        %v836 = vpop.f32.mrf.mxu0
        %v837 = vadd.f32 0.0, %v836
        %838 = vmatmul.f32.gmra.mxu0 %v307
        %v839 = vpop.f32.mrf.mxu0
        %v840 = vadd.f32 0.0, %v839
        %841 = vmatmul.f32.gmra.mxu0 %v310
        %v842 = vpop.f32.mrf.mxu0
        %v843 = vadd.f32 0.0, %v842
        %844 = vdwg.mxu0
        %845 = vmatpush.msra.mxu0 0.0
        %846 = vmatpush.msra.mxu0 0.0
        %847 = vmatpush.msra.mxu0 0.0
        %848 = vmatpush.msra.mxu0 0.0
        %849 = vmatpush.msra.mxu0 0.0
        %850 = vmatpush.msra.mxu0 0.0
        %851 = vmatpush.msra.mxu0 0.0
        %852 = vmatpush.msra.mxu0 0.0
        %853 = vmatpush.msra.mxu0 0.0
        %854 = vmatpush.msra.mxu0 0.0
        %855 = vmatpush.msra.mxu0 0.0
        %856 = vmatpush.msra.mxu0 0.0
        %857 = vmatpush.msra.mxu0 0.0
        %858 = vmatpush.msra.mxu0 0.0
        %859 = vmatpush.msra.mxu0 0.0
        %860 = vmatpush.msra.mxu0 %v349
        %861 = vmatmul.f32.gmra.mxu0 %v304
        %v862 = vpop.f32.mrf.mxu0
        %v863 = vadd.f32 0.0, %v862
        %864 = vmatmul.f32.gmra.mxu0 %v307
        %v865 = vpop.f32.mrf.mxu0
        %v866 = vadd.f32 0.0, %v865
        %867 = vmatmul.f32.gmra.mxu0 %v310
        %v868 = vpop.f32.mrf.mxu0
        %v869 = vadd.f32 0.0, %v868
        %870 = vdwg.mxu0
        %871 = vmatpush.msra.mxu0 0.0
        %872 = vmatpush.msra.mxu0 0.0
        %873 = vmatpush.msra.mxu0 0.0
        %874 = vmatpush.msra.mxu0 0.0
        %875 = vmatpush.msra.mxu0 0.0
        %876 = vmatpush.msra.mxu0 0.0
        %877 = vmatpush.msra.mxu0 0.0
        %878 = vmatpush.msra.mxu0 0.0
        %879 = vmatpush.msra.mxu0 0.0
        %880 = vmatpush.msra.mxu0 0.0
        %881 = vmatpush.msra.mxu0 0.0
        %882 = vmatpush.msra.mxu0 0.0
        %883 = vmatpush.msra.mxu0 0.0
        %884 = vmatpush.msra.mxu0 0.0
        %885 = vmatpush.msra.mxu0 0.0
        %886 = vmatpush.msra.mxu0 %v351
        %887 = vmatmul.f32.gmra.mxu0 %v304
        %v888 = vpop.f32.mrf.mxu0
        %v889 = vadd.f32 0.0, %v888
        %890 = vmatmul.f32.gmra.mxu0 %v307
        %v891 = vpop.f32.mrf.mxu0
        %v892 = vadd.f32 0.0, %v891
        %893 = vmatmul.f32.gmra.mxu0 %v310
        %v894 = vpop.f32.mrf.mxu0
        %v895 = vadd.f32 0.0, %v894
        %896 = vdwg.mxu0
        %897 = vmatpush.msra.mxu0 0.0
        %898 = vmatpush.msra.mxu0 0.0
        %899 = vmatpush.msra.mxu0 0.0
        %900 = vmatpush.msra.mxu0 0.0
        %901 = vmatpush.msra.mxu0 0.0
        %902 = vmatpush.msra.mxu0 0.0
        %903 = vmatpush.msra.mxu0 0.0
        %904 = vmatpush.msra.mxu0 0.0
        %905 = vmatpush.msra.mxu0 0.0
        %906 = vmatpush.msra.mxu0 0.0
        %907 = vmatpush.msra.mxu0 0.0
        %908 = vmatpush.msra.mxu0 0.0
        %909 = vmatpush.msra.mxu0 0.0
        %910 = vmatpush.msra.mxu0 0.0
        %911 = vmatpush.msra.mxu0 0.0
        %912 = vmatpush.msra.mxu0 %v353
        %913 = vmatmul.f32.gmra.mxu0 %v304
        %v914 = vpop.f32.mrf.mxu0
        %v915 = vadd.f32 0.0, %v914
        %916 = vmatmul.f32.gmra.mxu0 %v307
        %v917 = vpop.f32.mrf.mxu0
        %v918 = vadd.f32 0.0, %v917
        %919 = vmatmul.f32.gmra.mxu0 %v310
        %v920 = vpop.f32.mrf.mxu0
        %v921 = vadd.f32 0.0, %v920
        %922 = vdwg.mxu0
        %923 = vmatpush.msra.mxu0 0.0
        %924 = vmatpush.msra.mxu0 0.0
        %925 = vmatpush.msra.mxu0 0.0
        %926 = vmatpush.msra.mxu0 0.0
        %927 = vmatpush.msra.mxu0 0.0
        %928 = vmatpush.msra.mxu0 0.0
        %929 = vmatpush.msra.mxu0 0.0
        %930 = vmatpush.msra.mxu0 0.0
        %931 = vmatpush.msra.mxu0 0.0
        %932 = vmatpush.msra.mxu0 0.0
        %933 = vmatpush.msra.mxu0 0.0
        %934 = vmatpush.msra.mxu0 0.0
        %935 = vmatpush.msra.mxu0 0.0
        %936 = vmatpush.msra.mxu0 0.0
        %937 = vmatpush.msra.mxu0 0.0
        %938 = vmatpush.msra.mxu0 %v355
        %939 = vmatmul.f32.gmra.mxu0 %v304
        %v940 = vpop.f32.mrf.mxu0
        %v941 = vadd.f32 0.0, %v940
        %942 = vmatmul.f32.gmra.mxu0 %v307
        %v943 = vpop.f32.mrf.mxu0
        %v944 = vadd.f32 0.0, %v943
        %945 = vmatmul.f32.gmra.mxu0 %v310
        %v946 = vpop.f32.mrf.mxu0
        %v947 = vadd.f32 0.0, %v946
        %948 = vdwg.mxu0
        %949 = vmatpush.msra.mxu0 0.0
        %950 = vmatpush.msra.mxu0 0.0
        %951 = vmatpush.msra.mxu0 0.0
        %952 = vmatpush.msra.mxu0 0.0
        %953 = vmatpush.msra.mxu0 0.0
        %954 = vmatpush.msra.mxu0 0.0
        %955 = vmatpush.msra.mxu0 0.0
        %956 = vmatpush.msra.mxu0 0.0
        %957 = vmatpush.msra.mxu0 0.0
        %958 = vmatpush.msra.mxu0 0.0
        %959 = vmatpush.msra.mxu0 0.0
        %960 = vmatpush.msra.mxu0 0.0
        %961 = vmatpush.msra.mxu0 0.0
        %962 = vmatpush.msra.mxu0 0.0
        %963 = vmatpush.msra.mxu0 0.0
        %964 = vmatpush.msra.mxu0 %v357
        %965 = vmatmul.f32.gmra.mxu0 %v304
        %v966 = vpop.f32.mrf.mxu0
        %v967 = vadd.f32 0.0, %v966
        %968 = vmatmul.f32.gmra.mxu0 %v307
        %v969 = vpop.f32.mrf.mxu0
        %v970 = vadd.f32 0.0, %v969
        %971 = vmatmul.f32.gmra.mxu0 %v310
        %v972 = vpop.f32.mrf.mxu0
        %v973 = vadd.f32 0.0, %v972
        %974 = vdwg.mxu0
        %975 = vmatpush.msra.mxu0 0.0
        %976 = vmatpush.msra.mxu0 0.0
        %977 = vmatpush.msra.mxu0 0.0
        %978 = vmatpush.msra.mxu0 0.0
        %979 = vmatpush.msra.mxu0 0.0
        %980 = vmatpush.msra.mxu0 0.0
        %981 = vmatpush.msra.mxu0 0.0
        %982 = vmatpush.msra.mxu0 0.0
        %983 = vmatpush.msra.mxu0 0.0
        %984 = vmatpush.msra.mxu0 0.0
        %985 = vmatpush.msra.mxu0 0.0
        %986 = vmatpush.msra.mxu0 0.0
        %987 = vmatpush.msra.mxu0 0.0
        %988 = vmatpush.msra.mxu0 0.0
        %989 = vmatpush.msra.mxu0 0.0
        %990 = vmatpush.msra.mxu0 %v359
        %991 = vmatmul.f32.gmra.mxu0 %v304
        %v992 = vpop.f32.mrf.mxu0
        %v993 = vadd.f32 0.0, %v992
        %994 = vmatmul.f32.gmra.mxu0 %v307
        %v995 = vpop.f32.mrf.mxu0
        %v996 = vadd.f32 0.0, %v995
        %997 = vmatmul.f32.gmra.mxu0 %v310
        %v998 = vpop.f32.mrf.mxu0
        %v999 = vadd.f32 0.0, %v998
        %1000 = vdwg.mxu0
        %1001 = vmatpush.msra.mxu0 0.0
        %1002 = vmatpush.msra.mxu0 0.0
        %1003 = vmatpush.msra.mxu0 0.0
        %1004 = vmatpush.msra.mxu0 0.0
        %1005 = vmatpush.msra.mxu0 0.0
        %1006 = vmatpush.msra.mxu0 0.0
        %1007 = vmatpush.msra.mxu0 0.0
        %1008 = vmatpush.msra.mxu0 0.0
        %1009 = vmatpush.msra.mxu0 0.0
        %1010 = vmatpush.msra.mxu0 0.0
        %1011 = vmatpush.msra.mxu0 0.0
        %1012 = vmatpush.msra.mxu0 0.0
        %1013 = vmatpush.msra.mxu0 0.0
        %1014 = vmatpush.msra.mxu0 0.0
        %1015 = vmatpush.msra.mxu0 0.0
        %1016 = vmatpush.msra.mxu0 %v361
        %1017 = vmatmul.f32.gmra.mxu0 %v304
        %v1018 = vpop.f32.mrf.mxu0
        %v1019 = vadd.f32 0.0, %v1018
        %1020 = vmatmul.f32.gmra.mxu0 %v307
        %v1021 = vpop.f32.mrf.mxu0
        %v1022 = vadd.f32 0.0, %v1021
        %1023 = vmatmul.f32.gmra.mxu0 %v310
        %v1024 = vpop.f32.mrf.mxu0
        %v1025 = vadd.f32 0.0, %v1024
        %1026 = vdwg.mxu0
        %1027 = vmatpush.msra.mxu0 0.0
        %1028 = vmatpush.msra.mxu0 0.0
        %1029 = vmatpush.msra.mxu0 0.0
        %1030 = vmatpush.msra.mxu0 0.0
        %1031 = vmatpush.msra.mxu0 0.0
        %1032 = vmatpush.msra.mxu0 0.0
        %1033 = vmatpush.msra.mxu0 0.0
        %1034 = vmatpush.msra.mxu0 0.0
        %1035 = vmatpush.msra.mxu0 0.0
        %1036 = vmatpush.msra.mxu0 0.0
        %1037 = vmatpush.msra.mxu0 0.0
        %1038 = vmatpush.msra.mxu0 0.0
        %1039 = vmatpush.msra.mxu0 0.0
        %1040 = vmatpush.msra.mxu0 0.0
        %1041 = vmatpush.msra.mxu0 0.0
        %1042 = vmatpush.msra.mxu0 %v363
        %1043 = vmatmul.f32.gmra.mxu0 %v304
        %v1044 = vpop.f32.mrf.mxu0
        %v1045 = vadd.f32 0.0, %v1044
        %1046 = vmatmul.f32.gmra.mxu0 %v307
        %v1047 = vpop.f32.mrf.mxu0
        %v1048 = vadd.f32 0.0, %v1047
        %1049 = vmatmul.f32.gmra.mxu0 %v310
        %v1050 = vpop.f32.mrf.mxu0
        %v1051 = vadd.f32 0.0, %v1050
        %1052 = vdwg.mxu0
        %1053 = vmatpush.msra.mxu0 0.0
        %1054 = vmatpush.msra.mxu0 0.0
        %1055 = vmatpush.msra.mxu0 0.0
        %1056 = vmatpush.msra.mxu0 0.0
        %1057 = vmatpush.msra.mxu0 0.0
        %1058 = vmatpush.msra.mxu0 0.0
        %1059 = vmatpush.msra.mxu0 0.0
        %1060 = vmatpush.msra.mxu0 0.0
        %1061 = vmatpush.msra.mxu0 0.0
        %1062 = vmatpush.msra.mxu0 0.0
        %1063 = vmatpush.msra.mxu0 0.0
        %1064 = vmatpush.msra.mxu0 0.0
        %1065 = vmatpush.msra.mxu0 0.0
        %1066 = vmatpush.msra.mxu0 0.0
        %1067 = vmatpush.msra.mxu0 0.0
        %1068 = vmatpush.msra.mxu0 %v365
        %1069 = vmatmul.f32.gmra.mxu0 %v304
        %v1070 = vpop.f32.mrf.mxu0
        %v1071 = vadd.f32 0.0, %v1070
        %1072 = vmatmul.f32.gmra.mxu0 %v307
        %v1073 = vpop.f32.mrf.mxu0
        %v1074 = vadd.f32 0.0, %v1073
        %1075 = vmatmul.f32.gmra.mxu0 %v310
        %v1076 = vpop.f32.mrf.mxu0
        %v1077 = vadd.f32 0.0, %v1076
        %1078 = vdwg.mxu0
        %1079 = vmatpush.msra.mxu0 0.0
        %1080 = vmatpush.msra.mxu0 0.0
        %1081 = vmatpush.msra.mxu0 0.0
        %1082 = vmatpush.msra.mxu0 0.0
        %1083 = vmatpush.msra.mxu0 0.0
        %1084 = vmatpush.msra.mxu0 0.0
        %1085 = vmatpush.msra.mxu0 0.0
        %1086 = vmatpush.msra.mxu0 0.0
        %1087 = vmatpush.msra.mxu0 0.0
        %1088 = vmatpush.msra.mxu0 0.0
        %1089 = vmatpush.msra.mxu0 0.0
        %1090 = vmatpush.msra.mxu0 0.0
        %1091 = vmatpush.msra.mxu0 0.0
        %1092 = vmatpush.msra.mxu0 0.0
        %1093 = vmatpush.msra.mxu0 0.0
        %1094 = vmatpush.msra.mxu0 %v367
        %1095 = vmatmul.f32.gmra.mxu0 %v304
        %v1096 = vpop.f32.mrf.mxu0
        %v1097 = vadd.f32 0.0, %v1096
        %1098 = vmatmul.f32.gmra.mxu0 %v307
        %v1099 = vpop.f32.mrf.mxu0
        %v1100 = vadd.f32 0.0, %v1099
        %1101 = vmatmul.f32.gmra.mxu0 %v310
        %v1102 = vpop.f32.mrf.mxu0
        %v1103 = vadd.f32 0.0, %v1102
        %1104 = vdwg.mxu0
        %1105 = vmatpush.msra.mxu0 0.0
        %1106 = vmatpush.msra.mxu0 0.0
        %1107 = vmatpush.msra.mxu0 0.0
        %1108 = vmatpush.msra.mxu0 0.0
        %1109 = vmatpush.msra.mxu0 0.0
        %1110 = vmatpush.msra.mxu0 0.0
        %1111 = vmatpush.msra.mxu0 0.0
        %1112 = vmatpush.msra.mxu0 0.0
        %1113 = vmatpush.msra.mxu0 0.0
        %1114 = vmatpush.msra.mxu0 0.0
        %1115 = vmatpush.msra.mxu0 0.0
        %1116 = vmatpush.msra.mxu0 0.0
        %1117 = vmatpush.msra.mxu0 0.0
        %1118 = vmatpush.msra.mxu0 0.0
        %1119 = vmatpush.msra.mxu0 0.0
        %1120 = vmatpush.msra.mxu0 %v369
        %1121 = vmatmul.f32.gmra.mxu0 %v304
        %v1122 = vpop.f32.mrf.mxu0
        %v1123 = vadd.f32 0.0, %v1122
        %1124 = vmatmul.f32.gmra.mxu0 %v307
        %v1125 = vpop.f32.mrf.mxu0
        %v1126 = vadd.f32 0.0, %v1125
        %1127 = vmatmul.f32.gmra.mxu0 %v310
        %v1128 = vpop.f32.mrf.mxu0
        %v1129 = vadd.f32 0.0, %v1128
        %1130 = vdwg.mxu0
        %1131 = vmatpush.msra.mxu0 0.0
        %1132 = vmatpush.msra.mxu0 0.0
        %1133 = vmatpush.msra.mxu0 0.0
        %1134 = vmatpush.msra.mxu0 0.0
        %1135 = vmatpush.msra.mxu0 0.0
        %1136 = vmatpush.msra.mxu0 0.0
        %1137 = vmatpush.msra.mxu0 0.0
        %1138 = vmatpush.msra.mxu0 0.0
        %1139 = vmatpush.msra.mxu0 0.0
        %1140 = vmatpush.msra.mxu0 0.0
        %1141 = vmatpush.msra.mxu0 0.0
        %1142 = vmatpush.msra.mxu0 0.0
        %1143 = vmatpush.msra.mxu0 0.0
        %1144 = vmatpush.msra.mxu0 0.0
        %1145 = vmatpush.msra.mxu0 0.0
        %1146 = vmatpush.msra.mxu0 %v371
        %1147 = vmatmul.f32.gmra.mxu0 %v304
        %v1148 = vpop.f32.mrf.mxu0
        %v1149 = vadd.f32 0.0, %v1148
        %1150 = vmatmul.f32.gmra.mxu0 %v307
        %v1151 = vpop.f32.mrf.mxu0
        %v1152 = vadd.f32 0.0, %v1151
        %1153 = vmatmul.f32.gmra.mxu0 %v310
        %v1154 = vpop.f32.mrf.mxu0
        %v1155 = vadd.f32 0.0, %v1154
        %1156 = vdwg.mxu0
        %1157 = vmatpush.msra.mxu0 0.0
        %1158 = vmatpush.msra.mxu0 0.0
        %1159 = vmatpush.msra.mxu0 0.0
        %1160 = vmatpush.msra.mxu0 0.0
        %1161 = vmatpush.msra.mxu0 0.0
        %1162 = vmatpush.msra.mxu0 0.0
        %1163 = vmatpush.msra.mxu0 0.0
        %1164 = vmatpush.msra.mxu0 0.0
        %1165 = vmatpush.msra.mxu0 0.0
        %1166 = vmatpush.msra.mxu0 0.0
        %1167 = vmatpush.msra.mxu0 0.0
        %1168 = vmatpush.msra.mxu0 0.0
        %1169 = vmatpush.msra.mxu0 0.0
        %1170 = vmatpush.msra.mxu0 0.0
        %1171 = vmatpush.msra.mxu0 0.0
        %1172 = vmatpush.msra.mxu0 %v373
        %1173 = vmatmul.f32.gmra.mxu0 %v304
        %v1174 = vpop.f32.mrf.mxu0
        %v1175 = vadd.f32 0.0, %v1174
        %1176 = vmatmul.f32.gmra.mxu0 %v307
        %v1177 = vpop.f32.mrf.mxu0
        %v1178 = vadd.f32 0.0, %v1177
        %1179 = vmatmul.f32.gmra.mxu0 %v310
        %v1180 = vpop.f32.mrf.mxu0
        %v1181 = vadd.f32 0.0, %v1180
        %1182 = vdwg.mxu0
        %1183 = vmatpush.msra.mxu0 0.0
        %1184 = vmatpush.msra.mxu0 0.0
        %1185 = vmatpush.msra.mxu0 0.0
        %1186 = vmatpush.msra.mxu0 0.0
        %1187 = vmatpush.msra.mxu0 0.0
        %1188 = vmatpush.msra.mxu0 0.0
        %1189 = vmatpush.msra.mxu0 0.0
        %1190 = vmatpush.msra.mxu0 0.0
        %1191 = vmatpush.msra.mxu0 0.0
        %1192 = vmatpush.msra.mxu0 0.0
        %1193 = vmatpush.msra.mxu0 0.0
        %1194 = vmatpush.msra.mxu0 0.0
        %1195 = vmatpush.msra.mxu0 0.0
        %1196 = vmatpush.msra.mxu0 0.0
        %1197 = vmatpush.msra.mxu0 0.0
        %1198 = vmatpush.msra.mxu0 %v375
        %1199 = vmatmul.f32.gmra.mxu0 %v304
        %v1200 = vpop.f32.mrf.mxu0
        %v1201 = vadd.f32 0.0, %v1200
        %1202 = vmatmul.f32.gmra.mxu0 %v307
        %v1203 = vpop.f32.mrf.mxu0
        %v1204 = vadd.f32 0.0, %v1203
        %1205 = vmatmul.f32.gmra.mxu0 %v310
        %v1206 = vpop.f32.mrf.mxu0
        %v1207 = vadd.f32 0.0, %v1206
        %1208 = vdwg.mxu0
        %v1305 = vrot.slane %v421, 7
        %v1306 = vrot.slane %v447, 6
        %v1307 = vrot.slane %v473, 5
        %v1308 = vrot.slane %v499, 4
        %v1309 = vrot.slane %v525, 3
        %v1310 = vrot.slane %v551, 2
        %v1311 = vrot.slane %v577, 1
        %v1312 = vrot.slane %v629, 7
        %v1313 = vrot.slane %v655, 6
        %v1314 = vrot.slane %v681, 5
        %v1315 = vrot.slane %v707, 4
        %v1316 = vrot.slane %v733, 3
        %v1317 = vrot.slane %v759, 2
        %v1318 = vrot.slane %v785, 1
        %v1319 = vrot.slane %v837, 7
        %v1320 = vrot.slane %v863, 6
        %v1321 = vrot.slane %v889, 5
        %v1322 = vrot.slane %v915, 4
        %v1323 = vrot.slane %v941, 3
        %v1324 = vrot.slane %v967, 2
        %v1325 = vrot.slane %v993, 1
        %v1326 = vrot.slane %v1045, 7
        %v1327 = vrot.slane %v1071, 6
        %v1328 = vrot.slane %v1097, 5
        %v1329 = vrot.slane %v1123, 4
        %v1330 = vrot.slane %v1149, 3
        %v1331 = vrot.slane %v1175, 2
        %v1332 = vrot.slane %v1201, 1
        %v1333 = vrot.slane %v424, 7
        %v1334 = vrot.slane %v450, 6
        %v1335 = vrot.slane %v476, 5
        %v1336 = vrot.slane %v502, 4
        %v1337 = vrot.slane %v528, 3
        %v1338 = vrot.slane %v554, 2
        %v1339 = vrot.slane %v580, 1
        %v1340 = vrot.slane %v632, 7
        %v1341 = vrot.slane %v658, 6
        %v1342 = vrot.slane %v684, 5
        %v1343 = vrot.slane %v710, 4
        %v1344 = vrot.slane %v736, 3
        %v1345 = vrot.slane %v762, 2
        %v1346 = vrot.slane %v788, 1
        %v1347 = vrot.slane %v840, 7
        %v1348 = vrot.slane %v866, 6
        %v1349 = vrot.slane %v892, 5
        %v1350 = vrot.slane %v918, 4
        %v1351 = vrot.slane %v944, 3
        %v1352 = vrot.slane %v970, 2
        %v1353 = vrot.slane %v996, 1
        %v1354 = vrot.slane %v1048, 7
        %v1355 = vrot.slane %v1074, 6
        %v1356 = vrot.slane %v1100, 5
        %v1357 = vrot.slane %v1126, 4
        %v1358 = vrot.slane %v1152, 3
        %v1359 = vrot.slane %v1178, 2
        %v1360 = vrot.slane %v1204, 1
        %v1361 = vrot.slane %v427, 7
        %v1362 = vrot.slane %v453, 6
        %v1363 = vrot.slane %v479, 5
        %v1364 = vrot.slane %v505, 4
        %v1365 = vrot.slane %v531, 3
        %v1366 = vrot.slane %v557, 2
        %v1367 = vrot.slane %v583, 1
        %v1368 = vrot.slane %v635, 7
        %v1369 = vrot.slane %v661, 6
        %v1370 = vrot.slane %v687, 5
        %v1371 = vrot.slane %v713, 4
        %v1372 = vrot.slane %v739, 3
        %v1373 = vrot.slane %v765, 2
        %v1374 = vrot.slane %v791, 1
        %v1375 = vrot.slane %v843, 7
        %v1376 = vrot.slane %v869, 6
        %v1377 = vrot.slane %v895, 5
        %v1378 = vrot.slane %v921, 4
        %v1379 = vrot.slane %v947, 3
        %v1380 = vrot.slane %v973, 2
        %v1381 = vrot.slane %v999, 1
        %v1382 = vrot.slane %v1051, 7
        %v1383 = vrot.slane %v1077, 6
        %v1384 = vrot.slane %v1103, 5
        %v1385 = vrot.slane %v1129, 4
        %v1386 = vrot.slane %v1155, 3
        %v1387 = vrot.slane %v1181, 2
        %v1388 = vrot.slane %v1207, 1
        %vm1389 = vcmask 1040384
        %v1390 = vsel %vm1389, %v395, %v1305
        %vm1391 = vcmask 1042434
        %v1392 = vsel %vm1391, %v1306, %v1307
        %vm1393 = vcmask 1041408
        %v1394 = vsel %vm1393, %v1390, %v1392
        %vm1395 = vcmask 1044484
        %v1396 = vsel %vm1395, %v1308, %v1309
        %vm1397 = vcmask 1046534
        %v1398 = vsel %vm1397, %v1310, %v1311
        %vm1399 = vcmask 1045508
        %v1400 = vsel %vm1399, %v1396, %v1398
        %v1401 = vsel %vm312, %v1394, %v1400
        %v1402 = vsel %vm1389, %v603, %v1312
        %v1403 = vsel %vm1391, %v1313, %v1314
        %v1404 = vsel %vm1393, %v1402, %v1403
        %v1405 = vsel %vm1395, %v1315, %v1316
        %v1406 = vsel %vm1397, %v1317, %v1318
        %v1407 = vsel %vm1399, %v1405, %v1406
        %v1408 = vsel %vm312, %v1404, %v1407
        %v1409 = vsel %vm1389, %v811, %v1319
        %v1410 = vsel %vm1391, %v1320, %v1321
        %v1411 = vsel %vm1393, %v1409, %v1410
        %v1412 = vsel %vm1395, %v1322, %v1323
        %v1413 = vsel %vm1397, %v1324, %v1325
        %v1414 = vsel %vm1399, %v1412, %v1413
        %v1415 = vsel %vm312, %v1411, %v1414
        %v1416 = vsel %vm1389, %v1019, %v1326
        %v1417 = vsel %vm1391, %v1327, %v1328
        %v1418 = vsel %vm1393, %v1416, %v1417
        %v1419 = vsel %vm1395, %v1329, %v1330
        %v1420 = vsel %vm1397, %v1331, %v1332
        %v1421 = vsel %vm1399, %v1419, %v1420
        %v1422 = vsel %vm312, %v1418, %v1421
        %vm1423 = vcmask 1041409
        %v1424 = vsel %vm1423, %v395, %v1305
        %vm1425 = vcmask 1043459
        %v1426 = vsel %vm1425, %v1306, %v1307
        %vm1427 = vcmask 1042433
        %v1428 = vsel %vm1427, %v1424, %v1426
        %vm1429 = vcmask 1045509
        %v1430 = vsel %vm1429, %v1308, %v1309
        %vm1431 = vcmask 1046528
        %v1432 = vsel %vm1431, %v1311, %v1310
        %vm1433 = vcmask 1046533
        %v1434 = vsel %vm1433, %v1430, %v1432
        %vm1435 = vcmask 1044481
        %v1436 = vsel %vm1435, %v1428, %v1434
        %v1437 = vrot.slane %v1436, 1
        %v1438 = vsel %vm1423, %v603, %v1312
        %v1439 = vsel %vm1425, %v1313, %v1314
        %v1440 = vsel %vm1427, %v1438, %v1439
        %v1441 = vsel %vm1429, %v1315, %v1316
        %v1442 = vsel %vm1431, %v1318, %v1317
        %v1443 = vsel %vm1433, %v1441, %v1442
        %v1444 = vsel %vm1435, %v1440, %v1443
        %v1445 = vrot.slane %v1444, 1
        %v1446 = vsel %vm1423, %v811, %v1319
        %v1447 = vsel %vm1425, %v1320, %v1321
        %v1448 = vsel %vm1427, %v1446, %v1447
        %v1449 = vsel %vm1429, %v1322, %v1323
        %v1450 = vsel %vm1431, %v1325, %v1324
        %v1451 = vsel %vm1433, %v1449, %v1450
        %v1452 = vsel %vm1435, %v1448, %v1451
        %v1453 = vrot.slane %v1452, 1
        %v1454 = vsel %vm1423, %v1019, %v1326
        %v1455 = vsel %vm1425, %v1327, %v1328
        %v1456 = vsel %vm1427, %v1454, %v1455
        %v1457 = vsel %vm1429, %v1329, %v1330
        %v1458 = vsel %vm1431, %v1332, %v1331
        %v1459 = vsel %vm1433, %v1457, %v1458
        %v1460 = vsel %vm1435, %v1456, %v1459
        %v1461 = vrot.slane %v1460, 1
        %v1462 = vsel %vm1391, %v395, %v1305
        %v1463 = vsel %vm1395, %v1306, %v1307
        %vm1464 = vcmask 1043458
        %v1465 = vsel %vm1464, %v1462, %v1463
        %v1466 = vsel %vm1397, %v1308, %v1309
        %v1467 = vsel %vm1389, %v1310, %v1311
        %vm1468 = vcmask 1045504
        %v1469 = vsel %vm1468, %v1467, %v1466
        %vm1470 = vcmask 1045506
        %v1471 = vsel %vm1470, %v1465, %v1469
        %v1472 = vrot.slane %v1471, 2
        %v1473 = vsel %vm1391, %v603, %v1312
        %v1474 = vsel %vm1395, %v1313, %v1314
        %v1475 = vsel %vm1464, %v1473, %v1474
        %v1476 = vsel %vm1397, %v1315, %v1316
        %v1477 = vsel %vm1389, %v1317, %v1318
        %v1478 = vsel %vm1468, %v1477, %v1476
        %v1479 = vsel %vm1470, %v1475, %v1478
        %v1480 = vrot.slane %v1479, 2
        %v1481 = vsel %vm1391, %v811, %v1319
        %v1482 = vsel %vm1395, %v1320, %v1321
        %v1483 = vsel %vm1464, %v1481, %v1482
        %v1484 = vsel %vm1397, %v1322, %v1323
        %v1485 = vsel %vm1389, %v1324, %v1325
        %v1486 = vsel %vm1468, %v1485, %v1484
        %v1487 = vsel %vm1470, %v1483, %v1486
        %v1488 = vrot.slane %v1487, 2
        %v1489 = vsel %vm1391, %v1019, %v1326
        %v1490 = vsel %vm1395, %v1327, %v1328
        %v1491 = vsel %vm1464, %v1489, %v1490
        %v1492 = vsel %vm1397, %v1329, %v1330
        %v1493 = vsel %vm1389, %v1331, %v1332
        %v1494 = vsel %vm1468, %v1493, %v1492
        %v1495 = vsel %vm1470, %v1491, %v1494
        %v1496 = vrot.slane %v1495, 2
        %v1497 = vsel %vm1425, %v395, %v1305
        %v1498 = vsel %vm1429, %v1306, %v1307
        %vm1499 = vcmask 1044483
        %v1500 = vsel %vm1499, %v1497, %v1498
        %v1501 = vsel %vm1431, %v1309, %v1308
        %v1502 = vsel %vm1423, %v1310, %v1311
        %vm1503 = vcmask 1046529
        %v1504 = vsel %vm1503, %v1502, %v1501
        %vm1505 = vcmask 1046531
        %v1506 = vsel %vm1505, %v1500, %v1504
        %v1507 = vrot.slane %v1506, 3
        %v1508 = vsel %vm1425, %v603, %v1312
        %v1509 = vsel %vm1429, %v1313, %v1314
        %v1510 = vsel %vm1499, %v1508, %v1509
        %v1511 = vsel %vm1431, %v1316, %v1315
        %v1512 = vsel %vm1423, %v1317, %v1318
        %v1513 = vsel %vm1503, %v1512, %v1511
        %v1514 = vsel %vm1505, %v1510, %v1513
        %v1515 = vrot.slane %v1514, 3
        %v1516 = vsel %vm1425, %v811, %v1319
        %v1517 = vsel %vm1429, %v1320, %v1321
        %v1518 = vsel %vm1499, %v1516, %v1517
        %v1519 = vsel %vm1431, %v1323, %v1322
        %v1520 = vsel %vm1423, %v1324, %v1325
        %v1521 = vsel %vm1503, %v1520, %v1519
        %v1522 = vsel %vm1505, %v1518, %v1521
        %v1523 = vrot.slane %v1522, 3
        %v1524 = vsel %vm1425, %v1019, %v1326
        %v1525 = vsel %vm1429, %v1327, %v1328
        %v1526 = vsel %vm1499, %v1524, %v1525
        %v1527 = vsel %vm1431, %v1330, %v1329
        %v1528 = vsel %vm1423, %v1331, %v1332
        %v1529 = vsel %vm1503, %v1528, %v1527
        %v1530 = vsel %vm1505, %v1526, %v1529
        %v1531 = vrot.slane %v1530, 3
        %v1532 = vsel %vm1395, %v395, %v1305
        %v1533 = vsel %vm1397, %v1306, %v1307
        %v1534 = vsel %vm1399, %v1532, %v1533
        %v1535 = vsel %vm1389, %v1308, %v1309
        %v1536 = vsel %vm1391, %v1310, %v1311
        %v1537 = vsel %vm1393, %v1535, %v1536
        %v1538 = vsel %vm312, %v1537, %v1534
        %v1539 = vrot.slane %v1538, 4
        %v1540 = vsel %vm1395, %v603, %v1312
        %v1541 = vsel %vm1397, %v1313, %v1314
        %v1542 = vsel %vm1399, %v1540, %v1541
        %v1543 = vsel %vm1389, %v1315, %v1316
        %v1544 = vsel %vm1391, %v1317, %v1318
        %v1545 = vsel %vm1393, %v1543, %v1544
        %v1546 = vsel %vm312, %v1545, %v1542
        %v1547 = vrot.slane %v1546, 4
        %v1548 = vsel %vm1395, %v811, %v1319
        %v1549 = vsel %vm1397, %v1320, %v1321
        %v1550 = vsel %vm1399, %v1548, %v1549
        %v1551 = vsel %vm1389, %v1322, %v1323
        %v1552 = vsel %vm1391, %v1324, %v1325
        %v1553 = vsel %vm1393, %v1551, %v1552
        %v1554 = vsel %vm312, %v1553, %v1550
        %v1555 = vrot.slane %v1554, 4
        %v1556 = vsel %vm1395, %v1019, %v1326
        %v1557 = vsel %vm1397, %v1327, %v1328
        %v1558 = vsel %vm1399, %v1556, %v1557
        %v1559 = vsel %vm1389, %v1329, %v1330
        %v1560 = vsel %vm1391, %v1331, %v1332
        %v1561 = vsel %vm1393, %v1559, %v1560
        %v1562 = vsel %vm312, %v1561, %v1558
        %v1563 = vrot.slane %v1562, 4
        %v1564 = vsel %vm1429, %v395, %v1305
        %v1565 = vsel %vm1431, %v1307, %v1306
        %v1566 = vsel %vm1433, %v1564, %v1565
        %v1567 = vsel %vm1423, %v1308, %v1309
        %v1568 = vsel %vm1425, %v1310, %v1311
        %v1569 = vsel %vm1427, %v1567, %v1568
        %v1570 = vsel %vm1435, %v1569, %v1566
        %v1571 = vrot.slane %v1570, 5
        %v1572 = vsel %vm1429, %v603, %v1312
        %v1573 = vsel %vm1431, %v1314, %v1313
        %v1574 = vsel %vm1433, %v1572, %v1573
        %v1575 = vsel %vm1423, %v1315, %v1316
        %v1576 = vsel %vm1425, %v1317, %v1318
        %v1577 = vsel %vm1427, %v1575, %v1576
        %v1578 = vsel %vm1435, %v1577, %v1574
        %v1579 = vrot.slane %v1578, 5
        %v1580 = vsel %vm1429, %v811, %v1319
        %v1581 = vsel %vm1431, %v1321, %v1320
        %v1582 = vsel %vm1433, %v1580, %v1581
        %v1583 = vsel %vm1423, %v1322, %v1323
        %v1584 = vsel %vm1425, %v1324, %v1325
        %v1585 = vsel %vm1427, %v1583, %v1584
        %v1586 = vsel %vm1435, %v1585, %v1582
        %v1587 = vrot.slane %v1586, 5
        %v1588 = vsel %vm1429, %v1019, %v1326
        %v1589 = vsel %vm1431, %v1328, %v1327
        %v1590 = vsel %vm1433, %v1588, %v1589
        %v1591 = vsel %vm1423, %v1329, %v1330
        %v1592 = vsel %vm1425, %v1331, %v1332
        %v1593 = vsel %vm1427, %v1591, %v1592
        %v1594 = vsel %vm1435, %v1593, %v1590
        %v1595 = vrot.slane %v1594, 5
        %v1596 = vsel %vm1397, %v395, %v1305
        %v1597 = vsel %vm1389, %v1306, %v1307
        %v1598 = vsel %vm1468, %v1597, %v1596
        %v1599 = vsel %vm1391, %v1308, %v1309
        %v1600 = vsel %vm1395, %v1310, %v1311
        %v1601 = vsel %vm1464, %v1599, %v1600
        %v1602 = vsel %vm1470, %v1601, %v1598
        %v1603 = vrot.slane %v1602, 6
        %v1604 = vsel %vm1397, %v603, %v1312
        %v1605 = vsel %vm1389, %v1313, %v1314
        %v1606 = vsel %vm1468, %v1605, %v1604
        %v1607 = vsel %vm1391, %v1315, %v1316
        %v1608 = vsel %vm1395, %v1317, %v1318
        %v1609 = vsel %vm1464, %v1607, %v1608
        %v1610 = vsel %vm1470, %v1609, %v1606
        %v1611 = vrot.slane %v1610, 6
        %v1612 = vsel %vm1397, %v811, %v1319
        %v1613 = vsel %vm1389, %v1320, %v1321
        %v1614 = vsel %vm1468, %v1613, %v1612
        %v1615 = vsel %vm1391, %v1322, %v1323
        %v1616 = vsel %vm1395, %v1324, %v1325
        %v1617 = vsel %vm1464, %v1615, %v1616
        %v1618 = vsel %vm1470, %v1617, %v1614
        %v1619 = vrot.slane %v1618, 6
        %v1620 = vsel %vm1397, %v1019, %v1326
        %v1621 = vsel %vm1389, %v1327, %v1328
        %v1622 = vsel %vm1468, %v1621, %v1620
        %v1623 = vsel %vm1391, %v1329, %v1330
        %v1624 = vsel %vm1395, %v1331, %v1332
        %v1625 = vsel %vm1464, %v1623, %v1624
        %v1626 = vsel %vm1470, %v1625, %v1622
        %v1627 = vrot.slane %v1626, 6
        %v1628 = vsel %vm1431, %v1305, %v395
        %v1629 = vsel %vm1423, %v1306, %v1307
        %v1630 = vsel %vm1503, %v1629, %v1628
        %v1631 = vsel %vm1425, %v1308, %v1309
        %v1632 = vsel %vm1429, %v1310, %v1311
        %v1633 = vsel %vm1499, %v1631, %v1632
        %v1634 = vsel %vm1505, %v1633, %v1630
        %v1635 = vrot.slane %v1634, 7
        %v1636 = vsel %vm1431, %v1312, %v603
        %v1637 = vsel %vm1423, %v1313, %v1314
        %v1638 = vsel %vm1503, %v1637, %v1636
        %v1639 = vsel %vm1425, %v1315, %v1316
        %v1640 = vsel %vm1429, %v1317, %v1318
        %v1641 = vsel %vm1499, %v1639, %v1640
        %v1642 = vsel %vm1505, %v1641, %v1638
        %v1643 = vrot.slane %v1642, 7
        %v1644 = vsel %vm1431, %v1319, %v811
        %v1645 = vsel %vm1423, %v1320, %v1321
        %v1646 = vsel %vm1503, %v1645, %v1644
        %v1647 = vsel %vm1425, %v1322, %v1323
        %v1648 = vsel %vm1429, %v1324, %v1325
        %v1649 = vsel %vm1499, %v1647, %v1648
        %v1650 = vsel %vm1505, %v1649, %v1646
        %v1651 = vrot.slane %v1650, 7
        %v1652 = vsel %vm1431, %v1326, %v1019
        %v1653 = vsel %vm1423, %v1327, %v1328
        %v1654 = vsel %vm1503, %v1653, %v1652
        %v1655 = vsel %vm1425, %v1329, %v1330
        %v1656 = vsel %vm1429, %v1331, %v1332
        %v1657 = vsel %vm1499, %v1655, %v1656
        %v1658 = vsel %vm1505, %v1657, %v1654
        %v1659 = vrot.slane %v1658, 7
        %v1660 = vsel %vm1389, %v398, %v1333
        %v1661 = vsel %vm1391, %v1334, %v1335
        %v1662 = vsel %vm1393, %v1660, %v1661
        %v1663 = vsel %vm1395, %v1336, %v1337
        %v1664 = vsel %vm1397, %v1338, %v1339
        %v1665 = vsel %vm1399, %v1663, %v1664
        %v1666 = vsel %vm312, %v1662, %v1665
        %v1667 = vsel %vm1389, %v606, %v1340
        %v1668 = vsel %vm1391, %v1341, %v1342
        %v1669 = vsel %vm1393, %v1667, %v1668
        %v1670 = vsel %vm1395, %v1343, %v1344
        %v1671 = vsel %vm1397, %v1345, %v1346
        %v1672 = vsel %vm1399, %v1670, %v1671
        %v1673 = vsel %vm312, %v1669, %v1672
        %v1674 = vsel %vm1389, %v814, %v1347
        %v1675 = vsel %vm1391, %v1348, %v1349
        %v1676 = vsel %vm1393, %v1674, %v1675
        %v1677 = vsel %vm1395, %v1350, %v1351
        %v1678 = vsel %vm1397, %v1352, %v1353
        %v1679 = vsel %vm1399, %v1677, %v1678
        %v1680 = vsel %vm312, %v1676, %v1679
        %v1681 = vsel %vm1389, %v1022, %v1354
        %v1682 = vsel %vm1391, %v1355, %v1356
        %v1683 = vsel %vm1393, %v1681, %v1682
        %v1684 = vsel %vm1395, %v1357, %v1358
        %v1685 = vsel %vm1397, %v1359, %v1360
        %v1686 = vsel %vm1399, %v1684, %v1685
        %v1687 = vsel %vm312, %v1683, %v1686
        %v1688 = vsel %vm1423, %v398, %v1333
        %v1689 = vsel %vm1425, %v1334, %v1335
        %v1690 = vsel %vm1427, %v1688, %v1689
        %v1691 = vsel %vm1429, %v1336, %v1337
        %v1692 = vsel %vm1431, %v1339, %v1338
        %v1693 = vsel %vm1433, %v1691, %v1692
        %v1694 = vsel %vm1435, %v1690, %v1693
        %v1695 = vrot.slane %v1694, 1
        %v1696 = vsel %vm1423, %v606, %v1340
        %v1697 = vsel %vm1425, %v1341, %v1342
        %v1698 = vsel %vm1427, %v1696, %v1697
        %v1699 = vsel %vm1429, %v1343, %v1344
        %v1700 = vsel %vm1431, %v1346, %v1345
        %v1701 = vsel %vm1433, %v1699, %v1700
        %v1702 = vsel %vm1435, %v1698, %v1701
        %v1703 = vrot.slane %v1702, 1
        %v1704 = vsel %vm1423, %v814, %v1347
        %v1705 = vsel %vm1425, %v1348, %v1349
        %v1706 = vsel %vm1427, %v1704, %v1705
        %v1707 = vsel %vm1429, %v1350, %v1351
        %v1708 = vsel %vm1431, %v1353, %v1352
        %v1709 = vsel %vm1433, %v1707, %v1708
        %v1710 = vsel %vm1435, %v1706, %v1709
        %v1711 = vrot.slane %v1710, 1
        %v1712 = vsel %vm1423, %v1022, %v1354
        %v1713 = vsel %vm1425, %v1355, %v1356
        %v1714 = vsel %vm1427, %v1712, %v1713
        %v1715 = vsel %vm1429, %v1357, %v1358
        %v1716 = vsel %vm1431, %v1360, %v1359
        %v1717 = vsel %vm1433, %v1715, %v1716
        %v1718 = vsel %vm1435, %v1714, %v1717
        %v1719 = vrot.slane %v1718, 1
        %v1720 = vsel %vm1391, %v398, %v1333
        %v1721 = vsel %vm1395, %v1334, %v1335
        %v1722 = vsel %vm1464, %v1720, %v1721
        %v1723 = vsel %vm1397, %v1336, %v1337
        %v1724 = vsel %vm1389, %v1338, %v1339
        %v1725 = vsel %vm1468, %v1724, %v1723
        %v1726 = vsel %vm1470, %v1722, %v1725
        %v1727 = vrot.slane %v1726, 2
        %v1728 = vsel %vm1391, %v606, %v1340
        %v1729 = vsel %vm1395, %v1341, %v1342
        %v1730 = vsel %vm1464, %v1728, %v1729
        %v1731 = vsel %vm1397, %v1343, %v1344
        %v1732 = vsel %vm1389, %v1345, %v1346
        %v1733 = vsel %vm1468, %v1732, %v1731
        %v1734 = vsel %vm1470, %v1730, %v1733
        %v1735 = vrot.slane %v1734, 2
        %v1736 = vsel %vm1391, %v814, %v1347
        %v1737 = vsel %vm1395, %v1348, %v1349
        %v1738 = vsel %vm1464, %v1736, %v1737
        %v1739 = vsel %vm1397, %v1350, %v1351
        %v1740 = vsel %vm1389, %v1352, %v1353
        %v1741 = vsel %vm1468, %v1740, %v1739
        %v1742 = vsel %vm1470, %v1738, %v1741
        %v1743 = vrot.slane %v1742, 2
        %v1744 = vsel %vm1391, %v1022, %v1354
        %v1745 = vsel %vm1395, %v1355, %v1356
        %v1746 = vsel %vm1464, %v1744, %v1745
        %v1747 = vsel %vm1397, %v1357, %v1358
        %v1748 = vsel %vm1389, %v1359, %v1360
        %v1749 = vsel %vm1468, %v1748, %v1747
        %v1750 = vsel %vm1470, %v1746, %v1749
        %v1751 = vrot.slane %v1750, 2
        %v1752 = vsel %vm1425, %v398, %v1333
        %v1753 = vsel %vm1429, %v1334, %v1335
        %v1754 = vsel %vm1499, %v1752, %v1753
        %v1755 = vsel %vm1431, %v1337, %v1336
        %v1756 = vsel %vm1423, %v1338, %v1339
        %v1757 = vsel %vm1503, %v1756, %v1755
        %v1758 = vsel %vm1505, %v1754, %v1757
        %v1759 = vrot.slane %v1758, 3
        %v1760 = vsel %vm1425, %v606, %v1340
        %v1761 = vsel %vm1429, %v1341, %v1342
        %v1762 = vsel %vm1499, %v1760, %v1761
        %v1763 = vsel %vm1431, %v1344, %v1343
        %v1764 = vsel %vm1423, %v1345, %v1346
        %v1765 = vsel %vm1503, %v1764, %v1763
        %v1766 = vsel %vm1505, %v1762, %v1765
        %v1767 = vrot.slane %v1766, 3
        %v1768 = vsel %vm1425, %v814, %v1347
        %v1769 = vsel %vm1429, %v1348, %v1349
        %v1770 = vsel %vm1499, %v1768, %v1769
        %v1771 = vsel %vm1431, %v1351, %v1350
        %v1772 = vsel %vm1423, %v1352, %v1353
        %v1773 = vsel %vm1503, %v1772, %v1771
        %v1774 = vsel %vm1505, %v1770, %v1773
        %v1775 = vrot.slane %v1774, 3
        %v1776 = vsel %vm1425, %v1022, %v1354
        %v1777 = vsel %vm1429, %v1355, %v1356
        %v1778 = vsel %vm1499, %v1776, %v1777
        %v1779 = vsel %vm1431, %v1358, %v1357
        %v1780 = vsel %vm1423, %v1359, %v1360
        %v1781 = vsel %vm1503, %v1780, %v1779
        %v1782 = vsel %vm1505, %v1778, %v1781
        %v1783 = vrot.slane %v1782, 3
        %v1784 = vsel %vm1395, %v398, %v1333
        %v1785 = vsel %vm1397, %v1334, %v1335
        %v1786 = vsel %vm1399, %v1784, %v1785
        %v1787 = vsel %vm1389, %v1336, %v1337
        %v1788 = vsel %vm1391, %v1338, %v1339
        %v1789 = vsel %vm1393, %v1787, %v1788
        %v1790 = vsel %vm312, %v1789, %v1786
        %v1791 = vrot.slane %v1790, 4
        %v1792 = vsel %vm1395, %v606, %v1340
        %v1793 = vsel %vm1397, %v1341, %v1342
        %v1794 = vsel %vm1399, %v1792, %v1793
        %v1795 = vsel %vm1389, %v1343, %v1344
        %v1796 = vsel %vm1391, %v1345, %v1346
        %v1797 = vsel %vm1393, %v1795, %v1796
        %v1798 = vsel %vm312, %v1797, %v1794
        %v1799 = vrot.slane %v1798, 4
        %v1800 = vsel %vm1395, %v814, %v1347
        %v1801 = vsel %vm1397, %v1348, %v1349
        %v1802 = vsel %vm1399, %v1800, %v1801
        %v1803 = vsel %vm1389, %v1350, %v1351
        %v1804 = vsel %vm1391, %v1352, %v1353
        %v1805 = vsel %vm1393, %v1803, %v1804
        %v1806 = vsel %vm312, %v1805, %v1802
        %v1807 = vrot.slane %v1806, 4
        %v1808 = vsel %vm1395, %v1022, %v1354
        %v1809 = vsel %vm1397, %v1355, %v1356
        %v1810 = vsel %vm1399, %v1808, %v1809
        %v1811 = vsel %vm1389, %v1357, %v1358
        %v1812 = vsel %vm1391, %v1359, %v1360
        %v1813 = vsel %vm1393, %v1811, %v1812
        %v1814 = vsel %vm312, %v1813, %v1810
        %v1815 = vrot.slane %v1814, 4
        %v1816 = vsel %vm1429, %v398, %v1333
        %v1817 = vsel %vm1431, %v1335, %v1334
        %v1818 = vsel %vm1433, %v1816, %v1817
        %v1819 = vsel %vm1423, %v1336, %v1337
        %v1820 = vsel %vm1425, %v1338, %v1339
        %v1821 = vsel %vm1427, %v1819, %v1820
        %v1822 = vsel %vm1435, %v1821, %v1818
        %v1823 = vrot.slane %v1822, 5
        %v1824 = vsel %vm1429, %v606, %v1340
        %v1825 = vsel %vm1431, %v1342, %v1341
        %v1826 = vsel %vm1433, %v1824, %v1825
        %v1827 = vsel %vm1423, %v1343, %v1344
        %v1828 = vsel %vm1425, %v1345, %v1346
        %v1829 = vsel %vm1427, %v1827, %v1828
        %v1830 = vsel %vm1435, %v1829, %v1826
        %v1831 = vrot.slane %v1830, 5
        %v1832 = vsel %vm1429, %v814, %v1347
        %v1833 = vsel %vm1431, %v1349, %v1348
        %v1834 = vsel %vm1433, %v1832, %v1833
        %v1835 = vsel %vm1423, %v1350, %v1351
        %v1836 = vsel %vm1425, %v1352, %v1353
        %v1837 = vsel %vm1427, %v1835, %v1836
        %v1838 = vsel %vm1435, %v1837, %v1834
        %v1839 = vrot.slane %v1838, 5
        %v1840 = vsel %vm1429, %v1022, %v1354
        %v1841 = vsel %vm1431, %v1356, %v1355
        %v1842 = vsel %vm1433, %v1840, %v1841
        %v1843 = vsel %vm1423, %v1357, %v1358
        %v1844 = vsel %vm1425, %v1359, %v1360
        %v1845 = vsel %vm1427, %v1843, %v1844
        %v1846 = vsel %vm1435, %v1845, %v1842
        %v1847 = vrot.slane %v1846, 5
        %v1848 = vsel %vm1397, %v398, %v1333
        %v1849 = vsel %vm1389, %v1334, %v1335
        %v1850 = vsel %vm1468, %v1849, %v1848
        %v1851 = vsel %vm1391, %v1336, %v1337
        %v1852 = vsel %vm1395, %v1338, %v1339
        %v1853 = vsel %vm1464, %v1851, %v1852
        %v1854 = vsel %vm1470, %v1853, %v1850
        %v1855 = vrot.slane %v1854, 6
        %v1856 = vsel %vm1397, %v606, %v1340
        %v1857 = vsel %vm1389, %v1341, %v1342
        %v1858 = vsel %vm1468, %v1857, %v1856
        %v1859 = vsel %vm1391, %v1343, %v1344
        %v1860 = vsel %vm1395, %v1345, %v1346
        %v1861 = vsel %vm1464, %v1859, %v1860
        %v1862 = vsel %vm1470, %v1861, %v1858
        %v1863 = vrot.slane %v1862, 6
        %v1864 = vsel %vm1397, %v814, %v1347
        %v1865 = vsel %vm1389, %v1348, %v1349
        %v1866 = vsel %vm1468, %v1865, %v1864
        %v1867 = vsel %vm1391, %v1350, %v1351
        %v1868 = vsel %vm1395, %v1352, %v1353
        %v1869 = vsel %vm1464, %v1867, %v1868
        %v1870 = vsel %vm1470, %v1869, %v1866
        %v1871 = vrot.slane %v1870, 6
        %v1872 = vsel %vm1397, %v1022, %v1354
        %v1873 = vsel %vm1389, %v1355, %v1356
        %v1874 = vsel %vm1468, %v1873, %v1872
        %v1875 = vsel %vm1391, %v1357, %v1358
        %v1876 = vsel %vm1395, %v1359, %v1360
        %v1877 = vsel %vm1464, %v1875, %v1876
        %v1878 = vsel %vm1470, %v1877, %v1874
        %v1879 = vrot.slane %v1878, 6
        %v1880 = vsel %vm1431, %v1333, %v398
        %v1881 = vsel %vm1423, %v1334, %v1335
        %v1882 = vsel %vm1503, %v1881, %v1880
        %v1883 = vsel %vm1425, %v1336, %v1337
        %v1884 = vsel %vm1429, %v1338, %v1339
        %v1885 = vsel %vm1499, %v1883, %v1884
        %v1886 = vsel %vm1505, %v1885, %v1882
        %v1887 = vrot.slane %v1886, 7
        %v1888 = vsel %vm1431, %v1340, %v606
        %v1889 = vsel %vm1423, %v1341, %v1342
        %v1890 = vsel %vm1503, %v1889, %v1888
        %v1891 = vsel %vm1425, %v1343, %v1344
        %v1892 = vsel %vm1429, %v1345, %v1346
        %v1893 = vsel %vm1499, %v1891, %v1892
        %v1894 = vsel %vm1505, %v1893, %v1890
        %v1895 = vrot.slane %v1894, 7
        %v1896 = vsel %vm1431, %v1347, %v814
        %v1897 = vsel %vm1423, %v1348, %v1349
        %v1898 = vsel %vm1503, %v1897, %v1896
        %v1899 = vsel %vm1425, %v1350, %v1351
        %v1900 = vsel %vm1429, %v1352, %v1353
        %v1901 = vsel %vm1499, %v1899, %v1900
        %v1902 = vsel %vm1505, %v1901, %v1898
        %v1903 = vrot.slane %v1902, 7
        %v1904 = vsel %vm1431, %v1354, %v1022
        %v1905 = vsel %vm1423, %v1355, %v1356
        %v1906 = vsel %vm1503, %v1905, %v1904
        %v1907 = vsel %vm1425, %v1357, %v1358
        %v1908 = vsel %vm1429, %v1359, %v1360
        %v1909 = vsel %vm1499, %v1907, %v1908
        %v1910 = vsel %vm1505, %v1909, %v1906
        %v1911 = vrot.slane %v1910, 7
        %v1912 = vsel %vm1389, %v401, %v1361
        %v1913 = vsel %vm1391, %v1362, %v1363
        %v1914 = vsel %vm1393, %v1912, %v1913
        %v1915 = vsel %vm1395, %v1364, %v1365
        %v1916 = vsel %vm1397, %v1366, %v1367
        %v1917 = vsel %vm1399, %v1915, %v1916
        %v1918 = vsel %vm312, %v1914, %v1917
        %v1919 = vsel %vm1389, %v609, %v1368
        %v1920 = vsel %vm1391, %v1369, %v1370
        %v1921 = vsel %vm1393, %v1919, %v1920
        %v1922 = vsel %vm1395, %v1371, %v1372
        %v1923 = vsel %vm1397, %v1373, %v1374
        %v1924 = vsel %vm1399, %v1922, %v1923
        %v1925 = vsel %vm312, %v1921, %v1924
        %v1926 = vsel %vm1389, %v817, %v1375
        %v1927 = vsel %vm1391, %v1376, %v1377
        %v1928 = vsel %vm1393, %v1926, %v1927
        %v1929 = vsel %vm1395, %v1378, %v1379
        %v1930 = vsel %vm1397, %v1380, %v1381
        %v1931 = vsel %vm1399, %v1929, %v1930
        %v1932 = vsel %vm312, %v1928, %v1931
        %v1933 = vsel %vm1389, %v1025, %v1382
        %v1934 = vsel %vm1391, %v1383, %v1384
        %v1935 = vsel %vm1393, %v1933, %v1934
        %v1936 = vsel %vm1395, %v1385, %v1386
        %v1937 = vsel %vm1397, %v1387, %v1388
        %v1938 = vsel %vm1399, %v1936, %v1937
        %v1939 = vsel %vm312, %v1935, %v1938
        %v1940 = vsel %vm1423, %v401, %v1361
        %v1941 = vsel %vm1425, %v1362, %v1363
        %v1942 = vsel %vm1427, %v1940, %v1941
        %v1943 = vsel %vm1429, %v1364, %v1365
        %v1944 = vsel %vm1431, %v1367, %v1366
        %v1945 = vsel %vm1433, %v1943, %v1944
        %v1946 = vsel %vm1435, %v1942, %v1945
        %v1947 = vrot.slane %v1946, 1
        %v1948 = vsel %vm1423, %v609, %v1368
        %v1949 = vsel %vm1425, %v1369, %v1370
        %v1950 = vsel %vm1427, %v1948, %v1949
        %v1951 = vsel %vm1429, %v1371, %v1372
        %v1952 = vsel %vm1431, %v1374, %v1373
        %v1953 = vsel %vm1433, %v1951, %v1952
        %v1954 = vsel %vm1435, %v1950, %v1953
        %v1955 = vrot.slane %v1954, 1
        %v1956 = vsel %vm1423, %v817, %v1375
        %v1957 = vsel %vm1425, %v1376, %v1377
        %v1958 = vsel %vm1427, %v1956, %v1957
        %v1959 = vsel %vm1429, %v1378, %v1379
        %v1960 = vsel %vm1431, %v1381, %v1380
        %v1961 = vsel %vm1433, %v1959, %v1960
        %v1962 = vsel %vm1435, %v1958, %v1961
        %v1963 = vrot.slane %v1962, 1
        %v1964 = vsel %vm1423, %v1025, %v1382
        %v1965 = vsel %vm1425, %v1383, %v1384
        %v1966 = vsel %vm1427, %v1964, %v1965
        %v1967 = vsel %vm1429, %v1385, %v1386
        %v1968 = vsel %vm1431, %v1388, %v1387
        %v1969 = vsel %vm1433, %v1967, %v1968
        %v1970 = vsel %vm1435, %v1966, %v1969
        %v1971 = vrot.slane %v1970, 1
        %v1972 = vsel %vm1391, %v401, %v1361
        %v1973 = vsel %vm1395, %v1362, %v1363
        %v1974 = vsel %vm1464, %v1972, %v1973
        %v1975 = vsel %vm1397, %v1364, %v1365
        %v1976 = vsel %vm1389, %v1366, %v1367
        %v1977 = vsel %vm1468, %v1976, %v1975
        %v1978 = vsel %vm1470, %v1974, %v1977
        %v1979 = vrot.slane %v1978, 2
        %v1980 = vsel %vm1391, %v609, %v1368
        %v1981 = vsel %vm1395, %v1369, %v1370
        %v1982 = vsel %vm1464, %v1980, %v1981
        %v1983 = vsel %vm1397, %v1371, %v1372
        %v1984 = vsel %vm1389, %v1373, %v1374
        %v1985 = vsel %vm1468, %v1984, %v1983
        %v1986 = vsel %vm1470, %v1982, %v1985
        %v1987 = vrot.slane %v1986, 2
        %v1988 = vsel %vm1391, %v817, %v1375
        %v1989 = vsel %vm1395, %v1376, %v1377
        %v1990 = vsel %vm1464, %v1988, %v1989
        %v1991 = vsel %vm1397, %v1378, %v1379
        %v1992 = vsel %vm1389, %v1380, %v1381
        %v1993 = vsel %vm1468, %v1992, %v1991
        %v1994 = vsel %vm1470, %v1990, %v1993
        %v1995 = vrot.slane %v1994, 2
        %v1996 = vsel %vm1391, %v1025, %v1382
        %v1997 = vsel %vm1395, %v1383, %v1384
        %v1998 = vsel %vm1464, %v1996, %v1997
        %v1999 = vsel %vm1397, %v1385, %v1386
        %v2000 = vsel %vm1389, %v1387, %v1388
        %v2001 = vsel %vm1468, %v2000, %v1999
        %v2002 = vsel %vm1470, %v1998, %v2001
        %v2003 = vrot.slane %v2002, 2
        %v2004 = vsel %vm1425, %v401, %v1361
        %v2005 = vsel %vm1429, %v1362, %v1363
        %v2006 = vsel %vm1499, %v2004, %v2005
        %v2007 = vsel %vm1431, %v1365, %v1364
        %v2008 = vsel %vm1423, %v1366, %v1367
        %v2009 = vsel %vm1503, %v2008, %v2007
        %v2010 = vsel %vm1505, %v2006, %v2009
        %v2011 = vrot.slane %v2010, 3
        %v2012 = vsel %vm1425, %v609, %v1368
        %v2013 = vsel %vm1429, %v1369, %v1370
        %v2014 = vsel %vm1499, %v2012, %v2013
        %v2015 = vsel %vm1431, %v1372, %v1371
        %v2016 = vsel %vm1423, %v1373, %v1374
        %v2017 = vsel %vm1503, %v2016, %v2015
        %v2018 = vsel %vm1505, %v2014, %v2017
        %v2019 = vrot.slane %v2018, 3
        %v2020 = vsel %vm1425, %v817, %v1375
        %v2021 = vsel %vm1429, %v1376, %v1377
        %v2022 = vsel %vm1499, %v2020, %v2021
        %v2023 = vsel %vm1431, %v1379, %v1378
        %v2024 = vsel %vm1423, %v1380, %v1381
        %v2025 = vsel %vm1503, %v2024, %v2023
        %v2026 = vsel %vm1505, %v2022, %v2025
        %v2027 = vrot.slane %v2026, 3
        %v2028 = vsel %vm1425, %v1025, %v1382
        %v2029 = vsel %vm1429, %v1383, %v1384
        %v2030 = vsel %vm1499, %v2028, %v2029
        %v2031 = vsel %vm1431, %v1386, %v1385
        %v2032 = vsel %vm1423, %v1387, %v1388
        %v2033 = vsel %vm1503, %v2032, %v2031
        %v2034 = vsel %vm1505, %v2030, %v2033
        %v2035 = vrot.slane %v2034, 3
        %v2036 = vsel %vm1395, %v401, %v1361
        %v2037 = vsel %vm1397, %v1362, %v1363
        %v2038 = vsel %vm1399, %v2036, %v2037
        %v2039 = vsel %vm1389, %v1364, %v1365
        %v2040 = vsel %vm1391, %v1366, %v1367
        %v2041 = vsel %vm1393, %v2039, %v2040
        %v2042 = vsel %vm312, %v2041, %v2038
        %v2043 = vrot.slane %v2042, 4
        %v2044 = vsel %vm1395, %v609, %v1368
        %v2045 = vsel %vm1397, %v1369, %v1370
        %v2046 = vsel %vm1399, %v2044, %v2045
        %v2047 = vsel %vm1389, %v1371, %v1372
        %v2048 = vsel %vm1391, %v1373, %v1374
        %v2049 = vsel %vm1393, %v2047, %v2048
        %v2050 = vsel %vm312, %v2049, %v2046
        %v2051 = vrot.slane %v2050, 4
        %v2052 = vsel %vm1395, %v817, %v1375
        %v2053 = vsel %vm1397, %v1376, %v1377
        %v2054 = vsel %vm1399, %v2052, %v2053
        %v2055 = vsel %vm1389, %v1378, %v1379
        %v2056 = vsel %vm1391, %v1380, %v1381
        %v2057 = vsel %vm1393, %v2055, %v2056
        %v2058 = vsel %vm312, %v2057, %v2054
        %v2059 = vrot.slane %v2058, 4
        %v2060 = vsel %vm1395, %v1025, %v1382
        %v2061 = vsel %vm1397, %v1383, %v1384
        %v2062 = vsel %vm1399, %v2060, %v2061
        %v2063 = vsel %vm1389, %v1385, %v1386
        %v2064 = vsel %vm1391, %v1387, %v1388
        %v2065 = vsel %vm1393, %v2063, %v2064
        %v2066 = vsel %vm312, %v2065, %v2062
        %v2067 = vrot.slane %v2066, 4
        %v2068 = vsel %vm1429, %v401, %v1361
        %v2069 = vsel %vm1431, %v1363, %v1362
        %v2070 = vsel %vm1433, %v2068, %v2069
        %v2071 = vsel %vm1423, %v1364, %v1365
        %v2072 = vsel %vm1425, %v1366, %v1367
        %v2073 = vsel %vm1427, %v2071, %v2072
        %v2074 = vsel %vm1435, %v2073, %v2070
        %v2075 = vrot.slane %v2074, 5
        %v2076 = vsel %vm1429, %v609, %v1368
        %v2077 = vsel %vm1431, %v1370, %v1369
        %v2078 = vsel %vm1433, %v2076, %v2077
        %v2079 = vsel %vm1423, %v1371, %v1372
        %v2080 = vsel %vm1425, %v1373, %v1374
        %v2081 = vsel %vm1427, %v2079, %v2080
        %v2082 = vsel %vm1435, %v2081, %v2078
        %v2083 = vrot.slane %v2082, 5
        %v2084 = vsel %vm1429, %v817, %v1375
        %v2085 = vsel %vm1431, %v1377, %v1376
        %v2086 = vsel %vm1433, %v2084, %v2085
        %v2087 = vsel %vm1423, %v1378, %v1379
        %v2088 = vsel %vm1425, %v1380, %v1381
        %v2089 = vsel %vm1427, %v2087, %v2088
        %v2090 = vsel %vm1435, %v2089, %v2086
        %v2091 = vrot.slane %v2090, 5
        %v2092 = vsel %vm1429, %v1025, %v1382
        %v2093 = vsel %vm1431, %v1384, %v1383
        %v2094 = vsel %vm1433, %v2092, %v2093
        %v2095 = vsel %vm1423, %v1385, %v1386
        %v2096 = vsel %vm1425, %v1387, %v1388
        %v2097 = vsel %vm1427, %v2095, %v2096
        %v2098 = vsel %vm1435, %v2097, %v2094
        %v2099 = vrot.slane %v2098, 5
        %v2100 = vsel %vm1397, %v401, %v1361
        %v2101 = vsel %vm1389, %v1362, %v1363
        %v2102 = vsel %vm1468, %v2101, %v2100
        %v2103 = vsel %vm1391, %v1364, %v1365
        %v2104 = vsel %vm1395, %v1366, %v1367
        %v2105 = vsel %vm1464, %v2103, %v2104
        %v2106 = vsel %vm1470, %v2105, %v2102
        %v2107 = vrot.slane %v2106, 6
        %v2108 = vsel %vm1397, %v609, %v1368
        %v2109 = vsel %vm1389, %v1369, %v1370
        %v2110 = vsel %vm1468, %v2109, %v2108
        %v2111 = vsel %vm1391, %v1371, %v1372
        %v2112 = vsel %vm1395, %v1373, %v1374
        %v2113 = vsel %vm1464, %v2111, %v2112
        %v2114 = vsel %vm1470, %v2113, %v2110
        %v2115 = vrot.slane %v2114, 6
        %v2116 = vsel %vm1397, %v817, %v1375
        %v2117 = vsel %vm1389, %v1376, %v1377
        %v2118 = vsel %vm1468, %v2117, %v2116
        %v2119 = vsel %vm1391, %v1378, %v1379
        %v2120 = vsel %vm1395, %v1380, %v1381
        %v2121 = vsel %vm1464, %v2119, %v2120
        %v2122 = vsel %vm1470, %v2121, %v2118
        %v2123 = vrot.slane %v2122, 6
        %v2124 = vsel %vm1397, %v1025, %v1382
        %v2125 = vsel %vm1389, %v1383, %v1384
        %v2126 = vsel %vm1468, %v2125, %v2124
        %v2127 = vsel %vm1391, %v1385, %v1386
        %v2128 = vsel %vm1395, %v1387, %v1388
        %v2129 = vsel %vm1464, %v2127, %v2128
        %v2130 = vsel %vm1470, %v2129, %v2126
        %v2131 = vrot.slane %v2130, 6
        %v2132 = vsel %vm1431, %v1361, %v401
        %v2133 = vsel %vm1423, %v1362, %v1363
        %v2134 = vsel %vm1503, %v2133, %v2132
        %v2135 = vsel %vm1425, %v1364, %v1365
        %v2136 = vsel %vm1429, %v1366, %v1367
        %v2137 = vsel %vm1499, %v2135, %v2136
        %v2138 = vsel %vm1505, %v2137, %v2134
        %v2139 = vrot.slane %v2138, 7
        %v2140 = vsel %vm1431, %v1368, %v609
        %v2141 = vsel %vm1423, %v1369, %v1370
        %v2142 = vsel %vm1503, %v2141, %v2140
        %v2143 = vsel %vm1425, %v1371, %v1372
        %v2144 = vsel %vm1429, %v1373, %v1374
        %v2145 = vsel %vm1499, %v2143, %v2144
        %v2146 = vsel %vm1505, %v2145, %v2142
        %v2147 = vrot.slane %v2146, 7
        %v2148 = vsel %vm1431, %v1375, %v817
        %v2149 = vsel %vm1423, %v1376, %v1377
        %v2150 = vsel %vm1503, %v2149, %v2148
        %v2151 = vsel %vm1425, %v1378, %v1379
        %v2152 = vsel %vm1429, %v1380, %v1381
        %v2153 = vsel %vm1499, %v2151, %v2152
        %v2154 = vsel %vm1505, %v2153, %v2150
        %v2155 = vrot.slane %v2154, 7
        %v2156 = vsel %vm1431, %v1382, %v1025
        %v2157 = vsel %vm1423, %v1383, %v1384
        %v2158 = vsel %vm1503, %v2157, %v2156
        %v2159 = vsel %vm1425, %v1385, %v1386
        %v2160 = vsel %vm1429, %v1387, %v1388
        %v2161 = vsel %vm1499, %v2159, %v2160
        %v2162 = vsel %vm1505, %v2161, %v2158
        %v2163 = vrot.slane %v2162, 7
        %v2260 = vld [vmem:[%s1 + $0x18] sm:$0xff]
        %2261 = vst [vmem:[#allocation1] ss:$2 sm:$0xff] %v216
        %s2262 = scalar_lea.vmem [#allocation1], 16
        %2263 = vst [vmem:[%s2262] ss:$2 sm:$0xff] %v217
        %s2264 = scalar_lea.vmem [#allocation1], 32
        %2265 = vst [vmem:[%s2264] ss:$2 sm:$0xff] %v218
        %s2266 = scalar_lea.vmem [#allocation1], 48
        %2267 = vst [vmem:[%s2266] ss:$2 sm:$0xff] %v219
        %v2268 = vld.sshfl [vmem:[#allocation1] sm:$0xff pattern:$0x75316420]
        %v2269 = vld.sshfl [vmem:[#allocation1 + $0x8] sm:$0xff pattern:$0x75316420]
        %v2270 = vld.sshfl [vmem:[#allocation1 + $0x10] sm:$0xff pattern:$0x75316420]
        %v2271 = vld.sshfl [vmem:[#allocation1 + $0x18] sm:$0xff pattern:$0x75316420]
        %v2272 = vld.sshfl [vmem:[#allocation1 + $0x20] sm:$0xff pattern:$0x75316420]
        %v2273 = vld.sshfl [vmem:[#allocation1 + $0x28] sm:$0xff pattern:$0x75316420]
        %v2274 = vld.sshfl [vmem:[#allocation1 + $0x30] sm:$0xff pattern:$0x75316420]
        %v2275 = vld.sshfl [vmem:[#allocation1 + $0x38] sm:$0xff pattern:$0x75316420]
        %2276 = vst [vmem:[#allocation1] ss:$2 sm:$0xff] %v220
        %2277 = vst [vmem:[%s2262] ss:$2 sm:$0xff] %v221
        %2278 = vst [vmem:[%s2264] ss:$2 sm:$0xff] %v222
        %2279 = vst [vmem:[%s2266] ss:$2 sm:$0xff] %v223
        %v2280 = vld.sshfl [vmem:[#allocation1] sm:$0xff pattern:$0x75316420]
        %v2281 = vld.sshfl [vmem:[#allocation1 + $0x8] sm:$0xff pattern:$0x75316420]
        %v2282 = vld.sshfl [vmem:[#allocation1 + $0x10] sm:$0xff pattern:$0x75316420]
        %v2283 = vld.sshfl [vmem:[#allocation1 + $0x18] sm:$0xff pattern:$0x75316420]
        %v2284 = vld.sshfl [vmem:[#allocation1 + $0x20] sm:$0xff pattern:$0x75316420]
        %v2285 = vld.sshfl [vmem:[#allocation1 + $0x28] sm:$0xff pattern:$0x75316420]
        %v2286 = vld.sshfl [vmem:[#allocation1 + $0x30] sm:$0xff pattern:$0x75316420]
        %v2287 = vld.sshfl [vmem:[#allocation1 + $0x38] sm:$0xff pattern:$0x75316420]
        %2288 = vst [vmem:[#allocation1] ss:$2 sm:$0xff] %v224
        %2289 = vst [vmem:[%s2262] ss:$2 sm:$0xff] %v225
        %2290 = vst [vmem:[%s2264] ss:$2 sm:$0xff] %v226
        %2291 = vst [vmem:[%s2266] ss:$2 sm:$0xff] %v227
        %v2292 = vld.sshfl [vmem:[#allocation1] sm:$0xff pattern:$0x75316420]
        %v2293 = vld.sshfl [vmem:[#allocation1 + $0x8] sm:$0xff pattern:$0x75316420]
        %v2294 = vld.sshfl [vmem:[#allocation1 + $0x10] sm:$0xff pattern:$0x75316420]
        %v2295 = vld.sshfl [vmem:[#allocation1 + $0x18] sm:$0xff pattern:$0x75316420]
        %v2296 = vld.sshfl [vmem:[#allocation1 + $0x20] sm:$0xff pattern:$0x75316420]
        %v2297 = vld.sshfl [vmem:[#allocation1 + $0x28] sm:$0xff pattern:$0x75316420]
        %v2298 = vld.sshfl [vmem:[#allocation1 + $0x30] sm:$0xff pattern:$0x75316420]
        %v2299 = vld.sshfl [vmem:[#allocation1 + $0x38] sm:$0xff pattern:$0x75316420]
        %2300 = vst [vmem:[#allocation1] ss:$2 sm:$0xff] %v228
        %2301 = vst [vmem:[%s2262] ss:$2 sm:$0xff] %v229
        %2302 = vst [vmem:[%s2264] ss:$2 sm:$0xff] %v230
        %2303 = vst [vmem:[%s2266] ss:$2 sm:$0xff] %v231
        %v2304 = vld.sshfl [vmem:[#allocation1] sm:$0xff pattern:$0x75316420]
        %v2305 = vld.sshfl [vmem:[#allocation1 + $0x8] sm:$0xff pattern:$0x75316420]
        %v2306 = vld.sshfl [vmem:[#allocation1 + $0x10] sm:$0xff pattern:$0x75316420]
        %v2307 = vld.sshfl [vmem:[#allocation1 + $0x18] sm:$0xff pattern:$0x75316420]
        %v2308 = vld.sshfl [vmem:[#allocation1 + $0x20] sm:$0xff pattern:$0x75316420]
        %v2309 = vld.sshfl [vmem:[#allocation1 + $0x28] sm:$0xff pattern:$0x75316420]
        %v2310 = vld.sshfl [vmem:[#allocation1 + $0x30] sm:$0xff pattern:$0x75316420]
        %v2311 = vld.sshfl [vmem:[#allocation1 + $0x38] sm:$0xff pattern:$0x75316420]
        %v2313 = vsel %vm302, %v2260, 0
        %v2315 = vsel %vm312, %v2268, 0
        %v2317 = vsel %vm312, %v2269, 0
        %v2319 = vsel %vm312, %v2270, 0
        %v2321 = vsel %vm312, %v2271, 0
        %v2323 = vsel %vm312, %v2272, 0
        %v2325 = vsel %vm312, %v2273, 0
        %v2327 = vsel %vm312, %v2274, 0
        %v2329 = vsel %vm312, %v2275, 0
        %v2331 = vsel %vm312, %v2280, 0
        %v2333 = vsel %vm312, %v2281, 0
        %v2335 = vsel %vm312, %v2282, 0
        %v2337 = vsel %vm312, %v2283, 0
        %v2339 = vsel %vm312, %v2284, 0
        %v2341 = vsel %vm312, %v2285, 0
        %v2343 = vsel %vm312, %v2286, 0
        %v2345 = vsel %vm312, %v2287, 0
        %v2347 = vsel %vm312, %v2292, 0
        %v2349 = vsel %vm312, %v2293, 0
        %v2351 = vsel %vm312, %v2294, 0
        %v2353 = vsel %vm312, %v2295, 0
        %v2355 = vsel %vm312, %v2296, 0
        %v2357 = vsel %vm312, %v2297, 0
        %v2359 = vsel %vm312, %v2298, 0
        %v2361 = vsel %vm312, %v2299, 0
        %v2363 = vsel %vm312, %v2304, 0
        %v2365 = vsel %vm312, %v2305, 0
        %v2367 = vsel %vm312, %v2306, 0
        %v2369 = vsel %vm312, %v2307, 0
        %v2371 = vsel %vm312, %v2308, 0
        %v2373 = vsel %vm312, %v2309, 0
        %v2375 = vsel %vm312, %v2310, 0
        %v2377 = vsel %vm312, %v2311, 0
        %2379 = vmatpush.msra.mxu0 0.0
        %2380 = vmatpush.msra.mxu0 0.0
        %2381 = vmatpush.msra.mxu0 0.0
        %2382 = vmatpush.msra.mxu0 0.0
        %2383 = vmatpush.msra.mxu0 0.0
        %2384 = vmatpush.msra.mxu0 0.0
        %2385 = vmatpush.msra.mxu0 0.0
        %2386 = vmatpush.msra.mxu0 0.0
        %2387 = vmatpush.msra.mxu0 0.0
        %2388 = vmatpush.msra.mxu0 0.0
        %2389 = vmatpush.msra.mxu0 0.0
        %2390 = vmatpush.msra.mxu0 0.0
        %2391 = vmatpush.msra.mxu0 0.0
        %2392 = vmatpush.msra.mxu0 0.0
        %2393 = vmatpush.msra.mxu0 0.0
        %2394 = vmatpush.msra.mxu0 %v2315
        %2395 = vmatmul.f32.gmra.mxu0 %v2313
        %v2396 = vpop.f32.mrf.mxu0
        %v2397 = vadd.f32 0.0, %v2396
        %2398 = vdwg.mxu0
        %2399 = vmatpush.msra.mxu0 0.0
        %2400 = vmatpush.msra.mxu0 0.0
        %2401 = vmatpush.msra.mxu0 0.0
        %2402 = vmatpush.msra.mxu0 0.0
        %2403 = vmatpush.msra.mxu0 0.0
        %2404 = vmatpush.msra.mxu0 0.0
        %2405 = vmatpush.msra.mxu0 0.0
        %2406 = vmatpush.msra.mxu0 0.0
        %2407 = vmatpush.msra.mxu0 0.0
        %2408 = vmatpush.msra.mxu0 0.0
        %2409 = vmatpush.msra.mxu0 0.0
        %2410 = vmatpush.msra.mxu0 0.0
        %2411 = vmatpush.msra.mxu0 0.0
        %2412 = vmatpush.msra.mxu0 0.0
        %2413 = vmatpush.msra.mxu0 0.0
        %2414 = vmatpush.msra.mxu0 %v2317
        %2415 = vmatmul.f32.gmra.mxu0 %v2313
        %v2416 = vpop.f32.mrf.mxu0
        %v2417 = vadd.f32 0.0, %v2416
        %2418 = vdwg.mxu0
        %2419 = vmatpush.msra.mxu0 0.0
        %2420 = vmatpush.msra.mxu0 0.0
        %2421 = vmatpush.msra.mxu0 0.0
        %2422 = vmatpush.msra.mxu0 0.0
        %2423 = vmatpush.msra.mxu0 0.0
        %2424 = vmatpush.msra.mxu0 0.0
        %2425 = vmatpush.msra.mxu0 0.0
        %2426 = vmatpush.msra.mxu0 0.0
        %2427 = vmatpush.msra.mxu0 0.0
        %2428 = vmatpush.msra.mxu0 0.0
        %2429 = vmatpush.msra.mxu0 0.0
        %2430 = vmatpush.msra.mxu0 0.0
        %2431 = vmatpush.msra.mxu0 0.0
        %2432 = vmatpush.msra.mxu0 0.0
        %2433 = vmatpush.msra.mxu0 0.0
        %2434 = vmatpush.msra.mxu0 %v2319
        %2435 = vmatmul.f32.gmra.mxu0 %v2313
        %v2436 = vpop.f32.mrf.mxu0
        %v2437 = vadd.f32 0.0, %v2436
        %2438 = vdwg.mxu0
        %2439 = vmatpush.msra.mxu0 0.0
        %2440 = vmatpush.msra.mxu0 0.0
        %2441 = vmatpush.msra.mxu0 0.0
        %2442 = vmatpush.msra.mxu0 0.0
        %2443 = vmatpush.msra.mxu0 0.0
        %2444 = vmatpush.msra.mxu0 0.0
        %2445 = vmatpush.msra.mxu0 0.0
        %2446 = vmatpush.msra.mxu0 0.0
        %2447 = vmatpush.msra.mxu0 0.0
        %2448 = vmatpush.msra.mxu0 0.0
        %2449 = vmatpush.msra.mxu0 0.0
        %2450 = vmatpush.msra.mxu0 0.0
        %2451 = vmatpush.msra.mxu0 0.0
        %2452 = vmatpush.msra.mxu0 0.0
        %2453 = vmatpush.msra.mxu0 0.0
        %2454 = vmatpush.msra.mxu0 %v2321
        %2455 = vmatmul.f32.gmra.mxu0 %v2313
        %v2456 = vpop.f32.mrf.mxu0
        %v2457 = vadd.f32 0.0, %v2456
        %2458 = vdwg.mxu0
        %2459 = vmatpush.msra.mxu0 0.0
        %2460 = vmatpush.msra.mxu0 0.0
        %2461 = vmatpush.msra.mxu0 0.0
        %2462 = vmatpush.msra.mxu0 0.0
        %2463 = vmatpush.msra.mxu0 0.0
        %2464 = vmatpush.msra.mxu0 0.0
        %2465 = vmatpush.msra.mxu0 0.0
        %2466 = vmatpush.msra.mxu0 0.0
        %2467 = vmatpush.msra.mxu0 0.0
        %2468 = vmatpush.msra.mxu0 0.0
        %2469 = vmatpush.msra.mxu0 0.0
        %2470 = vmatpush.msra.mxu0 0.0
        %2471 = vmatpush.msra.mxu0 0.0
        %2472 = vmatpush.msra.mxu0 0.0
        %2473 = vmatpush.msra.mxu0 0.0
        %2474 = vmatpush.msra.mxu0 %v2323
        %2475 = vmatmul.f32.gmra.mxu0 %v2313
        %v2476 = vpop.f32.mrf.mxu0
        %v2477 = vadd.f32 0.0, %v2476
        %2478 = vdwg.mxu0
        %2479 = vmatpush.msra.mxu0 0.0
        %2480 = vmatpush.msra.mxu0 0.0
        %2481 = vmatpush.msra.mxu0 0.0
        %2482 = vmatpush.msra.mxu0 0.0
        %2483 = vmatpush.msra.mxu0 0.0
        %2484 = vmatpush.msra.mxu0 0.0
        %2485 = vmatpush.msra.mxu0 0.0
        %2486 = vmatpush.msra.mxu0 0.0
        %2487 = vmatpush.msra.mxu0 0.0
        %2488 = vmatpush.msra.mxu0 0.0
        %2489 = vmatpush.msra.mxu0 0.0
        %2490 = vmatpush.msra.mxu0 0.0
        %2491 = vmatpush.msra.mxu0 0.0
        %2492 = vmatpush.msra.mxu0 0.0
        %2493 = vmatpush.msra.mxu0 0.0
        %2494 = vmatpush.msra.mxu0 %v2325
        %2495 = vmatmul.f32.gmra.mxu0 %v2313
        %v2496 = vpop.f32.mrf.mxu0
        %v2497 = vadd.f32 0.0, %v2496
        %2498 = vdwg.mxu0
        %2499 = vmatpush.msra.mxu0 0.0
        %2500 = vmatpush.msra.mxu0 0.0
        %2501 = vmatpush.msra.mxu0 0.0
        %2502 = vmatpush.msra.mxu0 0.0
        %2503 = vmatpush.msra.mxu0 0.0
        %2504 = vmatpush.msra.mxu0 0.0
        %2505 = vmatpush.msra.mxu0 0.0
        %2506 = vmatpush.msra.mxu0 0.0
        %2507 = vmatpush.msra.mxu0 0.0
        %2508 = vmatpush.msra.mxu0 0.0
        %2509 = vmatpush.msra.mxu0 0.0
        %2510 = vmatpush.msra.mxu0 0.0
        %2511 = vmatpush.msra.mxu0 0.0
        %2512 = vmatpush.msra.mxu0 0.0
        %2513 = vmatpush.msra.mxu0 0.0
        %2514 = vmatpush.msra.mxu0 %v2327
        %2515 = vmatmul.f32.gmra.mxu0 %v2313
        %v2516 = vpop.f32.mrf.mxu0
        %v2517 = vadd.f32 0.0, %v2516
        %2518 = vdwg.mxu0
        %2519 = vmatpush.msra.mxu0 0.0
        %2520 = vmatpush.msra.mxu0 0.0
        %2521 = vmatpush.msra.mxu0 0.0
        %2522 = vmatpush.msra.mxu0 0.0
        %2523 = vmatpush.msra.mxu0 0.0
        %2524 = vmatpush.msra.mxu0 0.0
        %2525 = vmatpush.msra.mxu0 0.0
        %2526 = vmatpush.msra.mxu0 0.0
        %2527 = vmatpush.msra.mxu0 0.0
        %2528 = vmatpush.msra.mxu0 0.0
        %2529 = vmatpush.msra.mxu0 0.0
        %2530 = vmatpush.msra.mxu0 0.0
        %2531 = vmatpush.msra.mxu0 0.0
        %2532 = vmatpush.msra.mxu0 0.0
        %2533 = vmatpush.msra.mxu0 0.0
        %2534 = vmatpush.msra.mxu0 %v2329
        %2535 = vmatmul.f32.gmra.mxu0 %v2313
        %v2536 = vpop.f32.mrf.mxu0
        %v2537 = vadd.f32 0.0, %v2536
        %2538 = vdwg.mxu0
        %2539 = vmatpush.msra.mxu0 0.0
        %2540 = vmatpush.msra.mxu0 0.0
        %2541 = vmatpush.msra.mxu0 0.0
        %2542 = vmatpush.msra.mxu0 0.0
        %2543 = vmatpush.msra.mxu0 0.0
        %2544 = vmatpush.msra.mxu0 0.0
        %2545 = vmatpush.msra.mxu0 0.0
        %2546 = vmatpush.msra.mxu0 0.0
        %2547 = vmatpush.msra.mxu0 0.0
        %2548 = vmatpush.msra.mxu0 0.0
        %2549 = vmatpush.msra.mxu0 0.0
        %2550 = vmatpush.msra.mxu0 0.0
        %2551 = vmatpush.msra.mxu0 0.0
        %2552 = vmatpush.msra.mxu0 0.0
        %2553 = vmatpush.msra.mxu0 0.0
        %2554 = vmatpush.msra.mxu0 %v2331
        %2555 = vmatmul.f32.gmra.mxu0 %v2313
        %v2556 = vpop.f32.mrf.mxu0
        %v2557 = vadd.f32 0.0, %v2556
        %2558 = vdwg.mxu0
        %2559 = vmatpush.msra.mxu0 0.0
        %2560 = vmatpush.msra.mxu0 0.0
        %2561 = vmatpush.msra.mxu0 0.0
        %2562 = vmatpush.msra.mxu0 0.0
        %2563 = vmatpush.msra.mxu0 0.0
        %2564 = vmatpush.msra.mxu0 0.0
        %2565 = vmatpush.msra.mxu0 0.0
        %2566 = vmatpush.msra.mxu0 0.0
        %2567 = vmatpush.msra.mxu0 0.0
        %2568 = vmatpush.msra.mxu0 0.0
        %2569 = vmatpush.msra.mxu0 0.0
        %2570 = vmatpush.msra.mxu0 0.0
        %2571 = vmatpush.msra.mxu0 0.0
        %2572 = vmatpush.msra.mxu0 0.0
        %2573 = vmatpush.msra.mxu0 0.0
        %2574 = vmatpush.msra.mxu0 %v2333
        %2575 = vmatmul.f32.gmra.mxu0 %v2313
        %v2576 = vpop.f32.mrf.mxu0
        %v2577 = vadd.f32 0.0, %v2576
        %2578 = vdwg.mxu0
        %2579 = vmatpush.msra.mxu0 0.0
        %2580 = vmatpush.msra.mxu0 0.0
        %2581 = vmatpush.msra.mxu0 0.0
        %2582 = vmatpush.msra.mxu0 0.0
        %2583 = vmatpush.msra.mxu0 0.0
        %2584 = vmatpush.msra.mxu0 0.0
        %2585 = vmatpush.msra.mxu0 0.0
        %2586 = vmatpush.msra.mxu0 0.0
        %2587 = vmatpush.msra.mxu0 0.0
        %2588 = vmatpush.msra.mxu0 0.0
        %2589 = vmatpush.msra.mxu0 0.0
        %2590 = vmatpush.msra.mxu0 0.0
        %2591 = vmatpush.msra.mxu0 0.0
        %2592 = vmatpush.msra.mxu0 0.0
        %2593 = vmatpush.msra.mxu0 0.0
        %2594 = vmatpush.msra.mxu0 %v2335
        %2595 = vmatmul.f32.gmra.mxu0 %v2313
        %v2596 = vpop.f32.mrf.mxu0
        %v2597 = vadd.f32 0.0, %v2596
        %2598 = vdwg.mxu0
        %2599 = vmatpush.msra.mxu0 0.0
        %2600 = vmatpush.msra.mxu0 0.0
        %2601 = vmatpush.msra.mxu0 0.0
        %2602 = vmatpush.msra.mxu0 0.0
        %2603 = vmatpush.msra.mxu0 0.0
        %2604 = vmatpush.msra.mxu0 0.0
        %2605 = vmatpush.msra.mxu0 0.0
        %2606 = vmatpush.msra.mxu0 0.0
        %2607 = vmatpush.msra.mxu0 0.0
        %2608 = vmatpush.msra.mxu0 0.0
        %2609 = vmatpush.msra.mxu0 0.0
        %2610 = vmatpush.msra.mxu0 0.0
        %2611 = vmatpush.msra.mxu0 0.0
        %2612 = vmatpush.msra.mxu0 0.0
        %2613 = vmatpush.msra.mxu0 0.0
        %2614 = vmatpush.msra.mxu0 %v2337
        %2615 = vmatmul.f32.gmra.mxu0 %v2313
        %v2616 = vpop.f32.mrf.mxu0
        %v2617 = vadd.f32 0.0, %v2616
        %2618 = vdwg.mxu0
        %2619 = vmatpush.msra.mxu0 0.0
        %2620 = vmatpush.msra.mxu0 0.0
        %2621 = vmatpush.msra.mxu0 0.0
        %2622 = vmatpush.msra.mxu0 0.0
        %2623 = vmatpush.msra.mxu0 0.0
        %2624 = vmatpush.msra.mxu0 0.0
        %2625 = vmatpush.msra.mxu0 0.0
        %2626 = vmatpush.msra.mxu0 0.0
        %2627 = vmatpush.msra.mxu0 0.0
        %2628 = vmatpush.msra.mxu0 0.0
        %2629 = vmatpush.msra.mxu0 0.0
        %2630 = vmatpush.msra.mxu0 0.0
        %2631 = vmatpush.msra.mxu0 0.0
        %2632 = vmatpush.msra.mxu0 0.0
        %2633 = vmatpush.msra.mxu0 0.0
        %2634 = vmatpush.msra.mxu0 %v2339
        %2635 = vmatmul.f32.gmra.mxu0 %v2313
        %v2636 = vpop.f32.mrf.mxu0
        %v2637 = vadd.f32 0.0, %v2636
        %2638 = vdwg.mxu0
        %2639 = vmatpush.msra.mxu0 0.0
        %2640 = vmatpush.msra.mxu0 0.0
        %2641 = vmatpush.msra.mxu0 0.0
        %2642 = vmatpush.msra.mxu0 0.0
        %2643 = vmatpush.msra.mxu0 0.0
        %2644 = vmatpush.msra.mxu0 0.0
        %2645 = vmatpush.msra.mxu0 0.0
        %2646 = vmatpush.msra.mxu0 0.0
        %2647 = vmatpush.msra.mxu0 0.0
        %2648 = vmatpush.msra.mxu0 0.0
        %2649 = vmatpush.msra.mxu0 0.0
        %2650 = vmatpush.msra.mxu0 0.0
        %2651 = vmatpush.msra.mxu0 0.0
        %2652 = vmatpush.msra.mxu0 0.0
        %2653 = vmatpush.msra.mxu0 0.0
        %2654 = vmatpush.msra.mxu0 %v2341
        %2655 = vmatmul.f32.gmra.mxu0 %v2313
        %v2656 = vpop.f32.mrf.mxu0
        %v2657 = vadd.f32 0.0, %v2656
        %2658 = vdwg.mxu0
        %2659 = vmatpush.msra.mxu0 0.0
        %2660 = vmatpush.msra.mxu0 0.0
        %2661 = vmatpush.msra.mxu0 0.0
        %2662 = vmatpush.msra.mxu0 0.0
        %2663 = vmatpush.msra.mxu0 0.0
        %2664 = vmatpush.msra.mxu0 0.0
        %2665 = vmatpush.msra.mxu0 0.0
        %2666 = vmatpush.msra.mxu0 0.0
        %2667 = vmatpush.msra.mxu0 0.0
        %2668 = vmatpush.msra.mxu0 0.0
        %2669 = vmatpush.msra.mxu0 0.0
        %2670 = vmatpush.msra.mxu0 0.0
        %2671 = vmatpush.msra.mxu0 0.0
        %2672 = vmatpush.msra.mxu0 0.0
        %2673 = vmatpush.msra.mxu0 0.0
        %2674 = vmatpush.msra.mxu0 %v2343
        %2675 = vmatmul.f32.gmra.mxu0 %v2313
        %v2676 = vpop.f32.mrf.mxu0
        %v2677 = vadd.f32 0.0, %v2676
        %2678 = vdwg.mxu0
        %2679 = vmatpush.msra.mxu0 0.0
        %2680 = vmatpush.msra.mxu0 0.0
        %2681 = vmatpush.msra.mxu0 0.0
        %2682 = vmatpush.msra.mxu0 0.0
        %2683 = vmatpush.msra.mxu0 0.0
        %2684 = vmatpush.msra.mxu0 0.0
        %2685 = vmatpush.msra.mxu0 0.0
        %2686 = vmatpush.msra.mxu0 0.0
        %2687 = vmatpush.msra.mxu0 0.0
        %2688 = vmatpush.msra.mxu0 0.0
        %2689 = vmatpush.msra.mxu0 0.0
        %2690 = vmatpush.msra.mxu0 0.0
        %2691 = vmatpush.msra.mxu0 0.0
        %2692 = vmatpush.msra.mxu0 0.0
        %2693 = vmatpush.msra.mxu0 0.0
        %2694 = vmatpush.msra.mxu0 %v2345
        %2695 = vmatmul.f32.gmra.mxu0 %v2313
        %v2696 = vpop.f32.mrf.mxu0
        %v2697 = vadd.f32 0.0, %v2696
        %2698 = vdwg.mxu0
        %2699 = vmatpush.msra.mxu0 0.0
        %2700 = vmatpush.msra.mxu0 0.0
        %2701 = vmatpush.msra.mxu0 0.0
        %2702 = vmatpush.msra.mxu0 0.0
        %2703 = vmatpush.msra.mxu0 0.0
        %2704 = vmatpush.msra.mxu0 0.0
        %2705 = vmatpush.msra.mxu0 0.0
        %2706 = vmatpush.msra.mxu0 0.0
        %2707 = vmatpush.msra.mxu0 0.0
        %2708 = vmatpush.msra.mxu0 0.0
        %2709 = vmatpush.msra.mxu0 0.0
        %2710 = vmatpush.msra.mxu0 0.0
        %2711 = vmatpush.msra.mxu0 0.0
        %2712 = vmatpush.msra.mxu0 0.0
        %2713 = vmatpush.msra.mxu0 0.0
        %2714 = vmatpush.msra.mxu0 %v2347
        %2715 = vmatmul.f32.gmra.mxu0 %v2313
        %v2716 = vpop.f32.mrf.mxu0
        %v2717 = vadd.f32 0.0, %v2716
        %2718 = vdwg.mxu0
        %2719 = vmatpush.msra.mxu0 0.0
        %2720 = vmatpush.msra.mxu0 0.0
        %2721 = vmatpush.msra.mxu0 0.0
        %2722 = vmatpush.msra.mxu0 0.0
        %2723 = vmatpush.msra.mxu0 0.0
        %2724 = vmatpush.msra.mxu0 0.0
        %2725 = vmatpush.msra.mxu0 0.0
        %2726 = vmatpush.msra.mxu0 0.0
        %2727 = vmatpush.msra.mxu0 0.0
        %2728 = vmatpush.msra.mxu0 0.0
        %2729 = vmatpush.msra.mxu0 0.0
        %2730 = vmatpush.msra.mxu0 0.0
        %2731 = vmatpush.msra.mxu0 0.0
        %2732 = vmatpush.msra.mxu0 0.0
        %2733 = vmatpush.msra.mxu0 0.0
        %2734 = vmatpush.msra.mxu0 %v2349
        %2735 = vmatmul.f32.gmra.mxu0 %v2313
        %v2736 = vpop.f32.mrf.mxu0
        %v2737 = vadd.f32 0.0, %v2736
        %2738 = vdwg.mxu0
        %2739 = vmatpush.msra.mxu0 0.0
        %2740 = vmatpush.msra.mxu0 0.0
        %2741 = vmatpush.msra.mxu0 0.0
        %2742 = vmatpush.msra.mxu0 0.0
        %2743 = vmatpush.msra.mxu0 0.0
        %2744 = vmatpush.msra.mxu0 0.0
        %2745 = vmatpush.msra.mxu0 0.0
        %2746 = vmatpush.msra.mxu0 0.0
        %2747 = vmatpush.msra.mxu0 0.0
        %2748 = vmatpush.msra.mxu0 0.0
        %2749 = vmatpush.msra.mxu0 0.0
        %2750 = vmatpush.msra.mxu0 0.0
        %2751 = vmatpush.msra.mxu0 0.0
        %2752 = vmatpush.msra.mxu0 0.0
        %2753 = vmatpush.msra.mxu0 0.0
        %2754 = vmatpush.msra.mxu0 %v2351
        %2755 = vmatmul.f32.gmra.mxu0 %v2313
        %v2756 = vpop.f32.mrf.mxu0
        %v2757 = vadd.f32 0.0, %v2756
        %2758 = vdwg.mxu0
        %2759 = vmatpush.msra.mxu0 0.0
        %2760 = vmatpush.msra.mxu0 0.0
        %2761 = vmatpush.msra.mxu0 0.0
        %2762 = vmatpush.msra.mxu0 0.0
        %2763 = vmatpush.msra.mxu0 0.0
        %2764 = vmatpush.msra.mxu0 0.0
        %2765 = vmatpush.msra.mxu0 0.0
        %2766 = vmatpush.msra.mxu0 0.0
        %2767 = vmatpush.msra.mxu0 0.0
        %2768 = vmatpush.msra.mxu0 0.0
        %2769 = vmatpush.msra.mxu0 0.0
        %2770 = vmatpush.msra.mxu0 0.0
        %2771 = vmatpush.msra.mxu0 0.0
        %2772 = vmatpush.msra.mxu0 0.0
        %2773 = vmatpush.msra.mxu0 0.0
        %2774 = vmatpush.msra.mxu0 %v2353
        %2775 = vmatmul.f32.gmra.mxu0 %v2313
        %v2776 = vpop.f32.mrf.mxu0
        %v2777 = vadd.f32 0.0, %v2776
        %2778 = vdwg.mxu0
        %2779 = vmatpush.msra.mxu0 0.0
        %2780 = vmatpush.msra.mxu0 0.0
        %2781 = vmatpush.msra.mxu0 0.0
        %2782 = vmatpush.msra.mxu0 0.0
        %2783 = vmatpush.msra.mxu0 0.0
        %2784 = vmatpush.msra.mxu0 0.0
        %2785 = vmatpush.msra.mxu0 0.0
        %2786 = vmatpush.msra.mxu0 0.0
        %2787 = vmatpush.msra.mxu0 0.0
        %2788 = vmatpush.msra.mxu0 0.0
        %2789 = vmatpush.msra.mxu0 0.0
        %2790 = vmatpush.msra.mxu0 0.0
        %2791 = vmatpush.msra.mxu0 0.0
        %2792 = vmatpush.msra.mxu0 0.0
        %2793 = vmatpush.msra.mxu0 0.0
        %2794 = vmatpush.msra.mxu0 %v2355
        %2795 = vmatmul.f32.gmra.mxu0 %v2313
        %v2796 = vpop.f32.mrf.mxu0
        %v2797 = vadd.f32 0.0, %v2796
        %2798 = vdwg.mxu0
        %2799 = vmatpush.msra.mxu0 0.0
        %2800 = vmatpush.msra.mxu0 0.0
        %2801 = vmatpush.msra.mxu0 0.0
        %2802 = vmatpush.msra.mxu0 0.0
        %2803 = vmatpush.msra.mxu0 0.0
        %2804 = vmatpush.msra.mxu0 0.0
        %2805 = vmatpush.msra.mxu0 0.0
        %2806 = vmatpush.msra.mxu0 0.0
        %2807 = vmatpush.msra.mxu0 0.0
        %2808 = vmatpush.msra.mxu0 0.0
        %2809 = vmatpush.msra.mxu0 0.0
        %2810 = vmatpush.msra.mxu0 0.0
        %2811 = vmatpush.msra.mxu0 0.0
        %2812 = vmatpush.msra.mxu0 0.0
        %2813 = vmatpush.msra.mxu0 0.0
        %2814 = vmatpush.msra.mxu0 %v2357
        %2815 = vmatmul.f32.gmra.mxu0 %v2313
        %v2816 = vpop.f32.mrf.mxu0
        %v2817 = vadd.f32 0.0, %v2816
        %2818 = vdwg.mxu0
        %2819 = vmatpush.msra.mxu0 0.0
        %2820 = vmatpush.msra.mxu0 0.0
        %2821 = vmatpush.msra.mxu0 0.0
        %2822 = vmatpush.msra.mxu0 0.0
        %2823 = vmatpush.msra.mxu0 0.0
        %2824 = vmatpush.msra.mxu0 0.0
        %2825 = vmatpush.msra.mxu0 0.0
        %2826 = vmatpush.msra.mxu0 0.0
        %2827 = vmatpush.msra.mxu0 0.0
        %2828 = vmatpush.msra.mxu0 0.0
        %2829 = vmatpush.msra.mxu0 0.0
        %2830 = vmatpush.msra.mxu0 0.0
        %2831 = vmatpush.msra.mxu0 0.0
        %2832 = vmatpush.msra.mxu0 0.0
        %2833 = vmatpush.msra.mxu0 0.0
        %2834 = vmatpush.msra.mxu0 %v2359
        %2835 = vmatmul.f32.gmra.mxu0 %v2313
        %v2836 = vpop.f32.mrf.mxu0
        %v2837 = vadd.f32 0.0, %v2836
        %2838 = vdwg.mxu0
        %2839 = vmatpush.msra.mxu0 0.0
        %2840 = vmatpush.msra.mxu0 0.0
        %2841 = vmatpush.msra.mxu0 0.0
        %2842 = vmatpush.msra.mxu0 0.0
        %2843 = vmatpush.msra.mxu0 0.0
        %2844 = vmatpush.msra.mxu0 0.0
        %2845 = vmatpush.msra.mxu0 0.0
        %2846 = vmatpush.msra.mxu0 0.0
        %2847 = vmatpush.msra.mxu0 0.0
        %2848 = vmatpush.msra.mxu0 0.0
        %2849 = vmatpush.msra.mxu0 0.0
        %2850 = vmatpush.msra.mxu0 0.0
        %2851 = vmatpush.msra.mxu0 0.0
        %2852 = vmatpush.msra.mxu0 0.0
        %2853 = vmatpush.msra.mxu0 0.0
        %2854 = vmatpush.msra.mxu0 %v2361
        %2855 = vmatmul.f32.gmra.mxu0 %v2313
        %v2856 = vpop.f32.mrf.mxu0
        %v2857 = vadd.f32 0.0, %v2856
        %2858 = vdwg.mxu0
        %2859 = vmatpush.msra.mxu0 0.0
        %2860 = vmatpush.msra.mxu0 0.0
        %2861 = vmatpush.msra.mxu0 0.0
        %2862 = vmatpush.msra.mxu0 0.0
        %2863 = vmatpush.msra.mxu0 0.0
        %2864 = vmatpush.msra.mxu0 0.0
        %2865 = vmatpush.msra.mxu0 0.0
        %2866 = vmatpush.msra.mxu0 0.0
        %2867 = vmatpush.msra.mxu0 0.0
        %2868 = vmatpush.msra.mxu0 0.0
        %2869 = vmatpush.msra.mxu0 0.0
        %2870 = vmatpush.msra.mxu0 0.0
        %2871 = vmatpush.msra.mxu0 0.0
        %2872 = vmatpush.msra.mxu0 0.0
        %2873 = vmatpush.msra.mxu0 0.0
        %2874 = vmatpush.msra.mxu0 %v2363
        %2875 = vmatmul.f32.gmra.mxu0 %v2313
        %v2876 = vpop.f32.mrf.mxu0
        %v2877 = vadd.f32 0.0, %v2876
        %2878 = vdwg.mxu0
        %2879 = vmatpush.msra.mxu0 0.0
        %2880 = vmatpush.msra.mxu0 0.0
        %2881 = vmatpush.msra.mxu0 0.0
        %2882 = vmatpush.msra.mxu0 0.0
        %2883 = vmatpush.msra.mxu0 0.0
        %2884 = vmatpush.msra.mxu0 0.0
        %2885 = vmatpush.msra.mxu0 0.0
        %2886 = vmatpush.msra.mxu0 0.0
        %2887 = vmatpush.msra.mxu0 0.0
        %2888 = vmatpush.msra.mxu0 0.0
        %2889 = vmatpush.msra.mxu0 0.0
        %2890 = vmatpush.msra.mxu0 0.0
        %2891 = vmatpush.msra.mxu0 0.0
        %2892 = vmatpush.msra.mxu0 0.0
        %2893 = vmatpush.msra.mxu0 0.0
        %2894 = vmatpush.msra.mxu0 %v2365
        %2895 = vmatmul.f32.gmra.mxu0 %v2313
        %v2896 = vpop.f32.mrf.mxu0
        %v2897 = vadd.f32 0.0, %v2896
        %2898 = vdwg.mxu0
        %2899 = vmatpush.msra.mxu0 0.0
        %2900 = vmatpush.msra.mxu0 0.0
        %2901 = vmatpush.msra.mxu0 0.0
        %2902 = vmatpush.msra.mxu0 0.0
        %2903 = vmatpush.msra.mxu0 0.0
        %2904 = vmatpush.msra.mxu0 0.0
        %2905 = vmatpush.msra.mxu0 0.0
        %2906 = vmatpush.msra.mxu0 0.0
        %2907 = vmatpush.msra.mxu0 0.0
        %2908 = vmatpush.msra.mxu0 0.0
        %2909 = vmatpush.msra.mxu0 0.0
        %2910 = vmatpush.msra.mxu0 0.0
        %2911 = vmatpush.msra.mxu0 0.0
        %2912 = vmatpush.msra.mxu0 0.0
        %2913 = vmatpush.msra.mxu0 0.0
        %2914 = vmatpush.msra.mxu0 %v2367
        %2915 = vmatmul.f32.gmra.mxu0 %v2313
        %v2916 = vpop.f32.mrf.mxu0
        %v2917 = vadd.f32 0.0, %v2916
        %2918 = vdwg.mxu0
        %2919 = vmatpush.msra.mxu0 0.0
        %2920 = vmatpush.msra.mxu0 0.0
        %2921 = vmatpush.msra.mxu0 0.0
        %2922 = vmatpush.msra.mxu0 0.0
        %2923 = vmatpush.msra.mxu0 0.0
        %2924 = vmatpush.msra.mxu0 0.0
        %2925 = vmatpush.msra.mxu0 0.0
        %2926 = vmatpush.msra.mxu0 0.0
        %2927 = vmatpush.msra.mxu0 0.0
        %2928 = vmatpush.msra.mxu0 0.0
        %2929 = vmatpush.msra.mxu0 0.0
        %2930 = vmatpush.msra.mxu0 0.0
        %2931 = vmatpush.msra.mxu0 0.0
        %2932 = vmatpush.msra.mxu0 0.0
        %2933 = vmatpush.msra.mxu0 0.0
        %2934 = vmatpush.msra.mxu0 %v2369
        %2935 = vmatmul.f32.gmra.mxu0 %v2313
        %v2936 = vpop.f32.mrf.mxu0
        %v2937 = vadd.f32 0.0, %v2936
        %2938 = vdwg.mxu0
        %2939 = vmatpush.msra.mxu0 0.0
        %2940 = vmatpush.msra.mxu0 0.0
        %2941 = vmatpush.msra.mxu0 0.0
        %2942 = vmatpush.msra.mxu0 0.0
        %2943 = vmatpush.msra.mxu0 0.0
        %2944 = vmatpush.msra.mxu0 0.0
        %2945 = vmatpush.msra.mxu0 0.0
        %2946 = vmatpush.msra.mxu0 0.0
        %2947 = vmatpush.msra.mxu0 0.0
        %2948 = vmatpush.msra.mxu0 0.0
        %2949 = vmatpush.msra.mxu0 0.0
        %2950 = vmatpush.msra.mxu0 0.0
        %2951 = vmatpush.msra.mxu0 0.0
        %2952 = vmatpush.msra.mxu0 0.0
        %2953 = vmatpush.msra.mxu0 0.0
        %2954 = vmatpush.msra.mxu0 %v2371
        %2955 = vmatmul.f32.gmra.mxu0 %v2313
        %v2956 = vpop.f32.mrf.mxu0
        %v2957 = vadd.f32 0.0, %v2956
        %2958 = vdwg.mxu0
        %2959 = vmatpush.msra.mxu0 0.0
        %2960 = vmatpush.msra.mxu0 0.0
        %2961 = vmatpush.msra.mxu0 0.0
        %2962 = vmatpush.msra.mxu0 0.0
        %2963 = vmatpush.msra.mxu0 0.0
        %2964 = vmatpush.msra.mxu0 0.0
        %2965 = vmatpush.msra.mxu0 0.0
        %2966 = vmatpush.msra.mxu0 0.0
        %2967 = vmatpush.msra.mxu0 0.0
        %2968 = vmatpush.msra.mxu0 0.0
        %2969 = vmatpush.msra.mxu0 0.0
        %2970 = vmatpush.msra.mxu0 0.0
        %2971 = vmatpush.msra.mxu0 0.0
        %2972 = vmatpush.msra.mxu0 0.0
        %2973 = vmatpush.msra.mxu0 0.0
        %2974 = vmatpush.msra.mxu0 %v2373
        %2975 = vmatmul.f32.gmra.mxu0 %v2313
        %v2976 = vpop.f32.mrf.mxu0
        %v2977 = vadd.f32 0.0, %v2976
        %2978 = vdwg.mxu0
        %2979 = vmatpush.msra.mxu0 0.0
        %2980 = vmatpush.msra.mxu0 0.0
        %2981 = vmatpush.msra.mxu0 0.0
        %2982 = vmatpush.msra.mxu0 0.0
        %2983 = vmatpush.msra.mxu0 0.0
        %2984 = vmatpush.msra.mxu0 0.0
        %2985 = vmatpush.msra.mxu0 0.0
        %2986 = vmatpush.msra.mxu0 0.0
        %2987 = vmatpush.msra.mxu0 0.0
        %2988 = vmatpush.msra.mxu0 0.0
        %2989 = vmatpush.msra.mxu0 0.0
        %2990 = vmatpush.msra.mxu0 0.0
        %2991 = vmatpush.msra.mxu0 0.0
        %2992 = vmatpush.msra.mxu0 0.0
        %2993 = vmatpush.msra.mxu0 0.0
        %2994 = vmatpush.msra.mxu0 %v2375
        %2995 = vmatmul.f32.gmra.mxu0 %v2313
        %v2996 = vpop.f32.mrf.mxu0
        %v2997 = vadd.f32 0.0, %v2996
        %2998 = vdwg.mxu0
        %2999 = vmatpush.msra.mxu0 0.0
        %3000 = vmatpush.msra.mxu0 0.0
        %3001 = vmatpush.msra.mxu0 0.0
        %3002 = vmatpush.msra.mxu0 0.0
        %3003 = vmatpush.msra.mxu0 0.0
        %3004 = vmatpush.msra.mxu0 0.0
        %3005 = vmatpush.msra.mxu0 0.0
        %3006 = vmatpush.msra.mxu0 0.0
        %3007 = vmatpush.msra.mxu0 0.0
        %3008 = vmatpush.msra.mxu0 0.0
        %3009 = vmatpush.msra.mxu0 0.0
        %3010 = vmatpush.msra.mxu0 0.0
        %3011 = vmatpush.msra.mxu0 0.0
        %3012 = vmatpush.msra.mxu0 0.0
        %3013 = vmatpush.msra.mxu0 0.0
        %3014 = vmatpush.msra.mxu0 %v2377
        %3015 = vmatmul.f32.gmra.mxu0 %v2313
        %v3016 = vpop.f32.mrf.mxu0
        %v3017 = vadd.f32 0.0, %v3016
        %3018 = vdwg.mxu0
        %v3019 = vrot.slane %v2437, 4
        %vm3020 = vcmask 1047556
        %v3021 = vsel %vm3020, %v3019, %v2397
        %v3022 = vrot.slane %v2397, 4
        %v3023 = vsel %vm3020, %v2437, %v3022
        %v3025 = vunpack.c.l.s4 1983009808
        %v3026 = vunpack.c.0.s8 %v3025
        %v3027 = vperm.slane %v3021, %v3026
        %v3029 = vunpack.c.l.s4 1983009808
        %v3030 = vunpack.c.0.s8 %v3029
        %v3031 = vperm.slane %v3023, %v3030
        %v3032 = vrot.slane %v2457, 4
        %v3033 = vsel %vm3020, %v3032, %v2417
        %v3034 = vrot.slane %v2417, 4
        %v3035 = vsel %vm3020, %v2457, %v3034
        %v3037 = vunpack.c.l.s4 1983009808
        %v3038 = vunpack.c.0.s8 %v3037
        %v3039 = vperm.slane %v3033, %v3038
        %v3041 = vunpack.c.l.s4 1983009808
        %v3042 = vunpack.c.0.s8 %v3041
        %v3043 = vperm.slane %v3035, %v3042
        %v3044 = vrot.slane %v2517, 4
        %v3045 = vsel %vm3020, %v3044, %v2477
        %v3046 = vrot.slane %v2477, 4
        %v3047 = vsel %vm3020, %v2517, %v3046
        %v3049 = vunpack.c.l.s4 1983009808
        %v3050 = vunpack.c.0.s8 %v3049
        %v3051 = vperm.slane %v3045, %v3050
        %v3053 = vunpack.c.l.s4 1983009808
        %v3054 = vunpack.c.0.s8 %v3053
        %v3055 = vperm.slane %v3047, %v3054
        %v3056 = vrot.slane %v2537, 4
        %v3057 = vsel %vm3020, %v3056, %v2497
        %v3058 = vrot.slane %v2497, 4
        %v3059 = vsel %vm3020, %v2537, %v3058
        %v3061 = vunpack.c.l.s4 1983009808
        %v3062 = vunpack.c.0.s8 %v3061
        %v3063 = vperm.slane %v3057, %v3062
        %v3065 = vunpack.c.l.s4 1983009808
        %v3066 = vunpack.c.0.s8 %v3065
        %v3067 = vperm.slane %v3059, %v3066
        %v3068 = vrot.slane %v3039, 4
        %v3069 = vsel %vm3020, %v3068, %v3027
        %v3070 = vrot.slane %v3027, 4
        %v3071 = vsel %vm3020, %v3039, %v3070
        %v3073 = vunpack.c.l.s4 1934713408
        %v3074 = vunpack.c.0.s8 %v3073
        %v3075 = vperm.slane %v3069, %v3074
        %v3077 = vunpack.c.l.s4 1934713408
        %v3078 = vunpack.c.0.s8 %v3077
        %v3079 = vperm.slane %v3071, %v3078
        %v3080 = vrot.slane %v3043, 4
        %v3081 = vsel %vm3020, %v3080, %v3031
        %v3082 = vrot.slane %v3031, 4
        %v3083 = vsel %vm3020, %v3043, %v3082
        %v3085 = vunpack.c.l.s4 1934713408
        %v3086 = vunpack.c.0.s8 %v3085
        %v3087 = vperm.slane %v3081, %v3086
        %v3089 = vunpack.c.l.s4 1934713408
        %v3090 = vunpack.c.0.s8 %v3089
        %v3091 = vperm.slane %v3083, %v3090
        %v3092 = vrot.slane %v3063, 4
        %v3093 = vsel %vm3020, %v3092, %v3051
        %v3094 = vrot.slane %v3051, 4
        %v3095 = vsel %vm3020, %v3063, %v3094
        %v3097 = vunpack.c.l.s4 1934713408
        %v3098 = vunpack.c.0.s8 %v3097
        %v3099 = vperm.slane %v3093, %v3098
        %v3101 = vunpack.c.l.s4 1934713408
        %v3102 = vunpack.c.0.s8 %v3101
        %v3103 = vperm.slane %v3095, %v3102
        %v3104 = vrot.slane %v3067, 4
        %v3105 = vsel %vm3020, %v3104, %v3055
        %v3106 = vrot.slane %v3055, 4
        %v3107 = vsel %vm3020, %v3067, %v3106
        %v3109 = vunpack.c.l.s4 1934713408
        %v3110 = vunpack.c.0.s8 %v3109
        %v3111 = vperm.slane %v3105, %v3110
        %v3113 = vunpack.c.l.s4 1934713408
        %v3114 = vunpack.c.0.s8 %v3113
        %v3115 = vperm.slane %v3107, %v3114
        %v3116 = vrot.slane %v3099, 4
        %v3117 = vsel %vm3020, %v3116, %v3075
        %v3118 = vrot.slane %v3075, 4
        %v3119 = vsel %vm3020, %v3099, %v3118
        %v3120 = vrot.slane %v3103, 4
        %v3121 = vsel %vm3020, %v3120, %v3079
        %v3122 = vrot.slane %v3079, 4
        %v3123 = vsel %vm3020, %v3103, %v3122
        %v3124 = vrot.slane %v3111, 4
        %v3125 = vsel %vm3020, %v3124, %v3087
        %v3126 = vrot.slane %v3087, 4
        %v3127 = vsel %vm3020, %v3111, %v3126
        %v3128 = vrot.slane %v3115, 4
        %v3129 = vsel %vm3020, %v3128, %v3091
        %v3130 = vrot.slane %v3091, 4
        %v3131 = vsel %vm3020, %v3115, %v3130
        %v3132 = vrot.slane %v2597, 4
        %v3133 = vsel %vm3020, %v3132, %v2557
        %v3134 = vrot.slane %v2557, 4
        %v3135 = vsel %vm3020, %v2597, %v3134
        %v3137 = vunpack.c.l.s4 1983009808
        %v3138 = vunpack.c.0.s8 %v3137
        %v3139 = vperm.slane %v3133, %v3138
        %v3141 = vunpack.c.l.s4 1983009808
        %v3142 = vunpack.c.0.s8 %v3141
        %v3143 = vperm.slane %v3135, %v3142
        %v3144 = vrot.slane %v2617, 4
        %v3145 = vsel %vm3020, %v3144, %v2577
        %v3146 = vrot.slane %v2577, 4
        %v3147 = vsel %vm3020, %v2617, %v3146
        %v3149 = vunpack.c.l.s4 1983009808
        %v3150 = vunpack.c.0.s8 %v3149
        %v3151 = vperm.slane %v3145, %v3150
        %v3153 = vunpack.c.l.s4 1983009808
        %v3154 = vunpack.c.0.s8 %v3153
        %v3155 = vperm.slane %v3147, %v3154
        %v3156 = vrot.slane %v2677, 4
        %v3157 = vsel %vm3020, %v3156, %v2637
        %v3158 = vrot.slane %v2637, 4
        %v3159 = vsel %vm3020, %v2677, %v3158
        %v3161 = vunpack.c.l.s4 1983009808
        %v3162 = vunpack.c.0.s8 %v3161
        %v3163 = vperm.slane %v3157, %v3162
        %v3165 = vunpack.c.l.s4 1983009808
        %v3166 = vunpack.c.0.s8 %v3165
        %v3167 = vperm.slane %v3159, %v3166
        %v3168 = vrot.slane %v2697, 4
        %v3169 = vsel %vm3020, %v3168, %v2657
        %v3170 = vrot.slane %v2657, 4
        %v3171 = vsel %vm3020, %v2697, %v3170
        %v3173 = vunpack.c.l.s4 1983009808
        %v3174 = vunpack.c.0.s8 %v3173
        %v3175 = vperm.slane %v3169, %v3174
        %v3177 = vunpack.c.l.s4 1983009808
        %v3178 = vunpack.c.0.s8 %v3177
        %v3179 = vperm.slane %v3171, %v3178
        %v3180 = vrot.slane %v3151, 4
        %v3181 = vsel %vm3020, %v3180, %v3139
        %v3182 = vrot.slane %v3139, 4
        %v3183 = vsel %vm3020, %v3151, %v3182
        %v3185 = vunpack.c.l.s4 1934713408
        %v3186 = vunpack.c.0.s8 %v3185
        %v3187 = vperm.slane %v3181, %v3186
        %v3189 = vunpack.c.l.s4 1934713408
        %v3190 = vunpack.c.0.s8 %v3189
        %v3191 = vperm.slane %v3183, %v3190
        %v3192 = vrot.slane %v3155, 4
        %v3193 = vsel %vm3020, %v3192, %v3143
        %v3194 = vrot.slane %v3143, 4
        %v3195 = vsel %vm3020, %v3155, %v3194
        %v3197 = vunpack.c.l.s4 1934713408
        %v3198 = vunpack.c.0.s8 %v3197
        %v3199 = vperm.slane %v3193, %v3198
        %v3201 = vunpack.c.l.s4 1934713408
        %v3202 = vunpack.c.0.s8 %v3201
        %v3203 = vperm.slane %v3195, %v3202
        %v3204 = vrot.slane %v3175, 4
        %v3205 = vsel %vm3020, %v3204, %v3163
        %v3206 = vrot.slane %v3163, 4
        %v3207 = vsel %vm3020, %v3175, %v3206
        %v3209 = vunpack.c.l.s4 1934713408
        %v3210 = vunpack.c.0.s8 %v3209
        %v3211 = vperm.slane %v3205, %v3210
        %v3213 = vunpack.c.l.s4 1934713408
        %v3214 = vunpack.c.0.s8 %v3213
        %v3215 = vperm.slane %v3207, %v3214
        %v3216 = vrot.slane %v3179, 4
        %v3217 = vsel %vm3020, %v3216, %v3167
        %v3218 = vrot.slane %v3167, 4
        %v3219 = vsel %vm3020, %v3179, %v3218
        %v3221 = vunpack.c.l.s4 1934713408
        %v3222 = vunpack.c.0.s8 %v3221
        %v3223 = vperm.slane %v3217, %v3222
        %v3225 = vunpack.c.l.s4 1934713408
        %v3226 = vunpack.c.0.s8 %v3225
        %v3227 = vperm.slane %v3219, %v3226
        %v3228 = vrot.slane %v3211, 4
        %v3229 = vsel %vm3020, %v3228, %v3187
        %v3230 = vrot.slane %v3187, 4
        %v3231 = vsel %vm3020, %v3211, %v3230
        %v3232 = vrot.slane %v3215, 4
        %v3233 = vsel %vm3020, %v3232, %v3191
        %v3234 = vrot.slane %v3191, 4
        %v3235 = vsel %vm3020, %v3215, %v3234
        %v3236 = vrot.slane %v3223, 4
        %v3237 = vsel %vm3020, %v3236, %v3199
        %v3238 = vrot.slane %v3199, 4
        %v3239 = vsel %vm3020, %v3223, %v3238
        %v3240 = vrot.slane %v3227, 4
        %v3241 = vsel %vm3020, %v3240, %v3203
        %v3242 = vrot.slane %v3203, 4
        %v3243 = vsel %vm3020, %v3227, %v3242
        %v3244 = vrot.slane %v2757, 4
        %v3245 = vsel %vm3020, %v3244, %v2717
        %v3246 = vrot.slane %v2717, 4
        %v3247 = vsel %vm3020, %v2757, %v3246
        %v3249 = vunpack.c.l.s4 1983009808
        %v3250 = vunpack.c.0.s8 %v3249
        %v3251 = vperm.slane %v3245, %v3250
        %v3253 = vunpack.c.l.s4 1983009808
        %v3254 = vunpack.c.0.s8 %v3253
        %v3255 = vperm.slane %v3247, %v3254
        %v3256 = vrot.slane %v2777, 4
        %v3257 = vsel %vm3020, %v3256, %v2737
        %v3258 = vrot.slane %v2737, 4
        %v3259 = vsel %vm3020, %v2777, %v3258
        %v3261 = vunpack.c.l.s4 1983009808
        %v3262 = vunpack.c.0.s8 %v3261
        %v3263 = vperm.slane %v3257, %v3262
        %v3265 = vunpack.c.l.s4 1983009808
        %v3266 = vunpack.c.0.s8 %v3265
        %v3267 = vperm.slane %v3259, %v3266
        %v3268 = vrot.slane %v2837, 4
        %v3269 = vsel %vm3020, %v3268, %v2797
        %v3270 = vrot.slane %v2797, 4
        %v3271 = vsel %vm3020, %v2837, %v3270
        %v3273 = vunpack.c.l.s4 1983009808
        %v3274 = vunpack.c.0.s8 %v3273
        %v3275 = vperm.slane %v3269, %v3274
        %v3277 = vunpack.c.l.s4 1983009808
        %v3278 = vunpack.c.0.s8 %v3277
        %v3279 = vperm.slane %v3271, %v3278
        %v3280 = vrot.slane %v2857, 4
        %v3281 = vsel %vm3020, %v3280, %v2817
        %v3282 = vrot.slane %v2817, 4
        %v3283 = vsel %vm3020, %v2857, %v3282
        %v3285 = vunpack.c.l.s4 1983009808
        %v3286 = vunpack.c.0.s8 %v3285
        %v3287 = vperm.slane %v3281, %v3286
        %v3289 = vunpack.c.l.s4 1983009808
        %v3290 = vunpack.c.0.s8 %v3289
        %v3291 = vperm.slane %v3283, %v3290
        %v3292 = vrot.slane %v3263, 4
        %v3293 = vsel %vm3020, %v3292, %v3251
        %v3294 = vrot.slane %v3251, 4
        %v3295 = vsel %vm3020, %v3263, %v3294
        %v3297 = vunpack.c.l.s4 1934713408
        %v3298 = vunpack.c.0.s8 %v3297
        %v3299 = vperm.slane %v3293, %v3298
        %v3301 = vunpack.c.l.s4 1934713408
        %v3302 = vunpack.c.0.s8 %v3301
        %v3303 = vperm.slane %v3295, %v3302
        %v3304 = vrot.slane %v3267, 4
        %v3305 = vsel %vm3020, %v3304, %v3255
        %v3306 = vrot.slane %v3255, 4
        %v3307 = vsel %vm3020, %v3267, %v3306
        %v3309 = vunpack.c.l.s4 1934713408
        %v3310 = vunpack.c.0.s8 %v3309
        %v3311 = vperm.slane %v3305, %v3310
        %v3313 = vunpack.c.l.s4 1934713408
        %v3314 = vunpack.c.0.s8 %v3313
        %v3315 = vperm.slane %v3307, %v3314
        %v3316 = vrot.slane %v3287, 4
        %v3317 = vsel %vm3020, %v3316, %v3275
        %v3318 = vrot.slane %v3275, 4
        %v3319 = vsel %vm3020, %v3287, %v3318
        %v3321 = vunpack.c.l.s4 1934713408
        %v3322 = vunpack.c.0.s8 %v3321
        %v3323 = vperm.slane %v3317, %v3322
        %v3325 = vunpack.c.l.s4 1934713408
        %v3326 = vunpack.c.0.s8 %v3325
        %v3327 = vperm.slane %v3319, %v3326
        %v3328 = vrot.slane %v3291, 4
        %v3329 = vsel %vm3020, %v3328, %v3279
        %v3330 = vrot.slane %v3279, 4
        %v3331 = vsel %vm3020, %v3291, %v3330
        %v3333 = vunpack.c.l.s4 1934713408
        %v3334 = vunpack.c.0.s8 %v3333
        %v3335 = vperm.slane %v3329, %v3334
        %v3337 = vunpack.c.l.s4 1934713408
        %v3338 = vunpack.c.0.s8 %v3337
        %v3339 = vperm.slane %v3331, %v3338
        %v3340 = vrot.slane %v3323, 4
        %v3341 = vsel %vm3020, %v3340, %v3299
        %v3342 = vrot.slane %v3299, 4
        %v3343 = vsel %vm3020, %v3323, %v3342
        %v3344 = vrot.slane %v3327, 4
        %v3345 = vsel %vm3020, %v3344, %v3303
        %v3346 = vrot.slane %v3303, 4
        %v3347 = vsel %vm3020, %v3327, %v3346
        %v3348 = vrot.slane %v3335, 4
        %v3349 = vsel %vm3020, %v3348, %v3311
        %v3350 = vrot.slane %v3311, 4
        %v3351 = vsel %vm3020, %v3335, %v3350
        %v3352 = vrot.slane %v3339, 4
        %v3353 = vsel %vm3020, %v3352, %v3315
        %v3354 = vrot.slane %v3315, 4
        %v3355 = vsel %vm3020, %v3339, %v3354
        %v3356 = vrot.slane %v2917, 4
        %v3357 = vsel %vm3020, %v3356, %v2877
        %v3358 = vrot.slane %v2877, 4
        %v3359 = vsel %vm3020, %v2917, %v3358
        %v3361 = vunpack.c.l.s4 1983009808
        %v3362 = vunpack.c.0.s8 %v3361
        %v3363 = vperm.slane %v3357, %v3362
        %v3365 = vunpack.c.l.s4 1983009808
        %v3366 = vunpack.c.0.s8 %v3365
        %v3367 = vperm.slane %v3359, %v3366
        %v3368 = vrot.slane %v2937, 4
        %v3369 = vsel %vm3020, %v3368, %v2897
        %v3370 = vrot.slane %v2897, 4
        %v3371 = vsel %vm3020, %v2937, %v3370
        %v3373 = vunpack.c.l.s4 1983009808
        %v3374 = vunpack.c.0.s8 %v3373
        %v3375 = vperm.slane %v3369, %v3374
        %v3377 = vunpack.c.l.s4 1983009808
        %v3378 = vunpack.c.0.s8 %v3377
        %v3379 = vperm.slane %v3371, %v3378
        %v3380 = vrot.slane %v2997, 4
        %v3381 = vsel %vm3020, %v3380, %v2957
        %v3382 = vrot.slane %v2957, 4
        %v3383 = vsel %vm3020, %v2997, %v3382
        %v3385 = vunpack.c.l.s4 1983009808
        %v3386 = vunpack.c.0.s8 %v3385
        %v3387 = vperm.slane %v3381, %v3386
        %v3389 = vunpack.c.l.s4 1983009808
        %v3390 = vunpack.c.0.s8 %v3389
        %v3391 = vperm.slane %v3383, %v3390
        %v3392 = vrot.slane %v3017, 4
        %v3393 = vsel %vm3020, %v3392, %v2977
        %v3394 = vrot.slane %v2977, 4
        %v3395 = vsel %vm3020, %v3017, %v3394
        %v3397 = vunpack.c.l.s4 1983009808
        %v3398 = vunpack.c.0.s8 %v3397
        %v3399 = vperm.slane %v3393, %v3398
        %v3401 = vunpack.c.l.s4 1983009808
        %v3402 = vunpack.c.0.s8 %v3401
        %v3403 = vperm.slane %v3395, %v3402
        %v3404 = vrot.slane %v3375, 4
        %v3405 = vsel %vm3020, %v3404, %v3363
        %v3406 = vrot.slane %v3363, 4
        %v3407 = vsel %vm3020, %v3375, %v3406
        %v3409 = vunpack.c.l.s4 1934713408
        %v3410 = vunpack.c.0.s8 %v3409
        %v3411 = vperm.slane %v3405, %v3410
        %v3413 = vunpack.c.l.s4 1934713408
        %v3414 = vunpack.c.0.s8 %v3413
        %v3415 = vperm.slane %v3407, %v3414
        %v3416 = vrot.slane %v3379, 4
        %v3417 = vsel %vm3020, %v3416, %v3367
        %v3418 = vrot.slane %v3367, 4
        %v3419 = vsel %vm3020, %v3379, %v3418
        %v3421 = vunpack.c.l.s4 1934713408
        %v3422 = vunpack.c.0.s8 %v3421
        %v3423 = vperm.slane %v3417, %v3422
        %v3425 = vunpack.c.l.s4 1934713408
        %v3426 = vunpack.c.0.s8 %v3425
        %v3427 = vperm.slane %v3419, %v3426
        %v3428 = vrot.slane %v3399, 4
        %v3429 = vsel %vm3020, %v3428, %v3387
        %v3430 = vrot.slane %v3387, 4
        %v3431 = vsel %vm3020, %v3399, %v3430
        %v3433 = vunpack.c.l.s4 1934713408
        %v3434 = vunpack.c.0.s8 %v3433
        %v3435 = vperm.slane %v3429, %v3434
        %v3437 = vunpack.c.l.s4 1934713408
        %v3438 = vunpack.c.0.s8 %v3437
        %v3439 = vperm.slane %v3431, %v3438
        %v3440 = vrot.slane %v3403, 4
        %v3441 = vsel %vm3020, %v3440, %v3391
        %v3442 = vrot.slane %v3391, 4
        %v3443 = vsel %vm3020, %v3403, %v3442
        %v3445 = vunpack.c.l.s4 1934713408
        %v3446 = vunpack.c.0.s8 %v3445
        %v3447 = vperm.slane %v3441, %v3446
        %v3449 = vunpack.c.l.s4 1934713408
        %v3450 = vunpack.c.0.s8 %v3449
        %v3451 = vperm.slane %v3443, %v3450
        %v3452 = vrot.slane %v3435, 4
        %v3453 = vsel %vm3020, %v3452, %v3411
        %v3454 = vrot.slane %v3411, 4
        %v3455 = vsel %vm3020, %v3435, %v3454
        %v3456 = vrot.slane %v3439, 4
        %v3457 = vsel %vm3020, %v3456, %v3415
        %v3458 = vrot.slane %v3415, 4
        %v3459 = vsel %vm3020, %v3439, %v3458
        %v3460 = vrot.slane %v3447, 4
        %v3461 = vsel %vm3020, %v3460, %v3423
        %v3462 = vrot.slane %v3423, 4
        %v3463 = vsel %vm3020, %v3447, %v3462
        %v3464 = vrot.slane %v3451, 4
        %v3465 = vsel %vm3020, %v3464, %v3427
        %v3466 = vrot.slane %v3427, 4
        %v3467 = vsel %vm3020, %v3451, %v3466
        %v3468 = vld [vmem:[%s2] sm:$0xff]
        %v3469 = vld [vmem:[%s2 + $0x8] sm:$0xff]
        %v3470 = vld [vmem:[%s2 + $0x10] sm:$0xff]
        %v3471 = vld [vmem:[%s2 + $0x18] sm:$0xff]
        %v3472 = vld [vmem:[%s2 + $0x20] sm:$0xff]
        %v3473 = vld [vmem:[%s2 + $0x28] sm:$0xff]
        %v3474 = vld [vmem:[%s2 + $0x30] sm:$0xff]
        %v3475 = vld [vmem:[%s2 + $0x38] sm:$0xff]
        %v3476 = vld [vmem:[%s2 + $0x40] sm:$0xff]
        %v3477 = vld [vmem:[%s2 + $0x48] sm:$0xff]
        %v3478 = vld [vmem:[%s2 + $0x50] sm:$0xff]
        %v3479 = vld [vmem:[%s2 + $0x58] sm:$0xff]
        %v3480 = vld [vmem:[%s2 + $0x60] sm:$0xff]
        %v3481 = vld [vmem:[%s2 + $0x68] sm:$0xff]
        %v3482 = vld [vmem:[%s2 + $0x70] sm:$0xff]
        %v3483 = vld [vmem:[%s2 + $0x78] sm:$0xff]
        %v3484 = vld [vmem:[%s2 + $0x80] sm:$0xff]
        %v3485 = vld [vmem:[%s2 + $0x88] sm:$0xff]
        %v3486 = vld [vmem:[%s2 + $0x90] sm:$0xff]
        %v3487 = vld [vmem:[%s2 + $0x98] sm:$0xff]
        %v3488 = vld [vmem:[%s2 + $0xa0] sm:$0xff]
        %v3489 = vld [vmem:[%s2 + $0xa8] sm:$0xff]
        %v3490 = vld [vmem:[%s2 + $0xb0] sm:$0xff]
        %v3491 = vld [vmem:[%s2 + $0xb8] sm:$0xff]
        %v3492 = vld [vmem:[%s2 + $0xc0] sm:$0xff]
        %v3493 = vld [vmem:[%s2 + $0xc8] sm:$0xff]
        %v3494 = vld [vmem:[%s2 + $0xd0] sm:$0xff]
        %v3495 = vld [vmem:[%s2 + $0xd8] sm:$0xff]
        %v3496 = vld [vmem:[%s2 + $0xe0] sm:$0xff]
        %v3497 = vld [vmem:[%s2 + $0xe8] sm:$0xff]
        %v3498 = vld [vmem:[%s2 + $0xf0] sm:$0xff]
        %v3499 = vld [vmem:[%s2 + $0xf8] sm:$0xff]
        %vm3500 = vcmask 785408
        %v3502 = vsel %vm3500, %v3468, 0
        %v3505 = vsel %vm3500, %v3469, 0
        %v3508 = vsel %vm3500, %v3470, 0
        %v3511 = vsel %vm3500, %v3471, 0
        %3513 = vmatpush.msra.mxu0 0.0
        %3514 = vmatpush.msra.mxu0 0.0
        %3515 = vmatpush.msra.mxu0 0.0
        %3516 = vmatpush.msra.mxu0 0.0
        %3517 = vmatpush.msra.mxu0 %v1496
        %3518 = vmatpush.msra.mxu0 %v1488
        %3519 = vmatpush.msra.mxu0 %v1480
        %3520 = vmatpush.msra.mxu0 %v1472
        %3521 = vmatpush.msra.mxu0 %v1461
        %3522 = vmatpush.msra.mxu0 %v1453
        %3523 = vmatpush.msra.mxu0 %v1445
        %3524 = vmatpush.msra.mxu0 %v1437
        %3525 = vmatpush.msra.mxu0 %v1422
        %3526 = vmatpush.msra.mxu0 %v1415
        %3527 = vmatpush.msra.mxu0 %v1408
        %3528 = vmatpush.msra.mxu0 %v1401
        %3529 = vmatmul.f32.gmra.mxu0 %v3502
        %v3530 = vpop.f32.mrf.mxu0
        %v3531 = vadd.f32 0.0, %v3530
        %3532 = vmatmul.f32.gmra.mxu0 %v3505
        %v3533 = vpop.f32.mrf.mxu0
        %v3534 = vadd.f32 0.0, %v3533
        %3535 = vmatmul.f32.gmra.mxu0 %v3508
        %v3536 = vpop.f32.mrf.mxu0
        %v3537 = vadd.f32 0.0, %v3536
        %3538 = vmatmul.f32.gmra.mxu0 %v3511
        %v3539 = vpop.f32.mrf.mxu0
        %v3540 = vadd.f32 0.0, %v3539
        %3541 = vdwg.mxu0
        %v3543 = vsel %vm3500, %v3472, 0
        %v3546 = vsel %vm3500, %v3473, 0
        %v3549 = vsel %vm3500, %v3474, 0
        %v3552 = vsel %vm3500, %v3475, 0
        %3554 = vmatpush.msra.mxu0 0.0
        %3555 = vmatpush.msra.mxu0 0.0
        %3556 = vmatpush.msra.mxu0 0.0
        %3557 = vmatpush.msra.mxu0 0.0
        %3558 = vmatpush.msra.mxu0 %v1595
        %3559 = vmatpush.msra.mxu0 %v1587
        %3560 = vmatpush.msra.mxu0 %v1579
        %3561 = vmatpush.msra.mxu0 %v1571
        %3562 = vmatpush.msra.mxu0 %v1563
        %3563 = vmatpush.msra.mxu0 %v1555
        %3564 = vmatpush.msra.mxu0 %v1547
        %3565 = vmatpush.msra.mxu0 %v1539
        %3566 = vmatpush.msra.mxu0 %v1531
        %3567 = vmatpush.msra.mxu0 %v1523
        %3568 = vmatpush.msra.mxu0 %v1515
        %3569 = vmatpush.msra.mxu0 %v1507
        %3570 = vmatmul.f32.gmra.mxu0 %v3543
        %v3571 = vpop.f32.mrf.mxu0
        %v3572 = vadd.f32 0.0, %v3571
        %3573 = vmatmul.f32.gmra.mxu0 %v3546
        %v3574 = vpop.f32.mrf.mxu0
        %v3575 = vadd.f32 0.0, %v3574
        %3576 = vmatmul.f32.gmra.mxu0 %v3549
        %v3577 = vpop.f32.mrf.mxu0
        %v3578 = vadd.f32 0.0, %v3577
        %3579 = vmatmul.f32.gmra.mxu0 %v3552
        %v3580 = vpop.f32.mrf.mxu0
        %v3581 = vadd.f32 0.0, %v3580
        %3582 = vdwg.mxu0
        %v3584 = vsel %vm3500, %v3476, 0
        %v3587 = vsel %vm3500, %v3477, 0
        %v3590 = vsel %vm3500, %v3478, 0
        %v3593 = vsel %vm3500, %v3479, 0
        %3595 = vmatpush.msra.mxu0 0.0
        %3596 = vmatpush.msra.mxu0 0.0
        %3597 = vmatpush.msra.mxu0 0.0
        %3598 = vmatpush.msra.mxu0 0.0
        %3599 = vmatpush.msra.mxu0 %v1687
        %3600 = vmatpush.msra.mxu0 %v1680
        %3601 = vmatpush.msra.mxu0 %v1673
        %3602 = vmatpush.msra.mxu0 %v1666
        %3603 = vmatpush.msra.mxu0 %v1659
        %3604 = vmatpush.msra.mxu0 %v1651
        %3605 = vmatpush.msra.mxu0 %v1643
        %3606 = vmatpush.msra.mxu0 %v1635
        %3607 = vmatpush.msra.mxu0 %v1627
        %3608 = vmatpush.msra.mxu0 %v1619
        %3609 = vmatpush.msra.mxu0 %v1611
        %3610 = vmatpush.msra.mxu0 %v1603
        %3611 = vmatmul.f32.gmra.mxu0 %v3584
        %v3612 = vpop.f32.mrf.mxu0
        %v3613 = vadd.f32 0.0, %v3612
        %3614 = vmatmul.f32.gmra.mxu0 %v3587
        %v3615 = vpop.f32.mrf.mxu0
        %v3616 = vadd.f32 0.0, %v3615
        %3617 = vmatmul.f32.gmra.mxu0 %v3590
        %v3618 = vpop.f32.mrf.mxu0
        %v3619 = vadd.f32 0.0, %v3618
        %3620 = vmatmul.f32.gmra.mxu0 %v3593
        %v3621 = vpop.f32.mrf.mxu0
        %v3622 = vadd.f32 0.0, %v3621
        %3623 = vdwg.mxu0
        %v3625 = vsel %vm3500, %v3480, 0
        %v3628 = vsel %vm3500, %v3481, 0
        %v3631 = vsel %vm3500, %v3482, 0
        %v3634 = vsel %vm3500, %v3483, 0
        %3636 = vmatpush.msra.mxu0 0.0
        %3637 = vmatpush.msra.mxu0 0.0
        %3638 = vmatpush.msra.mxu0 0.0
        %3639 = vmatpush.msra.mxu0 0.0
        %3640 = vmatpush.msra.mxu0 %v1783
        %3641 = vmatpush.msra.mxu0 %v1775
        %3642 = vmatpush.msra.mxu0 %v1767
        %3643 = vmatpush.msra.mxu0 %v1759
        %3644 = vmatpush.msra.mxu0 %v1751
        %3645 = vmatpush.msra.mxu0 %v1743
        %3646 = vmatpush.msra.mxu0 %v1735
        %3647 = vmatpush.msra.mxu0 %v1727
        %3648 = vmatpush.msra.mxu0 %v1719
        %3649 = vmatpush.msra.mxu0 %v1711
        %3650 = vmatpush.msra.mxu0 %v1703
        %3651 = vmatpush.msra.mxu0 %v1695
        %3652 = vmatmul.f32.gmra.mxu0 %v3625
        %v3653 = vpop.f32.mrf.mxu0
        %v3654 = vadd.f32 0.0, %v3653
        %3655 = vmatmul.f32.gmra.mxu0 %v3628
        %v3656 = vpop.f32.mrf.mxu0
        %v3657 = vadd.f32 0.0, %v3656
        %3658 = vmatmul.f32.gmra.mxu0 %v3631
        %v3659 = vpop.f32.mrf.mxu0
        %v3660 = vadd.f32 0.0, %v3659
        %3661 = vmatmul.f32.gmra.mxu0 %v3634
        %v3662 = vpop.f32.mrf.mxu0
        %v3663 = vadd.f32 0.0, %v3662
        %3664 = vdwg.mxu0
        %v3666 = vsel %vm3500, %v3484, 0
        %v3669 = vsel %vm3500, %v3485, 0
        %v3672 = vsel %vm3500, %v3486, 0
        %v3675 = vsel %vm3500, %v3487, 0
        %3677 = vmatpush.msra.mxu0 0.0
        %3678 = vmatpush.msra.mxu0 0.0
        %3679 = vmatpush.msra.mxu0 0.0
        %3680 = vmatpush.msra.mxu0 0.0
        %3681 = vmatpush.msra.mxu0 %v1879
        %3682 = vmatpush.msra.mxu0 %v1871
        %3683 = vmatpush.msra.mxu0 %v1863
        %3684 = vmatpush.msra.mxu0 %v1855
        %3685 = vmatpush.msra.mxu0 %v1847
        %3686 = vmatpush.msra.mxu0 %v1839
        %3687 = vmatpush.msra.mxu0 %v1831
        %3688 = vmatpush.msra.mxu0 %v1823
        %3689 = vmatpush.msra.mxu0 %v1815
        %3690 = vmatpush.msra.mxu0 %v1807
        %3691 = vmatpush.msra.mxu0 %v1799
        %3692 = vmatpush.msra.mxu0 %v1791
        %3693 = vmatmul.f32.gmra.mxu0 %v3666
        %v3694 = vpop.f32.mrf.mxu0
        %v3695 = vadd.f32 0.0, %v3694
        %3696 = vmatmul.f32.gmra.mxu0 %v3669
        %v3697 = vpop.f32.mrf.mxu0
        %v3698 = vadd.f32 0.0, %v3697
        %3699 = vmatmul.f32.gmra.mxu0 %v3672
        %v3700 = vpop.f32.mrf.mxu0
        %v3701 = vadd.f32 0.0, %v3700
        %3702 = vmatmul.f32.gmra.mxu0 %v3675
        %v3703 = vpop.f32.mrf.mxu0
        %v3704 = vadd.f32 0.0, %v3703
        %3705 = vdwg.mxu0
        %v3707 = vsel %vm3500, %v3488, 0
        %v3710 = vsel %vm3500, %v3489, 0
        %v3713 = vsel %vm3500, %v3490, 0
        %v3716 = vsel %vm3500, %v3491, 0
        %3718 = vmatpush.msra.mxu0 0.0
        %3719 = vmatpush.msra.mxu0 0.0
        %3720 = vmatpush.msra.mxu0 0.0
        %3721 = vmatpush.msra.mxu0 0.0
        %3722 = vmatpush.msra.mxu0 %v1971
        %3723 = vmatpush.msra.mxu0 %v1963
        %3724 = vmatpush.msra.mxu0 %v1955
        %3725 = vmatpush.msra.mxu0 %v1947
        %3726 = vmatpush.msra.mxu0 %v1939
        %3727 = vmatpush.msra.mxu0 %v1932
        %3728 = vmatpush.msra.mxu0 %v1925
        %3729 = vmatpush.msra.mxu0 %v1918
        %3730 = vmatpush.msra.mxu0 %v1911
        %3731 = vmatpush.msra.mxu0 %v1903
        %3732 = vmatpush.msra.mxu0 %v1895
        %3733 = vmatpush.msra.mxu0 %v1887
        %3734 = vmatmul.f32.gmra.mxu0 %v3707
        %v3735 = vpop.f32.mrf.mxu0
        %v3736 = vadd.f32 0.0, %v3735
        %3737 = vmatmul.f32.gmra.mxu0 %v3710
        %v3738 = vpop.f32.mrf.mxu0
        %v3739 = vadd.f32 0.0, %v3738
        %3740 = vmatmul.f32.gmra.mxu0 %v3713
        %v3741 = vpop.f32.mrf.mxu0
        %v3742 = vadd.f32 0.0, %v3741
        %3743 = vmatmul.f32.gmra.mxu0 %v3716
        %v3744 = vpop.f32.mrf.mxu0
        %v3745 = vadd.f32 0.0, %v3744
        %3746 = vdwg.mxu0
        %v3748 = vsel %vm3500, %v3492, 0
        %v3751 = vsel %vm3500, %v3493, 0
        %v3754 = vsel %vm3500, %v3494, 0
        %v3757 = vsel %vm3500, %v3495, 0
        %3759 = vmatpush.msra.mxu0 0.0
        %3760 = vmatpush.msra.mxu0 0.0
        %3761 = vmatpush.msra.mxu0 0.0
        %3762 = vmatpush.msra.mxu0 0.0
        %3763 = vmatpush.msra.mxu0 %v2067
        %3764 = vmatpush.msra.mxu0 %v2059
        %3765 = vmatpush.msra.mxu0 %v2051
        %3766 = vmatpush.msra.mxu0 %v2043
        %3767 = vmatpush.msra.mxu0 %v2035
        %3768 = vmatpush.msra.mxu0 %v2027
        %3769 = vmatpush.msra.mxu0 %v2019
        %3770 = vmatpush.msra.mxu0 %v2011
        %3771 = vmatpush.msra.mxu0 %v2003
        %3772 = vmatpush.msra.mxu0 %v1995
        %3773 = vmatpush.msra.mxu0 %v1987
        %3774 = vmatpush.msra.mxu0 %v1979
        %3775 = vmatmul.f32.gmra.mxu0 %v3748
        %v3776 = vpop.f32.mrf.mxu0
        %v3777 = vadd.f32 0.0, %v3776
        %3778 = vmatmul.f32.gmra.mxu0 %v3751
        %v3779 = vpop.f32.mrf.mxu0
        %v3780 = vadd.f32 0.0, %v3779
        %3781 = vmatmul.f32.gmra.mxu0 %v3754
        %v3782 = vpop.f32.mrf.mxu0
        %v3783 = vadd.f32 0.0, %v3782
        %3784 = vmatmul.f32.gmra.mxu0 %v3757
        %v3785 = vpop.f32.mrf.mxu0
        %v3786 = vadd.f32 0.0, %v3785
        %3787 = vdwg.mxu0
        %v3789 = vsel %vm3500, %v3496, 0
        %v3792 = vsel %vm3500, %v3497, 0
        %v3795 = vsel %vm3500, %v3498, 0
        %v3798 = vsel %vm3500, %v3499, 0
        %3800 = vmatpush.msra.mxu0 0.0
        %3801 = vmatpush.msra.mxu0 0.0
        %3802 = vmatpush.msra.mxu0 0.0
        %3803 = vmatpush.msra.mxu0 0.0
        %3804 = vmatpush.msra.mxu0 %v2163
        %3805 = vmatpush.msra.mxu0 %v2155
        %3806 = vmatpush.msra.mxu0 %v2147
        %3807 = vmatpush.msra.mxu0 %v2139
        %3808 = vmatpush.msra.mxu0 %v2131
        %3809 = vmatpush.msra.mxu0 %v2123
        %3810 = vmatpush.msra.mxu0 %v2115
        %3811 = vmatpush.msra.mxu0 %v2107
        %3812 = vmatpush.msra.mxu0 %v2099
        %3813 = vmatpush.msra.mxu0 %v2091
        %3814 = vmatpush.msra.mxu0 %v2083
        %3815 = vmatpush.msra.mxu0 %v2075
        %3816 = vmatmul.f32.gmra.mxu0 %v3789
        %v3817 = vpop.f32.mrf.mxu0
        %v3818 = vadd.f32 0.0, %v3817
        %3819 = vmatmul.f32.gmra.mxu0 %v3792
        %v3820 = vpop.f32.mrf.mxu0
        %v3821 = vadd.f32 0.0, %v3820
        %3822 = vmatmul.f32.gmra.mxu0 %v3795
        %v3823 = vpop.f32.mrf.mxu0
        %v3824 = vadd.f32 0.0, %v3823
        %3825 = vmatmul.f32.gmra.mxu0 %v3798
        %v3826 = vpop.f32.mrf.mxu0
        %v3827 = vadd.f32 0.0, %v3826
        %3828 = vdwg.mxu0
        %v3829 = vadd.f32 %v3117, %v3531
        %v3830 = vadd.f32 %v3229, %v3534
        %v3831 = vadd.f32 %v3341, %v3537
        %v3832 = vadd.f32 %v3453, %v3540
        %v3833 = vadd.f32 %v3119, %v3572
        %v3834 = vadd.f32 %v3231, %v3575
        %v3835 = vadd.f32 %v3343, %v3578
        %v3836 = vadd.f32 %v3455, %v3581
        %v3837 = vadd.f32 %v3121, %v3613
        %v3838 = vadd.f32 %v3233, %v3616
        %v3839 = vadd.f32 %v3345, %v3619
        %v3840 = vadd.f32 %v3457, %v3622
        %v3841 = vadd.f32 %v3123, %v3654
        %v3842 = vadd.f32 %v3235, %v3657
        %v3843 = vadd.f32 %v3347, %v3660
        %v3844 = vadd.f32 %v3459, %v3663
        %v3845 = vadd.f32 %v3125, %v3695
        %v3846 = vadd.f32 %v3237, %v3698
        %v3847 = vadd.f32 %v3349, %v3701
        %v3848 = vadd.f32 %v3461, %v3704
        %v3849 = vadd.f32 %v3127, %v3736
        %v3850 = vadd.f32 %v3239, %v3739
        %v3851 = vadd.f32 %v3351, %v3742
        %v3852 = vadd.f32 %v3463, %v3745
        %v3853 = vadd.f32 %v3129, %v3777
        %v3854 = vadd.f32 %v3241, %v3780
        %v3855 = vadd.f32 %v3353, %v3783
        %v3856 = vadd.f32 %v3465, %v3786
        %v3857 = vadd.f32 %v3131, %v3818
        %v3858 = vadd.f32 %v3243, %v3821
        %v3859 = vadd.f32 %v3355, %v3824
        %v3860 = vadd.f32 %v3467, %v3827
        %v3861 = vld [vmem:[%s3] sm:$0xff]
        %v3862 = vld [vmem:[%s3 + $0x8] sm:$0xff]
        %v3863 = vld [vmem:[%s3 + $0x10] sm:$0xff]
        %v3864 = vld [vmem:[%s3 + $0x18] sm:$0xff]
        %v3865 = vld [vmem:[%s3 + $0x20] sm:$0xff]
        %v3866 = vld [vmem:[%s3 + $0x28] sm:$0xff]
        %v3867 = vld [vmem:[%s3 + $0x30] sm:$0xff]
        %v3868 = vld [vmem:[%s3 + $0x38] sm:$0xff]
        %v3869 = vld [vmem:[%s3 + $0x40] sm:$0xff]
        %v3870 = vld [vmem:[%s3 + $0x48] sm:$0xff]
        %v3871 = vld [vmem:[%s3 + $0x50] sm:$0xff]
        %v3872 = vld [vmem:[%s3 + $0x58] sm:$0xff]
        %v3873 = vld [vmem:[%s3 + $0x60] sm:$0xff]
        %v3874 = vld [vmem:[%s3 + $0x68] sm:$0xff]
        %v3875 = vld [vmem:[%s3 + $0x70] sm:$0xff]
        %v3876 = vld [vmem:[%s3 + $0x78] sm:$0xff]
        %v3877 = vld [vmem:[%s3 + $0x80] sm:$0xff]
        %v3878 = vld [vmem:[%s3 + $0x88] sm:$0xff]
        %v3879 = vld [vmem:[%s3 + $0x90] sm:$0xff]
        %v3880 = vld [vmem:[%s3 + $0x98] sm:$0xff]
        %v3881 = vld [vmem:[%s3 + $0xa0] sm:$0xff]
        %v3882 = vld [vmem:[%s3 + $0xa8] sm:$0xff]
        %v3883 = vld [vmem:[%s3 + $0xb0] sm:$0xff]
        %v3884 = vld [vmem:[%s3 + $0xb8] sm:$0xff]
        %v3885 = vld [vmem:[%s3 + $0xc0] sm:$0xff]
        %v3886 = vld [vmem:[%s3 + $0xc8] sm:$0xff]
        %v3887 = vld [vmem:[%s3 + $0xd0] sm:$0xff]
        %v3888 = vld [vmem:[%s3 + $0xd8] sm:$0xff]
        %v3889 = vld [vmem:[%s3 + $0xe0] sm:$0xff]
        %v3890 = vld [vmem:[%s3 + $0xe8] sm:$0xff]
        %v3891 = vld [vmem:[%s3 + $0xf0] sm:$0xff]
        %v3892 = vld [vmem:[%s3 + $0xf8] sm:$0xff]
        %3894 = vset.pattern.permute.xlu0 0
        %3895 = vperm.xlu0 %3894, %v3861
        %v3896 = vpop.permute.xlu0 %3895
        %3899 = vset.pattern.permute.xlu0 0
        %3900 = vperm.xlu0 %3899, %v3862
        %v3901 = vpop.permute.xlu0 %3900
        %3904 = vset.pattern.permute.xlu0 0
        %3905 = vperm.xlu0 %3904, %v3863
        %v3906 = vpop.permute.xlu0 %3905
        %3909 = vset.pattern.permute.xlu0 0
        %3910 = vperm.xlu0 %3909, %v3864
        %v3911 = vpop.permute.xlu0 %3910
        %3914 = vset.pattern.permute.xlu0 0
        %3915 = vperm.xlu0 %3914, %v3865
        %v3916 = vpop.permute.xlu0 %3915
        %3919 = vset.pattern.permute.xlu0 0
        %3920 = vperm.xlu0 %3919, %v3866
        %v3921 = vpop.permute.xlu0 %3920
        %3924 = vset.pattern.permute.xlu0 0
        %3925 = vperm.xlu0 %3924, %v3867
        %v3926 = vpop.permute.xlu0 %3925
        %3929 = vset.pattern.permute.xlu0 0
        %3930 = vperm.xlu0 %3929, %v3868
        %v3931 = vpop.permute.xlu0 %3930
        %3934 = vset.pattern.permute.xlu0 0
        %3935 = vperm.xlu0 %3934, %v3869
        %v3936 = vpop.permute.xlu0 %3935
        %3939 = vset.pattern.permute.xlu0 0
        %3940 = vperm.xlu0 %3939, %v3870
        %v3941 = vpop.permute.xlu0 %3940
        %3944 = vset.pattern.permute.xlu0 0
        %3945 = vperm.xlu0 %3944, %v3871
        %v3946 = vpop.permute.xlu0 %3945
        %3949 = vset.pattern.permute.xlu0 0
        %3950 = vperm.xlu0 %3949, %v3872
        %v3951 = vpop.permute.xlu0 %3950
        %3954 = vset.pattern.permute.xlu0 0
        %3955 = vperm.xlu0 %3954, %v3873
        %v3956 = vpop.permute.xlu0 %3955
        %3959 = vset.pattern.permute.xlu0 0
        %3960 = vperm.xlu0 %3959, %v3874
        %v3961 = vpop.permute.xlu0 %3960
        %3964 = vset.pattern.permute.xlu0 0
        %3965 = vperm.xlu0 %3964, %v3875
        %v3966 = vpop.permute.xlu0 %3965
        %3969 = vset.pattern.permute.xlu0 0
        %3970 = vperm.xlu0 %3969, %v3876
        %v3971 = vpop.permute.xlu0 %3970
        %3974 = vset.pattern.permute.xlu0 0
        %3975 = vperm.xlu0 %3974, %v3877
        %v3976 = vpop.permute.xlu0 %3975
        %3979 = vset.pattern.permute.xlu0 0
        %3980 = vperm.xlu0 %3979, %v3878
        %v3981 = vpop.permute.xlu0 %3980
        %3984 = vset.pattern.permute.xlu0 0
        %3985 = vperm.xlu0 %3984, %v3879
        %v3986 = vpop.permute.xlu0 %3985
        %3989 = vset.pattern.permute.xlu0 0
        %3990 = vperm.xlu0 %3989, %v3880
        %v3991 = vpop.permute.xlu0 %3990
        %3994 = vset.pattern.permute.xlu0 0
        %3995 = vperm.xlu0 %3994, %v3881
        %v3996 = vpop.permute.xlu0 %3995
        %3999 = vset.pattern.permute.xlu0 0
        %4000 = vperm.xlu0 %3999, %v3882
        %v4001 = vpop.permute.xlu0 %4000
        %4004 = vset.pattern.permute.xlu0 0
        %4005 = vperm.xlu0 %4004, %v3883
        %v4006 = vpop.permute.xlu0 %4005
        %4009 = vset.pattern.permute.xlu0 0
        %4010 = vperm.xlu0 %4009, %v3884
        %v4011 = vpop.permute.xlu0 %4010
        %4014 = vset.pattern.permute.xlu0 0
        %4015 = vperm.xlu0 %4014, %v3885
        %v4016 = vpop.permute.xlu0 %4015
        %4019 = vset.pattern.permute.xlu0 0
        %4020 = vperm.xlu0 %4019, %v3886
        %v4021 = vpop.permute.xlu0 %4020
        %4024 = vset.pattern.permute.xlu0 0
        %4025 = vperm.xlu0 %4024, %v3887
        %v4026 = vpop.permute.xlu0 %4025
        %4029 = vset.pattern.permute.xlu0 0
        %4030 = vperm.xlu0 %4029, %v3888
        %v4031 = vpop.permute.xlu0 %4030
        %4034 = vset.pattern.permute.xlu0 0
        %4035 = vperm.xlu0 %4034, %v3889
        %v4036 = vpop.permute.xlu0 %4035
        %4039 = vset.pattern.permute.xlu0 0
        %4040 = vperm.xlu0 %4039, %v3890
        %v4041 = vpop.permute.xlu0 %4040
        %4044 = vset.pattern.permute.xlu0 0
        %4045 = vperm.xlu0 %4044, %v3891
        %v4046 = vpop.permute.xlu0 %4045
        %4049 = vset.pattern.permute.xlu0 0
        %4050 = vperm.xlu0 %4049, %v3892
        %v4051 = vpop.permute.xlu0 %4050
        %v4053 = vadd.f32 %v3829, %v3896
        %v4054 = vadd.f32 %v3830, %v3901
        %v4055 = vadd.f32 %v3831, %v3906
        %v4056 = vadd.f32 %v3832, %v3911
        %v4057 = vadd.f32 %v3833, %v3916
        %v4058 = vadd.f32 %v3834, %v3921
        %v4059 = vadd.f32 %v3835, %v3926
        %v4060 = vadd.f32 %v3836, %v3931
        %v4061 = vadd.f32 %v3837, %v3936
        %v4062 = vadd.f32 %v3838, %v3941
        %v4063 = vadd.f32 %v3839, %v3946
        %v4064 = vadd.f32 %v3840, %v3951
        %v4065 = vadd.f32 %v3841, %v3956
        %v4066 = vadd.f32 %v3842, %v3961
        %v4067 = vadd.f32 %v3843, %v3966
        %v4068 = vadd.f32 %v3844, %v3971
        %v4069 = vadd.f32 %v3845, %v3976
        %v4070 = vadd.f32 %v3846, %v3981
        %v4071 = vadd.f32 %v3847, %v3986
        %v4072 = vadd.f32 %v3848, %v3991
        %v4073 = vadd.f32 %v3849, %v3996
        %v4074 = vadd.f32 %v3850, %v4001
        %v4075 = vadd.f32 %v3851, %v4006
        %v4076 = vadd.f32 %v3852, %v4011
        %v4077 = vadd.f32 %v3853, %v4016
        %v4078 = vadd.f32 %v3854, %v4021
        %v4079 = vadd.f32 %v3855, %v4026
        %v4080 = vadd.f32 %v3856, %v4031
        %v4081 = vadd.f32 %v3857, %v4036
        %v4082 = vadd.f32 %v3858, %v4041
        %v4083 = vadd.f32 %v3859, %v4046
        %v4084 = vadd.f32 %v3860, %v4051
        %v4085 = vmax.f32 %v4053, 0.0
        %v4086 = vmax.f32 %v4054, 0.0
        %v4087 = vmax.f32 %v4055, 0.0
        %v4088 = vmax.f32 %v4056, 0.0
        %v4089 = vmax.f32 %v4057, 0.0
        %v4090 = vmax.f32 %v4058, 0.0
        %v4091 = vmax.f32 %v4059, 0.0
        %v4092 = vmax.f32 %v4060, 0.0
        %v4093 = vmax.f32 %v4061, 0.0
        %v4094 = vmax.f32 %v4062, 0.0
        %v4095 = vmax.f32 %v4063, 0.0
        %v4096 = vmax.f32 %v4064, 0.0
        %v4097 = vmax.f32 %v4065, 0.0
        %v4098 = vmax.f32 %v4066, 0.0
        %v4099 = vmax.f32 %v4067, 0.0
        %v4100 = vmax.f32 %v4068, 0.0
        %v4101 = vmax.f32 %v4069, 0.0
        %v4102 = vmax.f32 %v4070, 0.0
        %v4103 = vmax.f32 %v4071, 0.0
        %v4104 = vmax.f32 %v4072, 0.0
        %v4105 = vmax.f32 %v4073, 0.0
        %v4106 = vmax.f32 %v4074, 0.0
        %v4107 = vmax.f32 %v4075, 0.0
        %v4108 = vmax.f32 %v4076, 0.0
        %v4109 = vmax.f32 %v4077, 0.0
        %v4110 = vmax.f32 %v4078, 0.0
        %v4111 = vmax.f32 %v4079, 0.0
        %v4112 = vmax.f32 %v4080, 0.0
        %v4113 = vmax.f32 %v4081, 0.0
        %v4114 = vmax.f32 %v4082, 0.0
        %v4115 = vmax.f32 %v4083, 0.0
        %v4116 = vmax.f32 %v4084, 0.0
        %4117 = vst [vmem:[%s215] sm:$0xff] %v4085
        %4118 = vst [vmem:[%s215 + $0x8] sm:$0xff] %v4086
        %4119 = vst [vmem:[%s215 + $0x10] sm:$0xff] %v4087
        %4120 = vst [vmem:[%s215 + $0x18] sm:$0xff] %v4088
        %4121 = vst [vmem:[%s215 + $0x20] sm:$0xff] %v4089
        %4122 = vst [vmem:[%s215 + $0x28] sm:$0xff] %v4090
        %4123 = vst [vmem:[%s215 + $0x30] sm:$0xff] %v4091
        %4124 = vst [vmem:[%s215 + $0x38] sm:$0xff] %v4092
        %4125 = vst [vmem:[%s215 + $0x40] sm:$0xff] %v4093
        %4126 = vst [vmem:[%s215 + $0x48] sm:$0xff] %v4094
        %4127 = vst [vmem:[%s215 + $0x50] sm:$0xff] %v4095
        %4128 = vst [vmem:[%s215 + $0x58] sm:$0xff] %v4096
        %4129 = vst [vmem:[%s215 + $0x60] sm:$0xff] %v4097
        %4130 = vst [vmem:[%s215 + $0x68] sm:$0xff] %v4098
        %4131 = vst [vmem:[%s215 + $0x70] sm:$0xff] %v4099
        %4132 = vst [vmem:[%s215 + $0x78] sm:$0xff] %v4100
        %4133 = vst [vmem:[%s215 + $0x80] sm:$0xff] %v4101
        %4134 = vst [vmem:[%s215 + $0x88] sm:$0xff] %v4102
        %4135 = vst [vmem:[%s215 + $0x90] sm:$0xff] %v4103
        %4136 = vst [vmem:[%s215 + $0x98] sm:$0xff] %v4104
        %4137 = vst [vmem:[%s215 + $0xa0] sm:$0xff] %v4105
        %4138 = vst [vmem:[%s215 + $0xa8] sm:$0xff] %v4106
        %4139 = vst [vmem:[%s215 + $0xb0] sm:$0xff] %v4107
        %4140 = vst [vmem:[%s215 + $0xb8] sm:$0xff] %v4108
        %4141 = vst [vmem:[%s215 + $0xc0] sm:$0xff] %v4109
        %4142 = vst [vmem:[%s215 + $0xc8] sm:$0xff] %v4110
        %4143 = vst [vmem:[%s215 + $0xd0] sm:$0xff] %v4111
        %4144 = vst [vmem:[%s215 + $0xd8] sm:$0xff] %v4112
        %4145 = vst [vmem:[%s215 + $0xe0] sm:$0xff] %v4113
        %4146 = vst [vmem:[%s215 + $0xe8] sm:$0xff] %v4114
        %4147 = vst [vmem:[%s215 + $0xf0] sm:$0xff] %v4115
        %4148 = vst [vmem:[%s215 + $0xf8] sm:$0xff] %v4116
        %s4149 = sand.u32 %s118, 1
        %s4150 = scalar_lea.sflag [#allocation4], %s4149
        %s4151 = sand.u32 %s118, 1
        %s4152 = smul.addr %s4151, 256
        %s4153 = scalar_lea.vmem [#allocation5], %s4152
        // Predicated region
        $region41: #{tpu_custom_call.1} parent=35 // pred_check
          %p4154 = pneg %p128
        $region42: #{tpu_custom_call.1} parent=35 // pred_check_branch
          %4156 = sbr.rel (%p4154) target = $region44
        $region43: #{tpu_custom_call.1} parent=35 // pred_region
          %4158 = vsyncadd %s4150, 0
          %s4159 = smul.addr %s21, 32
          %s4160 = smul.addr %s4159, 8
          %s4161 = scalar_lea.hbm %s4, %s4160
          %s4162 = sshll.u32 %s4153, 4
          %s4163 = int_to_ptr.vmem [resolvable:$true] %s4162
          %s4164 = sshll.u32 %s4161, 4
          %s4165 = int_to_ptr.hbm [resolvable:$true] %s4164
          %4170 = dma.vmem_to_hbm [thread:$0]  %s4163, 4096, %s4165, %s4150, 128, 128, 8
        $region44: #{tpu_custom_call.1} parent=35 // pred_fallthru
          _
      $region36: #{tpu_custom_call.1} parent=5 // pred_fallthru
        _
      %p4171 = scmp.le.s32.totalorder 2, %s16
      // Predicated region
      $region45: #{tpu_custom_call.1} parent=5 // pred_check
        %p4172 = pneg %p4171
      $region46: #{tpu_custom_call.1} parent=5 // pred_check_branch
        %4174 = sbr.rel (%p4172) target = $region48
      $region47: #{tpu_custom_call.1} parent=5 // pred_region
        %s4175 = ssub.s32 %s16, 2
        // Predicated region
        $region49: #{tpu_custom_call.1} parent=47 // pred_check
          %p4176 = pneg %p134
        $region50: #{tpu_custom_call.1} parent=47 // pred_check_branch
          %4178 = sbr.rel (%p4176) target = $region52
        $region51: #{tpu_custom_call.1} parent=47 // pred_region
          %s4179 = sand.u32 %s119, 1
          %s4180 = scalar_lea.sflag [#allocation4], %s4179
          %s4181 = sand.u32 %s119, 1
          %s4182 = smul.addr %s4181, 256
          %s4183 = scalar_lea.vmem [#allocation5], %s4182
          %4185 = dma.done %s4180, 4096
        $region52: #{tpu_custom_call.1} parent=47 // pred_fallthru
          _
      $region48: #{tpu_custom_call.1} parent=5 // pred_fallthru
        _
    $region6: #{tpu_custom_call.1} parent=1 // loop_footer
      %s20 = sadd.s32 1, %s16
    $region7: #{tpu_custom_call.1} parent=1 // loop_footer_branch
      %15 = sbr.rel target = $region3
    $region8: #{tpu_custom_call.1} parent=1 // loop_exit
      _
    %4186 = vsyncpa [#allocation3], 1
    %s4187 = scalar_lea.sflag [#allocation3], 1
    %4188 = vsyncpa %s4187, 1
    %4189 = vsyncpa [#allocation4], 1
    %s4190 = scalar_lea.sflag [#allocation4], 1
    %4191 = vsyncpa %s4190, 1

</llo_original>
